<compile_context>
chip_gen: v5e
topology: v5e:2x2
jax: 0.10.0
libtpu: 0.0.40
codegen_flags: <defaults>
</compile_context>

<pallas_src>
import functools

import jax
import jax.numpy as jnp
import numpy as np
from jax.experimental import pallas as pl
from jax.experimental.pallas import tpu as pltpu


def _round_up(v, m):
    return ((v + m - 1) // m) * m


def _tpu_config():
    """Best-effort (physical VMEM bytes, TensorCores per chip)."""
    vmem_bytes = 128 << 20
    cores = 1
    try:
        info = pltpu.get_tpu_info()
    except Exception:  # trace-time query unavailable -> conservative defaults
        return vmem_bytes, cores
    for name in ("vmem_capacity_bytes", "vmem_bytes", "vmem_size_bytes"):
        v = getattr(info, name, None)
        if v:
            vmem_bytes = int(v)
            break
    for name in ("num_cores", "tensorcores_per_chip", "cores_per_chip",
                 "num_tensorcores"):
        c = getattr(info, name, None)
        if c:
            cores = int(c)
            break
    return vmem_bytes, cores


def _sine_kernel(x_ref, wt_ref, b_ref, o_ref, *, matmul_dtype):
    # x_ref : (tm, K)   input-row tile in its stored dtype (cast in VMEM below)
    # wt_ref: (K, tn)   omega-scaled, pre-transposed weight tile (matmul dtype)
    # b_ref : (1, tn)   omega-scaled bias (f32)
    # o_ref : (tm, tn)  output tile
    x = x_ref[...]
    if x.dtype != matmul_dtype:
        x = x.astype(matmul_dtype)                   # cast in VMEM, not in HBM
    acc = jnp.dot(x, wt_ref[...], preferred_element_type=jnp.float32)
    acc = acc + b_ref[...]                           # f32 bias add (row broadcast)
    o_ref[...] = jnp.sin(acc).astype(o_ref.dtype)    # f32 sin, cast on store


def sine_layer(x, weight_t, bias, omega_0=30.0, *, tm=1024, tn=None,
               matmul_dtype=None, out_dtype=None, vmem_limit_bytes=None):
    """SIREN sine-layer forward: sin(omega_0 * (x @ weight_t + bias)).

    x:        (..., in_features)
    weight_t: (in_features, out_features)  -- weight stored pre-transposed
    bias:     (out_features,) or None
    omega_0:  scalar, or None if omega is already folded into weight_t / bias
    """
    orig_shape = x.shape
    K = orig_shape[-1]
    x2 = x.reshape(-1, K)
    M = x2.shape[0]
    N = weight_t.shape[1]
    assert weight_t.shape[0] == K, "weight_t must be (in_features, out_features)"

    matmul_dtype = jnp.dtype(matmul_dtype) if matmul_dtype is not None else jnp.dtype(x.dtype)
    out_dtype = jnp.dtype(out_dtype) if out_dtype is not None else jnp.dtype(x.dtype)

    # Fold omega_0 / cast the (tiny) weight & bias in the wrapper; x stays put.
    w = weight_t
    b = bias if bias is not None else jnp.zeros((N,), jnp.float32)
    if omega_0 is not None:
        w = w.astype(jnp.float32) * jnp.float32(omega_0)
        b = b.astype(jnp.float32) * jnp.float32(omega_0)
    if w.dtype != matmul_dtype:
        w = w.astype(matmul_dtype)
    b = b.astype(jnp.float32).reshape(1, N)

    x_isz = jnp.dtype(x.dtype).itemsize
    mm_isz = matmul_dtype.itemsize
    o_isz = out_dtype.itemsize

    vmem_phys, cores = _tpu_config()
    budget_cap = (vmem_phys * 3) // 4        # ~48 MiB on v7x, ~96 MiB on v5e/v6e
    fit_budget = budget_cap - (8 << 20)      # headroom for Mosaic internal scratch

    # ---- out_features tiling (prefer full-N resident weight) ------------------
    if tn is None or int(tn) >= N:
        tn_eff = N
        if tn is None and 2 * K * N * mm_isz > budget_cap // 3:
            tn_eff = 512                     # very wide layer: tile out_features
    else:
        tn_eff = max(256, (int(tn) // 256) * 256)   # MXU width / lane-dense stores
    tn_eff = min(tn_eff, N)
    n_tiles = pl.cdiv(N, tn_eff)

    # ---- row tiling ------------------------------------------------------------
    def footprint(tm_e):
        bytes_ = 2 * tm_e * K * x_isz                          # double-buffered x
        if jnp.dtype(x.dtype) != matmul_dtype:
            bytes_ += tm_e * K * mm_isz                        # in-kernel cast copy
        bytes_ += 2 * (K * tn_eff * mm_isz + _round_up(tn_eff, 128) * 4)  # W + bias
        bytes_ += 2 * tm_e * tn_eff * o_isz                    # double-buffered out
        bytes_ += 3 * tm_e * tn_eff * 4                        # f32 acc + sin temps
        return bytes_

    tm_c = max(8, _round_up(min(int(tm), M), 8))
    if cores > 1 and M >= 8 * 4 * cores:
        # give each TensorCore >= 4 row tiles so its pipeline can double-buffer
        tm_c = min(tm_c, max(8, _round_up(pl.cdiv(M, 4 * cores), 8)))
    while tm_c > 8 and footprint(tm_c) > fit_budget:
        tm_c = max(8, _round_up(tm_c // 2, 8))
    tm_eff = M if tm_c >= M else tm_c          # full-dim blocks are always legal
    m_tiles = pl.cdiv(M, tm_eff)

    vmem_est = footprint(_round_up(tm_eff, 8))
    if vmem_limit_bytes is None:
        vmem_limit_bytes = int(min(max(vmem_est * 5 // 4 + (8 << 20), 32 << 20),
                                   budget_cap))

    cost = pl.CostEstimate(
        flops=2 * M * N * K,
        transcendentals=M * N,
        bytes_accessed=M * K * x_isz + K * N * mm_isz + N * 4 + M * N * o_isz,
    )

    kernel = functools.partial(_sine_kernel, matmul_dtype=matmul_dtype)
    out2 = pl.pallas_call(
        kernel,
        out_shape=jax.ShapeDtypeStruct((M, N), out_dtype),
        grid_spec=pltpu.PrefetchScalarGridSpec(
            num_scalar_prefetch=0,
            grid=(m_tiles, n_tiles),
            in_specs=[
                pl.BlockSpec((tm_eff, K), lambda i, j: (i, 0)),    # x row tile
                pl.BlockSpec((K, tn_eff), lambda i, j: (0, j)),    # weight tile
                pl.BlockSpec((1, tn_eff), lambda i, j: (0, j)),    # bias tile
            ],
            out_specs=pl.BlockSpec((tm_eff, tn_eff), lambda i, j: (i, j)),
        ),
        compiler_params=pltpu.CompilerParams(
            # M axis parallel (megacore shards rows); N axis arbitrary so the
            # two v7x cores never duplicate the dominant x HBM traffic.
            dimension_semantics=("parallel", "arbitrary"),
            vmem_limit_bytes=int(vmem_limit_bytes),
        ),
        cost_estimate=cost,
    )(x2, w, b)

    return out2.reshape(orig_shape[:-1] + (N,))


def init_sine_layer_params(key, in_features, out_features, is_first=False,
                           omega_0=30.0, fold_omega=True, param_dtype=jnp.float32):
    """SIREN init matching SineLayer.init_weights; weight returned pre-transposed
    as (in_features, out_features).  With fold_omega=True the returned params
    already include the omega_0 factor (then call sine_layer with omega_0=None)."""
    kw, kb = jax.random.split(key)
    if is_first:
        bound_w = 1.0 / in_features
    else:
        bound_w = float(np.sqrt(6.0 / in_features) / omega_0)
    weight_t = jax.random.uniform(kw, (in_features, out_features), jnp.float32,
                                  minval=-bound_w, maxval=bound_w)
    # nn.Linear default bias init (not overridden by init_weights)
    bound_b = 1.0 / float(np.sqrt(in_features))
    bias = jax.random.uniform(kb, (out_features,), jnp.float32,
                              minval=-bound_b, maxval=bound_b)
    if fold_omega:
        weight_t = weight_t * omega_0
        bias = bias * omega_0
    return weight_t.astype(param_dtype), bias.astype(param_dtype)


if __name__ == "__main__":
    key = jax.random.PRNGKey(0)
    k_x1, k_p1, k_x2, k_p2 = jax.random.split(key, 4)
    omega_0 = 30.0

    # --- test 1: f32 end-to-end (dtype-preserving default), is_first layer,
    #             omega folded into params at init, partial row count (M=200).
    M1, K1, N1 = 200, 128, 128
    x1 = jax.random.uniform(k_x1, (M1, K1), jnp.float32, minval=-1.0, maxval=1.0)
    w1, b1 = init_sine_layer_params(k_p1, K1, N1, is_first=True, omega_0=omega_0,
                                    fold_omega=True)
    y1 = jax.block_until_ready(sine_layer(x1, w1, b1, omega_0=None))
    ref1 = jnp.sin(x1 @ w1 + b1)
    np.testing.assert_allclose(np.asarray(y1), np.asarray(ref1), atol=1e-4, rtol=1e-4)

    # --- test 2: 3-D input, bf16 MXU operands (x cast inside the kernel, not in
    #             the wrapper), bf16 output, out_features tiled (tn=256, N=512).
    B2, S2, K2, N2 = 2, 64, 128, 512
    x2 = jax.random.uniform(k_x2, (B2, S2, K2), jnp.float32, minval=-1.0, maxval=1.0)
    w2, b2 = init_sine_layer_params(k_p2, K2, N2, is_first=False, omega_0=omega_0,
                                    fold_omega=True)
    y2 = jax.block_until_ready(
        sine_layer(x2, w2, b2, omega_0=None, tn=256,
                   matmul_dtype=jnp.bfloat16, out_dtype=jnp.bfloat16))
    # reference with identically bf16-quantized matmul operands and bf16 store
    xq = x2.reshape(-1, K2).astype(jnp.bfloat16).astype(jnp.float32)
    wq = w2.astype(jnp.bfloat16).astype(jnp.float32)
    ref2 = jnp.sin(jnp.dot(xq, wq, precision=jax.lax.Precision.HIGHEST) + b2)
    ref2 = ref2.astype(jnp.bfloat16).reshape(B2, S2, N2)
    np.testing.assert_allclose(np.asarray(y2, dtype=np.float32),
                               np.asarray(ref2, dtype=np.float32),
                               atol=8e-3, rtol=0)

    print("KERNEL_OK")
</pallas_src>

<mosaic_0001>
module attributes {stable_mosaic.version = 11 : i64} {
  func.func @_sine_kernel(%arg0: i32, %arg1: i32, %arg2: memref<200x128xf32, #tpu.memory_space<vmem>>, %arg3: memref<128x128xf32, #tpu.memory_space<vmem>>, %arg4: memref<1x128xf32, #tpu.memory_space<vmem>>, %arg5: memref<200x128xf32, #tpu.memory_space<vmem>>) attributes {dimension_semantics = [#tpu.dimension_semantics<parallel>, #tpu.dimension_semantics<arbitrary>], iteration_bounds = array<i64: 1, 1>, scalar_prefetch = 0 : i64, scratch_operands = 0 : i64, tpu.core_type = #tpu.core_type<tc>, window_params = [{transform_indices = @transform_0, window_bounds = array<i64: 200, 128>}, {transform_indices = @transform_1, window_bounds = array<i64: 128, 128>}, {transform_indices = @transform_2, window_bounds = array<i64: 1, 128>}, {transform_indices = @transform_3, window_bounds = array<i64: 200, 128>}]} {
    %c0 = arith.constant 0 : index
    %c0_0 = arith.constant 0 : index
    %0 = vector.load %arg2[%c0, %c0_0] : memref<200x128xf32, #tpu.memory_space<vmem>>, vector<200x128xf32>
    %c0_1 = arith.constant 0 : index
    %c0_2 = arith.constant 0 : index
    %1 = vector.load %arg3[%c0_1, %c0_2] : memref<128x128xf32, #tpu.memory_space<vmem>>, vector<128x128xf32>
    %cst = arith.constant dense<0.000000e+00> : vector<200x128xf32>
    %2 = tpu.matmul %0, %1, %cst {dimension_numbers = #tpu.dot_dimension_numbers<[1], [0], [0], [1], [0, 0, 1, 1], [], []>} : vector<200x128xf32>, vector<128x128xf32>, vector<200x128xf32> -> vector<200x128xf32>
    %c0_3 = arith.constant 0 : index
    %c0_4 = arith.constant 0 : index
    %3 = vector.load %arg4[%c0_3, %c0_4] : memref<1x128xf32, #tpu.memory_space<vmem>>, vector<1x128xf32>
    %4 = vector.broadcast %3 : vector<1x128xf32> to vector<200x128xf32>
    %5 = arith.addf %2, %4 : vector<200x128xf32>
    %6 = math.sin %5 : vector<200x128xf32>
    %c0_5 = arith.constant 0 : index
    %c0_6 = arith.constant 0 : index
    %7 = vector.load %arg5[%c0_5, %c0_6] : memref<200x128xf32, #tpu.memory_space<vmem>>, vector<200x128xf32>
    tpu.vector_store %arg5[%c0_5, %c0_6], %6 {strides = array<i32>} : memref<200x128xf32, #tpu.memory_space<vmem>>, vector<200x128xf32>,
    return
  }
  func.func @transform_0(%arg0: i32, %arg1: i32) -> (i32, i32) {
    %c0_i32 = arith.constant 0 : i32
    %c0_i32_0 = arith.constant 0 : i32
    return %arg0, %c0_i32 : i32, i32
  }
  func.func @transform_1(%arg0: i32, %arg1: i32) -> (i32, i32) {
    %c0_i32 = arith.constant 0 : i32
    %c0_i32_0 = arith.constant 0 : i32
    return %c0_i32, %arg1 : i32, i32
  }
  func.func @transform_2(%arg0: i32, %arg1: i32) -> (i32, i32) {
    %c0_i32 = arith.constant 0 : i32
    %c0_i32_0 = arith.constant 0 : i32
    return %c0_i32, %arg1 : i32, i32
  }
  func.func @transform_3(%arg0: i32, %arg1: i32) -> (i32, i32) {
    %c0_i32 = arith.constant 0 : i32
    return %arg0, %arg1 : i32, i32
  }
}

</mosaic_0001>

<llo_original>
// kernel: tpu_custom_call.1
$region0: #{tpu_custom_call.1}
  #allocation0 [shape = 'u32[]', space=smem, size = 0x4, offset = 0x4, fixed_abs, tag = 'smem constant byte address 0x4 - core index']
  #allocation1 [shape = 'u32[72,128]{1,0:T(1,128)}', space=vmem, size = 0x9000, scoped, tag = 'internal scratch']
  %s0 = inlined_call_operand.hbm [shape: f32[200,128], index: 0, kind: input, shape index: {}]
  %s1 = inlined_call_operand.hbm [shape: f32[128,128], index: 1, kind: input, shape index: {}]
  %s2 = inlined_call_operand.vmem [shape: f32[1,128], index: 2, kind: input, shape index: {}]
  %s3 = inlined_call_operand.hbm [shape: f32[200,128], index: 3, kind: output, shape index: {}]
  %s4 = sld [smem:[#allocation0]]
  $region30: #{tpu_custom_call.1} parent=0
    _
  %s6 = ssub.s32 1, %s4
  %s7 = scalar_select 0, %s6, %s4
  $region1: #{tpu_custom_call.1} parent=0
    #allocation2 [shape = 'u8[102400]{0}', space=vmem, size = 0x19000, scoped, tag = 'input window, operand 0, single buffered']
    #allocation3 [shape = 's32[1]{0}', space=sflag, size = 0x4, scoped, tag = 'scoped memory for tpu_custom_call.1']
    #allocation4 [shape = 's32[1]{0}', space=sflag, size = 0x4, scoped, tag = 'scoped memory for tpu_custom_call.1']
    #allocation5 [shape = 'u8[65536]{0}', space=vmem, size = 0x10000, scoped, tag = 'input window, operand 1, single buffered']
    #allocation6 [shape = 's32[1]{0}', space=sflag, size = 0x4, scoped, tag = 'scoped memory for tpu_custom_call.1']
    #allocation7 [shape = 'u8[102400]{0}', space=vmem, size = 0x19000, scoped, tag = 'output window, operand 0, single buffered']
    %8 = vsyncpa [#allocation3], 0
    %9 = vsyncpa [#allocation6], 0
    %10 = vsyncpa [#allocation4], 0
    // Predicated region
    $region2: #{tpu_custom_call.1} parent=1 // pred_check
      _
    $region3: #{tpu_custom_call.1} parent=1 // pred_check_branch
      %12 = sbr.rel (0) target = $region5
    $region4: #{tpu_custom_call.1} parent=1 // pred_region
      %14 = vsyncadd [#allocation3], 0
      %s15 = sshll.u32 %s0, 4
      %s16 = int_to_ptr.hbm [resolvable:$true] %s15
      %s17 = sshll.u32 [#allocation2], 4
      %s18 = int_to_ptr.vmem [resolvable:$true] %s17
      %23 = dma.hbm_to_vmem [thread:$0]  %s16, 3200, %s18, [#allocation3], 128, 128, 8
    $region5: #{tpu_custom_call.1} parent=1 // pred_fallthru
      _
    // Predicated region
    $region6: #{tpu_custom_call.1} parent=1 // pred_check
      _
    $region7: #{tpu_custom_call.1} parent=1 // pred_check_branch
      %25 = sbr.rel (0) target = $region9
    $region8: #{tpu_custom_call.1} parent=1 // pred_region
      %27 = vsyncadd [#allocation6], 0
      %s28 = sshll.u32 %s1, 4
      %s29 = int_to_ptr.hbm [resolvable:$true] %s28
      %s30 = sshll.u32 [#allocation5], 4
      %s31 = int_to_ptr.vmem [resolvable:$true] %s30
      %36 = dma.hbm_to_vmem [thread:$0]  %s29, 2048, %s31, [#allocation6], 128, 128, 8
    $region9: #{tpu_custom_call.1} parent=1 // pred_fallthru
      _
    // Predicated region
    $region10: #{tpu_custom_call.1} parent=1 // pred_check
      _
    $region11: #{tpu_custom_call.1} parent=1 // pred_check_branch
      %38 = sbr.rel (0) target = $region13
    $region12: #{tpu_custom_call.1} parent=1 // pred_region
      _
    $region13: #{tpu_custom_call.1} parent=1 // pred_fallthru
      _
    // Predicated region
    $region14: #{tpu_custom_call.1} parent=1 // pred_check
      _
    $region15: #{tpu_custom_call.1} parent=1 // pred_check_branch
      %40 = sbr.rel (0) target = $region17
    $region16: #{tpu_custom_call.1} parent=1 // pred_region
      %42 = dma.done [#allocation3], 3200
    $region17: #{tpu_custom_call.1} parent=1 // pred_fallthru
      _
    // Predicated region
    $region18: #{tpu_custom_call.1} parent=1 // pred_check
      _
    $region19: #{tpu_custom_call.1} parent=1 // pred_check_branch
      %44 = sbr.rel (0) target = $region21
    $region20: #{tpu_custom_call.1} parent=1 // pred_region
      %46 = dma.done [#allocation6], 2048
    $region21: #{tpu_custom_call.1} parent=1 // pred_fallthru
      _
    %v47 = vld [vmem:[#allocation2] sm:$0xff]
    %v48 = vld [vmem:[#allocation2 + $0x8] sm:$0xff]
    %v49 = vld [vmem:[#allocation2 + $0x10] sm:$0xff]
    %v50 = vld [vmem:[#allocation2 + $0x18] sm:$0xff]
    %v51 = vld [vmem:[#allocation2 + $0x20] sm:$0xff]
    %v52 = vld [vmem:[#allocation2 + $0x28] sm:$0xff]
    %v53 = vld [vmem:[#allocation2 + $0x30] sm:$0xff]
    %v54 = vld [vmem:[#allocation2 + $0x38] sm:$0xff]
    %v55 = vld [vmem:[#allocation2 + $0x40] sm:$0xff]
    %v56 = vld [vmem:[#allocation2 + $0x48] sm:$0xff]
    %v57 = vld [vmem:[#allocation2 + $0x50] sm:$0xff]
    %v58 = vld [vmem:[#allocation2 + $0x58] sm:$0xff]
    %v59 = vld [vmem:[#allocation2 + $0x60] sm:$0xff]
    %v60 = vld [vmem:[#allocation2 + $0x68] sm:$0xff]
    %v61 = vld [vmem:[#allocation2 + $0x70] sm:$0xff]
    %v62 = vld [vmem:[#allocation2 + $0x78] sm:$0xff]
    %v63 = vld [vmem:[#allocation2 + $0x80] sm:$0xff]
    %v64 = vld [vmem:[#allocation2 + $0x88] sm:$0xff]
    %v65 = vld [vmem:[#allocation2 + $0x90] sm:$0xff]
    %v66 = vld [vmem:[#allocation2 + $0x98] sm:$0xff]
    %v67 = vld [vmem:[#allocation2 + $0xa0] sm:$0xff]
    %v68 = vld [vmem:[#allocation2 + $0xa8] sm:$0xff]
    %v69 = vld [vmem:[#allocation2 + $0xb0] sm:$0xff]
    %v70 = vld [vmem:[#allocation2 + $0xb8] sm:$0xff]
    %v71 = vld [vmem:[#allocation2 + $0xc0] sm:$0xff]
    %v72 = vld [vmem:[#allocation5] sm:$0xff]
    %v73 = vld [vmem:[#allocation5 + $0x8] sm:$0xff]
    %v74 = vld [vmem:[#allocation5 + $0x10] sm:$0xff]
    %v75 = vld [vmem:[#allocation5 + $0x18] sm:$0xff]
    %v76 = vld [vmem:[#allocation5 + $0x20] sm:$0xff]
    %v77 = vld [vmem:[#allocation5 + $0x28] sm:$0xff]
    %v78 = vld [vmem:[#allocation5 + $0x30] sm:$0xff]
    %v79 = vld [vmem:[#allocation5 + $0x38] sm:$0xff]
    %v80 = vld [vmem:[#allocation5 + $0x40] sm:$0xff]
    %v81 = vld [vmem:[#allocation5 + $0x48] sm:$0xff]
    %v82 = vld [vmem:[#allocation5 + $0x50] sm:$0xff]
    %v83 = vld [vmem:[#allocation5 + $0x58] sm:$0xff]
    %v84 = vld [vmem:[#allocation5 + $0x60] sm:$0xff]
    %v85 = vld [vmem:[#allocation5 + $0x68] sm:$0xff]
    %v86 = vld [vmem:[#allocation5 + $0x70] sm:$0xff]
    %v87 = vld [vmem:[#allocation5 + $0x78] sm:$0xff]
    %v88 = vld [vmem:[%s2] sm:$0x1]
    %v90 = vperm.slane %v88, 0
    %92 = vmatpush.msra.mxu0 %v87
    %93 = vmatpush.msra.mxu0 %v86
    %94 = vmatpush.msra.mxu0 %v85
    %95 = vmatpush.msra.mxu0 %v84
    %96 = vmatpush.msra.mxu0 %v83
    %97 = vmatpush.msra.mxu0 %v82
    %98 = vmatpush.msra.mxu0 %v81
    %99 = vmatpush.msra.mxu0 %v80
    %100 = vmatpush.msra.mxu0 %v79
    %101 = vmatpush.msra.mxu0 %v78
    %102 = vmatpush.msra.mxu0 %v77
    %103 = vmatpush.msra.mxu0 %v76
    %104 = vmatpush.msra.mxu0 %v75
    %105 = vmatpush.msra.mxu0 %v74
    %106 = vmatpush.msra.mxu0 %v73
    %107 = vmatpush.msra.mxu0 %v72
    %108 = vmatmul.f32.gmra.mxu0 %v47
    %v109 = vpop.f32.mrf.mxu0
    %v110 = vadd.f32 %v90, %v109
    %111 = vmatmul.f32.gmra.mxu0 %v48
    %v112 = vpop.f32.mrf.mxu0
    %v113 = vadd.f32 %v90, %v112
    %114 = vmatmul.f32.gmra.mxu0 %v49
    %v115 = vpop.f32.mrf.mxu0
    %v116 = vadd.f32 %v90, %v115
    %117 = vmatmul.f32.gmra.mxu0 %v50
    %v118 = vpop.f32.mrf.mxu0
    %v119 = vadd.f32 %v90, %v118
    %120 = vmatmul.f32.gmra.mxu0 %v51
    %v121 = vpop.f32.mrf.mxu0
    %v122 = vadd.f32 %v90, %v121
    %123 = vmatmul.f32.gmra.mxu0 %v52
    %v124 = vpop.f32.mrf.mxu0
    %v125 = vadd.f32 %v90, %v124
    %126 = vmatmul.f32.gmra.mxu0 %v53
    %v127 = vpop.f32.mrf.mxu0
    %v128 = vadd.f32 %v90, %v127
    %129 = vmatmul.f32.gmra.mxu0 %v54
    %v130 = vpop.f32.mrf.mxu0
    %v131 = vadd.f32 %v90, %v130
    %132 = vmatmul.f32.gmra.mxu0 %v55
    %v133 = vpop.f32.mrf.mxu0
    %v134 = vadd.f32 %v90, %v133
    %135 = vmatmul.f32.gmra.mxu0 %v56
    %v136 = vpop.f32.mrf.mxu0
    %v137 = vadd.f32 %v90, %v136
    %138 = vmatmul.f32.gmra.mxu0 %v57
    %v139 = vpop.f32.mrf.mxu0
    %v140 = vadd.f32 %v90, %v139
    %141 = vmatmul.f32.gmra.mxu0 %v58
    %v142 = vpop.f32.mrf.mxu0
    %v143 = vadd.f32 %v90, %v142
    %144 = vmatmul.f32.gmra.mxu0 %v59
    %v145 = vpop.f32.mrf.mxu0
    %v146 = vadd.f32 %v90, %v145
    %147 = vmatmul.f32.gmra.mxu0 %v60
    %v148 = vpop.f32.mrf.mxu0
    %v149 = vadd.f32 %v90, %v148
    %150 = vmatmul.f32.gmra.mxu0 %v61
    %v151 = vpop.f32.mrf.mxu0
    %v152 = vadd.f32 %v90, %v151
    %153 = vmatmul.f32.gmra.mxu0 %v62
    %v154 = vpop.f32.mrf.mxu0
    %v155 = vadd.f32 %v90, %v154
    %156 = vmatmul.f32.gmra.mxu0 %v63
    %v157 = vpop.f32.mrf.mxu0
    %v158 = vadd.f32 %v90, %v157
    %159 = vmatmul.f32.gmra.mxu0 %v64
    %v160 = vpop.f32.mrf.mxu0
    %v161 = vadd.f32 %v90, %v160
    %162 = vmatmul.f32.gmra.mxu0 %v65
    %v163 = vpop.f32.mrf.mxu0
    %v164 = vadd.f32 %v90, %v163
    %165 = vmatmul.f32.gmra.mxu0 %v66
    %v166 = vpop.f32.mrf.mxu0
    %v167 = vadd.f32 %v90, %v166
    %168 = vmatmul.f32.gmra.mxu0 %v67
    %v169 = vpop.f32.mrf.mxu0
    %v170 = vadd.f32 %v90, %v169
    %171 = vmatmul.f32.gmra.mxu0 %v68
    %v172 = vpop.f32.mrf.mxu0
    %v173 = vadd.f32 %v90, %v172
    %174 = vmatmul.f32.gmra.mxu0 %v69
    %v175 = vpop.f32.mrf.mxu0
    %v176 = vadd.f32 %v90, %v175
    %177 = vmatmul.f32.gmra.mxu0 %v70
    %v178 = vpop.f32.mrf.mxu0
    %v179 = vadd.f32 %v90, %v178
    %180 = vmatmul.f32.gmra.mxu0 %v71
    %v181 = vpop.f32.mrf.mxu0
    %v182 = vadd.f32 %v90, %v181
    %183 = vdwg.mxu0
    %v184 = vand.u32 2147483647, %v110
    %vm185 = vcmp.le.f32.partialorder %v184, 0.7853982
    %vm186 = vcmp.lt.s32.totalorder %v110, 0
    %v187 = vand.u32 %v110, 2139095040
    %v188 = vshrl.u32 %v187, 23
    %v189 = vsub.s32 %v188, 127
    %v190 = vand.u32 2147483647, %v110
    %v191 = vand.u32 %v190, 8388607
    %v192 = vor.u32 %v191, 8388608
    %v193 = vsub.s32 0, %v192
    %v194 = vadd.s32 %v189, 1
    %vm195 = vcmp.gt.s32.totalorder %v194, 0
    %v196 = vsel %vm195, %v194, 0
    %v197 = vshrl.u32 %v196, 5
    %v198 = vand.u32 %v196, 31
    %v199 = vsub.s32 32, %v198
    %v200 = vshrl.u32 683565275, %v199
    %v201 = vshll.u32 683565275, %v198
    %v202 = vshrl.u32 2475754826, %v199
    %v203 = vor.u32 %v201, %v202
    %v204 = vshll.u32 2475754826, %v198
    %v205 = vshrl.u32 2131351028, %v199
    %v206 = vor.u32 %v204, %v205
    %v207 = vshll.u32 2131351028, %v198
    %v208 = vshrl.u32 2102212464, %v199
    %v209 = vor.u32 %v207, %v208
    %v210 = vshll.u32 2102212464, %v198
    %v211 = vshrl.u32 920167782, %v199
    %v212 = vor.u32 %v210, %v211
    %v213 = vshll.u32 920167782, %v198
    %v214 = vshrl.u32 1326507024, %v199
    %v215 = vor.u32 %v213, %v214
    %vm216 = vcmp.lt.s32.totalorder %v197, 1
    %vm217 = vcmp.lt.s32.totalorder %v197, 2
    %vm218 = vcmp.lt.s32.totalorder %v197, 3
    %vm219 = vcmp.lt.s32.totalorder %v197, 4
    %v220 = vsel %vm216, %v200, %v203
    %v221 = vsel %vm219, %v209, 2102212464
    %v222 = vsel %vm218, %v206, %v221
    %v223 = vsel %vm217, %v220, %v222
    %v224 = vsel %vm216, %v203, %v206
    %v225 = vsel %vm219, %v212, 920167782
    %v226 = vsel %vm218, %v209, %v225
    %v227 = vsel %vm217, %v224, %v226
    %v228 = vsel %vm216, %v206, %v209
    %v229 = vsel %vm219, %v215, 1326507024
    %v230 = vsel %vm218, %v212, %v229
    %v231 = vsel %vm217, %v228, %v230
    %v232 = vshll.u32 %v192, 8
    %v233 = vand.u32 %v232, 65535
    %v234 = vshrl.u32 %v232, 16
    %v235 = vand.u32 %v231, 65535
    %v236 = vshrl.u32 %v231, 16
    %v237 = vmul.u32 %v233, %v235
    %v238 = vmul.u32 %v233, %v236
    %v239 = vmul.u32 %v234, %v235
    %v240 = vmul.u32 %v234, %v236
    %v241 = vshll.u32 %v238, 16
    %v242 = vshrl.u32 %v238, 16
    %v243 = vshll.u32 %v239, 16
    %v244 = vshrl.u32 %v239, 16
    %vm245 = vc.u32 %v237, %v241
    %v246 = vsel %vm245, 1, 0
    %v247 = vadd.s32 %v237, %v241
    %v248 = vadd.s32 %v240, %v246
    %vm249 = vc.u32 %v247, %v243
    %v250 = vsel %vm249, 1, 0
    %v251 = vadd.s32 %v247, %v243
    %v252 = vadd.s32 %v248, %v250
    %v253 = vadd.s32 %v252, %v242
    %v254 = vadd.s32 %v253, %v244
    %v255 = vand.u32 %v232, 65535
    %v256 = vshrl.u32 %v232, 16
    %v257 = vand.u32 %v227, 65535
    %v258 = vshrl.u32 %v227, 16
    %v259 = vmul.u32 %v255, %v257
    %v260 = vmul.u32 %v255, %v258
    %v261 = vmul.u32 %v256, %v257
    %v262 = vmul.u32 %v256, %v258
    %v263 = vshll.u32 %v260, 16
    %v264 = vshrl.u32 %v260, 16
    %v265 = vshll.u32 %v261, 16
    %v266 = vshrl.u32 %v261, 16
    %vm267 = vc.u32 %v259, %v263
    %v268 = vsel %vm267, 1, 0
    %v269 = vadd.s32 %v259, %v263
    %v270 = vadd.s32 %v262, %v268
    %vm271 = vc.u32 %v269, %v265
    %v272 = vsel %vm271, 1, 0
    %v273 = vadd.s32 %v269, %v265
    %v274 = vadd.s32 %v270, %v272
    %v275 = vadd.s32 %v274, %v264
    %v276 = vadd.s32 %v275, %v266
    %v277 = vmul.u32 %v232, %v223
    %v278 = vadd.s32 %v254, %v273
    %vm279 = vc.u32 %v254, %v273
    %v280 = vadd.s32 %v276, 1
    %v281 = vsel %vm279, %v280, %v276
    %v282 = vadd.s32 %v277, %v281
    %v283 = vadd.s32 %v282, 536870912
    %v284 = vshrl.u32 %v283, 30
    %v285 = vshll.u32 %v284, 30
    %v286 = vsub.s32 %v282, %v285
    %vm287 = vcmp.lt.s32.totalorder %v286, 0
    %v288 = vsub.s32 0, %v286
    %v289 = vsel %vm287, %v288, %v286
    %v290 = vclz %v289
    %v291 = vsub.s32 %v290, 2
    %vm292 = vcmp.gt.s32.totalorder 0, %v291
    %v293 = vsel %vm292, 0, %v291
    %v294 = vsub.s32 32, %v293
    %v295 = vshll.u32 %v286, %v293
    %v296 = vshrl.u32 %v278, %v294
    %v297 = vor.u32 %v295, %v296
    %v298 = vsub.s32 4294967266, %v293
    %v299 = vadd.s32 %v298, 127
    %v300 = vshll.u32 %v299, 23
    %v301 = vor.u32 4788187, %v300
    %v302 = vand.u32 2147483647, %v301
    %v304 = vcvt.s32.f32 %v297
    %v305 = vmul.f32 %v304, %v302
    %v306 = vxor.u32 %v305, 2147483648
    %v307 = vsel %vm186, %v306, %v305
    %v308 = vsub.s32 4, %v284
    %v309 = vsel %vm186, %v308, %v284
    %v310 = vsel %vm185, %v110, %v307
    %v311 = vsel %vm185, 0, %v309
    %v312 = vmul.f32 %v310, %v310
    %v313 = vmul.f32 %v312, -0.001358992
    %v314 = vadd.f32 %v313, 0.041655596
    %v315 = vmul.f32 %v312, %v314
    %v316 = vadd.f32 %v315, -0.4999988
    %v317 = vmul.f32 %v312, %v316
    %v318 = vadd.f32 1.0, %v317
    %v319 = vmul.f32 %v310, %v310
    %v320 = vmul.f32 %v319, -0.00019511016
    %v321 = vadd.f32 %v320, 0.008332121
    %v322 = vmul.f32 %v319, %v321
    %v323 = vadd.f32 %v322, -0.16666654
    %v324 = vmul.f32 %v319, %v323
    %v325 = vadd.f32 %v324, 1.0
    %v326 = vmul.f32 %v325, %v310
    %vm327 = vweird.f32 %v110
    %v328 = vadd.s32 %v311, 3
    %v329 = vand.u32 %v328, 3
    %vm330 = vcmp.lt.s32.totalorder %v329, 2
    %vm331 = vcmp.eq.s32.totalorder %v329, 0
    %v332 = vxor.u32 %v326, 2147483648
    %v333 = vsel %vm331, %v318, %v332
    %vm334 = vcmp.eq.s32.totalorder %v329, 2
    %v335 = vxor.u32 %v318, 2147483648
    %v336 = vsel %vm334, %v335, %v326
    %v337 = vsel %vm330, %v333, %v336
    %v338 = vsel %vm327, nan, %v337
    %v339 = vand.u32 2147483647, %v113
    %vm340 = vcmp.le.f32.partialorder %v339, 0.7853982
    %vm341 = vcmp.lt.s32.totalorder %v113, 0
    %v342 = vand.u32 %v113, 2139095040
    %v343 = vshrl.u32 %v342, 23
    %v344 = vsub.s32 %v343, 127
    %v345 = vand.u32 2147483647, %v113
    %v346 = vand.u32 %v345, 8388607
    %v347 = vor.u32 %v346, 8388608
    %v348 = vsub.s32 0, %v347
    %v349 = vadd.s32 %v344, 1
    %vm350 = vcmp.gt.s32.totalorder %v349, 0
    %v351 = vsel %vm350, %v349, 0
    %v352 = vshrl.u32 %v351, 5
    %v353 = vand.u32 %v351, 31
    %v354 = vsub.s32 32, %v353
    %v355 = vshrl.u32 683565275, %v354
    %v356 = vshll.u32 683565275, %v353
    %v357 = vshrl.u32 2475754826, %v354
    %v358 = vor.u32 %v356, %v357
    %v359 = vshll.u32 2475754826, %v353
    %v360 = vshrl.u32 2131351028, %v354
    %v361 = vor.u32 %v359, %v360
    %v362 = vshll.u32 2131351028, %v353
    %v363 = vshrl.u32 2102212464, %v354
    %v364 = vor.u32 %v362, %v363
    %v365 = vshll.u32 2102212464, %v353
    %v366 = vshrl.u32 920167782, %v354
    %v367 = vor.u32 %v365, %v366
    %v368 = vshll.u32 920167782, %v353
    %v369 = vshrl.u32 1326507024, %v354
    %v370 = vor.u32 %v368, %v369
    %vm371 = vcmp.lt.s32.totalorder %v352, 1
    %vm372 = vcmp.lt.s32.totalorder %v352, 2
    %vm373 = vcmp.lt.s32.totalorder %v352, 3
    %vm374 = vcmp.lt.s32.totalorder %v352, 4
    %v375 = vsel %vm371, %v355, %v358
    %v376 = vsel %vm374, %v364, 2102212464
    %v377 = vsel %vm373, %v361, %v376
    %v378 = vsel %vm372, %v375, %v377
    %v379 = vsel %vm371, %v358, %v361
    %v380 = vsel %vm374, %v367, 920167782
    %v381 = vsel %vm373, %v364, %v380
    %v382 = vsel %vm372, %v379, %v381
    %v383 = vsel %vm371, %v361, %v364
    %v384 = vsel %vm374, %v370, 1326507024
    %v385 = vsel %vm373, %v367, %v384
    %v386 = vsel %vm372, %v383, %v385
    %v387 = vshll.u32 %v347, 8
    %v388 = vand.u32 %v387, 65535
    %v389 = vshrl.u32 %v387, 16
    %v390 = vand.u32 %v386, 65535
    %v391 = vshrl.u32 %v386, 16
    %v392 = vmul.u32 %v388, %v390
    %v393 = vmul.u32 %v388, %v391
    %v394 = vmul.u32 %v389, %v390
    %v395 = vmul.u32 %v389, %v391
    %v396 = vshll.u32 %v393, 16
    %v397 = vshrl.u32 %v393, 16
    %v398 = vshll.u32 %v394, 16
    %v399 = vshrl.u32 %v394, 16
    %vm400 = vc.u32 %v392, %v396
    %v401 = vsel %vm400, 1, 0
    %v402 = vadd.s32 %v392, %v396
    %v403 = vadd.s32 %v395, %v401
    %vm404 = vc.u32 %v402, %v398
    %v405 = vsel %vm404, 1, 0
    %v406 = vadd.s32 %v402, %v398
    %v407 = vadd.s32 %v403, %v405
    %v408 = vadd.s32 %v407, %v397
    %v409 = vadd.s32 %v408, %v399
    %v410 = vand.u32 %v387, 65535
    %v411 = vshrl.u32 %v387, 16
    %v412 = vand.u32 %v382, 65535
    %v413 = vshrl.u32 %v382, 16
    %v414 = vmul.u32 %v410, %v412
    %v415 = vmul.u32 %v410, %v413
    %v416 = vmul.u32 %v411, %v412
    %v417 = vmul.u32 %v411, %v413
    %v418 = vshll.u32 %v415, 16
    %v419 = vshrl.u32 %v415, 16
    %v420 = vshll.u32 %v416, 16
    %v421 = vshrl.u32 %v416, 16
    %vm422 = vc.u32 %v414, %v418
    %v423 = vsel %vm422, 1, 0
    %v424 = vadd.s32 %v414, %v418
    %v425 = vadd.s32 %v417, %v423
    %vm426 = vc.u32 %v424, %v420
    %v427 = vsel %vm426, 1, 0
    %v428 = vadd.s32 %v424, %v420
    %v429 = vadd.s32 %v425, %v427
    %v430 = vadd.s32 %v429, %v419
    %v431 = vadd.s32 %v430, %v421
    %v432 = vmul.u32 %v387, %v378
    %v433 = vadd.s32 %v409, %v428
    %vm434 = vc.u32 %v409, %v428
    %v435 = vadd.s32 %v431, 1
    %v436 = vsel %vm434, %v435, %v431
    %v437 = vadd.s32 %v432, %v436
    %v438 = vadd.s32 %v437, 536870912
    %v439 = vshrl.u32 %v438, 30
    %v440 = vshll.u32 %v439, 30
    %v441 = vsub.s32 %v437, %v440
    %vm442 = vcmp.lt.s32.totalorder %v441, 0
    %v443 = vsub.s32 0, %v441
    %v444 = vsel %vm442, %v443, %v441
    %v445 = vclz %v444
    %v446 = vsub.s32 %v445, 2
    %vm447 = vcmp.gt.s32.totalorder 0, %v446
    %v448 = vsel %vm447, 0, %v446
    %v449 = vsub.s32 32, %v448
    %v450 = vshll.u32 %v441, %v448
    %v451 = vshrl.u32 %v433, %v449
    %v452 = vor.u32 %v450, %v451
    %v453 = vsub.s32 4294967266, %v448
    %v454 = vadd.s32 %v453, 127
    %v455 = vshll.u32 %v454, 23
    %v456 = vor.u32 4788187, %v455
    %v457 = vand.u32 2147483647, %v456
    %v459 = vcvt.s32.f32 %v452
    %v460 = vmul.f32 %v459, %v457
    %v461 = vxor.u32 %v460, 2147483648
    %v462 = vsel %vm341, %v461, %v460
    %v463 = vsub.s32 4, %v439
    %v464 = vsel %vm341, %v463, %v439
    %v465 = vsel %vm340, %v113, %v462
    %v466 = vsel %vm340, 0, %v464
    %v467 = vmul.f32 %v465, %v465
    %v468 = vmul.f32 %v467, -0.001358992
    %v469 = vadd.f32 %v468, 0.041655596
    %v470 = vmul.f32 %v467, %v469
    %v471 = vadd.f32 %v470, -0.4999988
    %v472 = vmul.f32 %v467, %v471
    %v473 = vadd.f32 1.0, %v472
    %v474 = vmul.f32 %v465, %v465
    %v475 = vmul.f32 %v474, -0.00019511016
    %v476 = vadd.f32 %v475, 0.008332121
    %v477 = vmul.f32 %v474, %v476
    %v478 = vadd.f32 %v477, -0.16666654
    %v479 = vmul.f32 %v474, %v478
    %v480 = vadd.f32 %v479, 1.0
    %v481 = vmul.f32 %v480, %v465
    %vm482 = vweird.f32 %v113
    %v483 = vadd.s32 %v466, 3
    %v484 = vand.u32 %v483, 3
    %vm485 = vcmp.lt.s32.totalorder %v484, 2
    %vm486 = vcmp.eq.s32.totalorder %v484, 0
    %v487 = vxor.u32 %v481, 2147483648
    %v488 = vsel %vm486, %v473, %v487
    %vm489 = vcmp.eq.s32.totalorder %v484, 2
    %v490 = vxor.u32 %v473, 2147483648
    %v491 = vsel %vm489, %v490, %v481
    %v492 = vsel %vm485, %v488, %v491
    %v493 = vsel %vm482, nan, %v492
    %v494 = vand.u32 2147483647, %v116
    %vm495 = vcmp.le.f32.partialorder %v494, 0.7853982
    %vm496 = vcmp.lt.s32.totalorder %v116, 0
    %v497 = vand.u32 %v116, 2139095040
    %v498 = vshrl.u32 %v497, 23
    %v499 = vsub.s32 %v498, 127
    %v500 = vand.u32 2147483647, %v116
    %v501 = vand.u32 %v500, 8388607
    %v502 = vor.u32 %v501, 8388608
    %v503 = vsub.s32 0, %v502
    %v504 = vadd.s32 %v499, 1
    %vm505 = vcmp.gt.s32.totalorder %v504, 0
    %v506 = vsel %vm505, %v504, 0
    %v507 = vshrl.u32 %v506, 5
    %v508 = vand.u32 %v506, 31
    %v509 = vsub.s32 32, %v508
    %v510 = vshrl.u32 683565275, %v509
    %v511 = vshll.u32 683565275, %v508
    %v512 = vshrl.u32 2475754826, %v509
    %v513 = vor.u32 %v511, %v512
    %v514 = vshll.u32 2475754826, %v508
    %v515 = vshrl.u32 2131351028, %v509
    %v516 = vor.u32 %v514, %v515
    %v517 = vshll.u32 2131351028, %v508
    %v518 = vshrl.u32 2102212464, %v509
    %v519 = vor.u32 %v517, %v518
    %v520 = vshll.u32 2102212464, %v508
    %v521 = vshrl.u32 920167782, %v509
    %v522 = vor.u32 %v520, %v521
    %v523 = vshll.u32 920167782, %v508
    %v524 = vshrl.u32 1326507024, %v509
    %v525 = vor.u32 %v523, %v524
    %vm526 = vcmp.lt.s32.totalorder %v507, 1
    %vm527 = vcmp.lt.s32.totalorder %v507, 2
    %vm528 = vcmp.lt.s32.totalorder %v507, 3
    %vm529 = vcmp.lt.s32.totalorder %v507, 4
    %v530 = vsel %vm526, %v510, %v513
    %v531 = vsel %vm529, %v519, 2102212464
    %v532 = vsel %vm528, %v516, %v531
    %v533 = vsel %vm527, %v530, %v532
    %v534 = vsel %vm526, %v513, %v516
    %v535 = vsel %vm529, %v522, 920167782
    %v536 = vsel %vm528, %v519, %v535
    %v537 = vsel %vm527, %v534, %v536
    %v538 = vsel %vm526, %v516, %v519
    %v539 = vsel %vm529, %v525, 1326507024
    %v540 = vsel %vm528, %v522, %v539
    %v541 = vsel %vm527, %v538, %v540
    %v542 = vshll.u32 %v502, 8
    %v543 = vand.u32 %v542, 65535
    %v544 = vshrl.u32 %v542, 16
    %v545 = vand.u32 %v541, 65535
    %v546 = vshrl.u32 %v541, 16
    %v547 = vmul.u32 %v543, %v545
    %v548 = vmul.u32 %v543, %v546
    %v549 = vmul.u32 %v544, %v545
    %v550 = vmul.u32 %v544, %v546
    %v551 = vshll.u32 %v548, 16
    %v552 = vshrl.u32 %v548, 16
    %v553 = vshll.u32 %v549, 16
    %v554 = vshrl.u32 %v549, 16
    %vm555 = vc.u32 %v547, %v551
    %v556 = vsel %vm555, 1, 0
    %v557 = vadd.s32 %v547, %v551
    %v558 = vadd.s32 %v550, %v556
    %vm559 = vc.u32 %v557, %v553
    %v560 = vsel %vm559, 1, 0
    %v561 = vadd.s32 %v557, %v553
    %v562 = vadd.s32 %v558, %v560
    %v563 = vadd.s32 %v562, %v552
    %v564 = vadd.s32 %v563, %v554
    %v565 = vand.u32 %v542, 65535
    %v566 = vshrl.u32 %v542, 16
    %v567 = vand.u32 %v537, 65535
    %v568 = vshrl.u32 %v537, 16
    %v569 = vmul.u32 %v565, %v567
    %v570 = vmul.u32 %v565, %v568
    %v571 = vmul.u32 %v566, %v567
    %v572 = vmul.u32 %v566, %v568
    %v573 = vshll.u32 %v570, 16
    %v574 = vshrl.u32 %v570, 16
    %v575 = vshll.u32 %v571, 16
    %v576 = vshrl.u32 %v571, 16
    %vm577 = vc.u32 %v569, %v573
    %v578 = vsel %vm577, 1, 0
    %v579 = vadd.s32 %v569, %v573
    %v580 = vadd.s32 %v572, %v578
    %vm581 = vc.u32 %v579, %v575
    %v582 = vsel %vm581, 1, 0
    %v583 = vadd.s32 %v579, %v575
    %v584 = vadd.s32 %v580, %v582
    %v585 = vadd.s32 %v584, %v574
    %v586 = vadd.s32 %v585, %v576
    %v587 = vmul.u32 %v542, %v533
    %v588 = vadd.s32 %v564, %v583
    %vm589 = vc.u32 %v564, %v583
    %v590 = vadd.s32 %v586, 1
    %v591 = vsel %vm589, %v590, %v586
    %v592 = vadd.s32 %v587, %v591
    %v593 = vadd.s32 %v592, 536870912
    %v594 = vshrl.u32 %v593, 30
    %v595 = vshll.u32 %v594, 30
    %v596 = vsub.s32 %v592, %v595
    %vm597 = vcmp.lt.s32.totalorder %v596, 0
    %v598 = vsub.s32 0, %v596
    %v599 = vsel %vm597, %v598, %v596
    %v600 = vclz %v599
    %v601 = vsub.s32 %v600, 2
    %vm602 = vcmp.gt.s32.totalorder 0, %v601
    %v603 = vsel %vm602, 0, %v601
    %v604 = vsub.s32 32, %v603
    %v605 = vshll.u32 %v596, %v603
    %v606 = vshrl.u32 %v588, %v604
    %v607 = vor.u32 %v605, %v606
    %v608 = vsub.s32 4294967266, %v603
    %v609 = vadd.s32 %v608, 127
    %v610 = vshll.u32 %v609, 23
    %v611 = vor.u32 4788187, %v610
    %v612 = vand.u32 2147483647, %v611
    %v614 = vcvt.s32.f32 %v607
    %v615 = vmul.f32 %v614, %v612
    %v616 = vxor.u32 %v615, 2147483648
    %v617 = vsel %vm496, %v616, %v615
    %v618 = vsub.s32 4, %v594
    %v619 = vsel %vm496, %v618, %v594
    %v620 = vsel %vm495, %v116, %v617
    %v621 = vsel %vm495, 0, %v619
    %v622 = vmul.f32 %v620, %v620
    %v623 = vmul.f32 %v622, -0.001358992
    %v624 = vadd.f32 %v623, 0.041655596
    %v625 = vmul.f32 %v622, %v624
    %v626 = vadd.f32 %v625, -0.4999988
    %v627 = vmul.f32 %v622, %v626
    %v628 = vadd.f32 1.0, %v627
    %v629 = vmul.f32 %v620, %v620
    %v630 = vmul.f32 %v629, -0.00019511016
    %v631 = vadd.f32 %v630, 0.008332121
    %v632 = vmul.f32 %v629, %v631
    %v633 = vadd.f32 %v632, -0.16666654
    %v634 = vmul.f32 %v629, %v633
    %v635 = vadd.f32 %v634, 1.0
    %v636 = vmul.f32 %v635, %v620
    %vm637 = vweird.f32 %v116
    %v638 = vadd.s32 %v621, 3
    %v639 = vand.u32 %v638, 3
    %vm640 = vcmp.lt.s32.totalorder %v639, 2
    %vm641 = vcmp.eq.s32.totalorder %v639, 0
    %v642 = vxor.u32 %v636, 2147483648
    %v643 = vsel %vm641, %v628, %v642
    %vm644 = vcmp.eq.s32.totalorder %v639, 2
    %v645 = vxor.u32 %v628, 2147483648
    %v646 = vsel %vm644, %v645, %v636
    %v647 = vsel %vm640, %v643, %v646
    %v648 = vsel %vm637, nan, %v647
    %v649 = vand.u32 2147483647, %v119
    %vm650 = vcmp.le.f32.partialorder %v649, 0.7853982
    %vm651 = vcmp.lt.s32.totalorder %v119, 0
    %v652 = vand.u32 %v119, 2139095040
    %v653 = vshrl.u32 %v652, 23
    %v654 = vsub.s32 %v653, 127
    %v655 = vand.u32 2147483647, %v119
    %v656 = vand.u32 %v655, 8388607
    %v657 = vor.u32 %v656, 8388608
    %v658 = vsub.s32 0, %v657
    %v659 = vadd.s32 %v654, 1
    %vm660 = vcmp.gt.s32.totalorder %v659, 0
    %v661 = vsel %vm660, %v659, 0
    %v662 = vshrl.u32 %v661, 5
    %v663 = vand.u32 %v661, 31
    %v664 = vsub.s32 32, %v663
    %v665 = vshrl.u32 683565275, %v664
    %v666 = vshll.u32 683565275, %v663
    %v667 = vshrl.u32 2475754826, %v664
    %v668 = vor.u32 %v666, %v667
    %v669 = vshll.u32 2475754826, %v663
    %v670 = vshrl.u32 2131351028, %v664
    %v671 = vor.u32 %v669, %v670
    %v672 = vshll.u32 2131351028, %v663
    %v673 = vshrl.u32 2102212464, %v664
    %v674 = vor.u32 %v672, %v673
    %v675 = vshll.u32 2102212464, %v663
    %v676 = vshrl.u32 920167782, %v664
    %v677 = vor.u32 %v675, %v676
    %v678 = vshll.u32 920167782, %v663
    %v679 = vshrl.u32 1326507024, %v664
    %v680 = vor.u32 %v678, %v679
    %vm681 = vcmp.lt.s32.totalorder %v662, 1
    %vm682 = vcmp.lt.s32.totalorder %v662, 2
    %vm683 = vcmp.lt.s32.totalorder %v662, 3
    %vm684 = vcmp.lt.s32.totalorder %v662, 4
    %v685 = vsel %vm681, %v665, %v668
    %v686 = vsel %vm684, %v674, 2102212464
    %v687 = vsel %vm683, %v671, %v686
    %v688 = vsel %vm682, %v685, %v687
    %v689 = vsel %vm681, %v668, %v671
    %v690 = vsel %vm684, %v677, 920167782
    %v691 = vsel %vm683, %v674, %v690
    %v692 = vsel %vm682, %v689, %v691
    %v693 = vsel %vm681, %v671, %v674
    %v694 = vsel %vm684, %v680, 1326507024
    %v695 = vsel %vm683, %v677, %v694
    %v696 = vsel %vm682, %v693, %v695
    %v697 = vshll.u32 %v657, 8
    %v698 = vand.u32 %v697, 65535
    %v699 = vshrl.u32 %v697, 16
    %v700 = vand.u32 %v696, 65535
    %v701 = vshrl.u32 %v696, 16
    %v702 = vmul.u32 %v698, %v700
    %v703 = vmul.u32 %v698, %v701
    %v704 = vmul.u32 %v699, %v700
    %v705 = vmul.u32 %v699, %v701
    %v706 = vshll.u32 %v703, 16
    %v707 = vshrl.u32 %v703, 16
    %v708 = vshll.u32 %v704, 16
    %v709 = vshrl.u32 %v704, 16
    %vm710 = vc.u32 %v702, %v706
    %v711 = vsel %vm710, 1, 0
    %v712 = vadd.s32 %v702, %v706
    %v713 = vadd.s32 %v705, %v711
    %vm714 = vc.u32 %v712, %v708
    %v715 = vsel %vm714, 1, 0
    %v716 = vadd.s32 %v712, %v708
    %v717 = vadd.s32 %v713, %v715
    %v718 = vadd.s32 %v717, %v707
    %v719 = vadd.s32 %v718, %v709
    %v720 = vand.u32 %v697, 65535
    %v721 = vshrl.u32 %v697, 16
    %v722 = vand.u32 %v692, 65535
    %v723 = vshrl.u32 %v692, 16
    %v724 = vmul.u32 %v720, %v722
    %v725 = vmul.u32 %v720, %v723
    %v726 = vmul.u32 %v721, %v722
    %v727 = vmul.u32 %v721, %v723
    %v728 = vshll.u32 %v725, 16
    %v729 = vshrl.u32 %v725, 16
    %v730 = vshll.u32 %v726, 16
    %v731 = vshrl.u32 %v726, 16
    %vm732 = vc.u32 %v724, %v728
    %v733 = vsel %vm732, 1, 0
    %v734 = vadd.s32 %v724, %v728
    %v735 = vadd.s32 %v727, %v733
    %vm736 = vc.u32 %v734, %v730
    %v737 = vsel %vm736, 1, 0
    %v738 = vadd.s32 %v734, %v730
    %v739 = vadd.s32 %v735, %v737
    %v740 = vadd.s32 %v739, %v729
    %v741 = vadd.s32 %v740, %v731
    %v742 = vmul.u32 %v697, %v688
    %v743 = vadd.s32 %v719, %v738
    %vm744 = vc.u32 %v719, %v738
    %v745 = vadd.s32 %v741, 1
    %v746 = vsel %vm744, %v745, %v741
    %v747 = vadd.s32 %v742, %v746
    %v748 = vadd.s32 %v747, 536870912
    %v749 = vshrl.u32 %v748, 30
    %v750 = vshll.u32 %v749, 30
    %v751 = vsub.s32 %v747, %v750
    %vm752 = vcmp.lt.s32.totalorder %v751, 0
    %v753 = vsub.s32 0, %v751
    %v754 = vsel %vm752, %v753, %v751
    %v755 = vclz %v754
    %v756 = vsub.s32 %v755, 2
    %vm757 = vcmp.gt.s32.totalorder 0, %v756
    %v758 = vsel %vm757, 0, %v756
    %v759 = vsub.s32 32, %v758
    %v760 = vshll.u32 %v751, %v758
    %v761 = vshrl.u32 %v743, %v759
    %v762 = vor.u32 %v760, %v761
    %v763 = vsub.s32 4294967266, %v758
    %v764 = vadd.s32 %v763, 127
    %v765 = vshll.u32 %v764, 23
    %v766 = vor.u32 4788187, %v765
    %v767 = vand.u32 2147483647, %v766
    %v769 = vcvt.s32.f32 %v762
    %v770 = vmul.f32 %v769, %v767
    %v771 = vxor.u32 %v770, 2147483648
    %v772 = vsel %vm651, %v771, %v770
    %v773 = vsub.s32 4, %v749
    %v774 = vsel %vm651, %v773, %v749
    %v775 = vsel %vm650, %v119, %v772
    %v776 = vsel %vm650, 0, %v774
    %v777 = vmul.f32 %v775, %v775
    %v778 = vmul.f32 %v777, -0.001358992
    %v779 = vadd.f32 %v778, 0.041655596
    %v780 = vmul.f32 %v777, %v779
    %v781 = vadd.f32 %v780, -0.4999988
    %v782 = vmul.f32 %v777, %v781
    %v783 = vadd.f32 1.0, %v782
    %v784 = vmul.f32 %v775, %v775
    %v785 = vmul.f32 %v784, -0.00019511016
    %v786 = vadd.f32 %v785, 0.008332121
    %v787 = vmul.f32 %v784, %v786
    %v788 = vadd.f32 %v787, -0.16666654
    %v789 = vmul.f32 %v784, %v788
    %v790 = vadd.f32 %v789, 1.0
    %v791 = vmul.f32 %v790, %v775
    %vm792 = vweird.f32 %v119
    %v793 = vadd.s32 %v776, 3
    %v794 = vand.u32 %v793, 3
    %vm795 = vcmp.lt.s32.totalorder %v794, 2
    %vm796 = vcmp.eq.s32.totalorder %v794, 0
    %v797 = vxor.u32 %v791, 2147483648
    %v798 = vsel %vm796, %v783, %v797
    %vm799 = vcmp.eq.s32.totalorder %v794, 2
    %v800 = vxor.u32 %v783, 2147483648
    %v801 = vsel %vm799, %v800, %v791
    %v802 = vsel %vm795, %v798, %v801
    %v803 = vsel %vm792, nan, %v802
    %v804 = vand.u32 2147483647, %v122
    %vm805 = vcmp.le.f32.partialorder %v804, 0.7853982
    %vm806 = vcmp.lt.s32.totalorder %v122, 0
    %v807 = vand.u32 %v122, 2139095040
    %v808 = vshrl.u32 %v807, 23
    %v809 = vsub.s32 %v808, 127
    %v810 = vand.u32 2147483647, %v122
    %v811 = vand.u32 %v810, 8388607
    %v812 = vor.u32 %v811, 8388608
    %v813 = vsub.s32 0, %v812
    %v814 = vadd.s32 %v809, 1
    %vm815 = vcmp.gt.s32.totalorder %v814, 0
    %v816 = vsel %vm815, %v814, 0
    %v817 = vshrl.u32 %v816, 5
    %v818 = vand.u32 %v816, 31
    %v819 = vsub.s32 32, %v818
    %v820 = vshrl.u32 683565275, %v819
    %v821 = vshll.u32 683565275, %v818
    %v822 = vshrl.u32 2475754826, %v819
    %v823 = vor.u32 %v821, %v822
    %v824 = vshll.u32 2475754826, %v818
    %v825 = vshrl.u32 2131351028, %v819
    %v826 = vor.u32 %v824, %v825
    %v827 = vshll.u32 2131351028, %v818
    %v828 = vshrl.u32 2102212464, %v819
    %v829 = vor.u32 %v827, %v828
    %v830 = vshll.u32 2102212464, %v818
    %v831 = vshrl.u32 920167782, %v819
    %v832 = vor.u32 %v830, %v831
    %v833 = vshll.u32 920167782, %v818
    %v834 = vshrl.u32 1326507024, %v819
    %v835 = vor.u32 %v833, %v834
    %vm836 = vcmp.lt.s32.totalorder %v817, 1
    %vm837 = vcmp.lt.s32.totalorder %v817, 2
    %vm838 = vcmp.lt.s32.totalorder %v817, 3
    %vm839 = vcmp.lt.s32.totalorder %v817, 4
    %v840 = vsel %vm836, %v820, %v823
    %v841 = vsel %vm839, %v829, 2102212464
    %v842 = vsel %vm838, %v826, %v841
    %v843 = vsel %vm837, %v840, %v842
    %v844 = vsel %vm836, %v823, %v826
    %v845 = vsel %vm839, %v832, 920167782
    %v846 = vsel %vm838, %v829, %v845
    %v847 = vsel %vm837, %v844, %v846
    %v848 = vsel %vm836, %v826, %v829
    %v849 = vsel %vm839, %v835, 1326507024
    %v850 = vsel %vm838, %v832, %v849
    %v851 = vsel %vm837, %v848, %v850
    %v852 = vshll.u32 %v812, 8
    %v853 = vand.u32 %v852, 65535
    %v854 = vshrl.u32 %v852, 16
    %v855 = vand.u32 %v851, 65535
    %v856 = vshrl.u32 %v851, 16
    %v857 = vmul.u32 %v853, %v855
    %v858 = vmul.u32 %v853, %v856
    %v859 = vmul.u32 %v854, %v855
    %v860 = vmul.u32 %v854, %v856
    %v861 = vshll.u32 %v858, 16
    %v862 = vshrl.u32 %v858, 16
    %v863 = vshll.u32 %v859, 16
    %v864 = vshrl.u32 %v859, 16
    %vm865 = vc.u32 %v857, %v861
    %v866 = vsel %vm865, 1, 0
    %v867 = vadd.s32 %v857, %v861
    %v868 = vadd.s32 %v860, %v866
    %vm869 = vc.u32 %v867, %v863
    %v870 = vsel %vm869, 1, 0
    %v871 = vadd.s32 %v867, %v863
    %v872 = vadd.s32 %v868, %v870
    %v873 = vadd.s32 %v872, %v862
    %v874 = vadd.s32 %v873, %v864
    %v875 = vand.u32 %v852, 65535
    %v876 = vshrl.u32 %v852, 16
    %v877 = vand.u32 %v847, 65535
    %v878 = vshrl.u32 %v847, 16
    %v879 = vmul.u32 %v875, %v877
    %v880 = vmul.u32 %v875, %v878
    %v881 = vmul.u32 %v876, %v877
    %v882 = vmul.u32 %v876, %v878
    %v883 = vshll.u32 %v880, 16
    %v884 = vshrl.u32 %v880, 16
    %v885 = vshll.u32 %v881, 16
    %v886 = vshrl.u32 %v881, 16
    %vm887 = vc.u32 %v879, %v883
    %v888 = vsel %vm887, 1, 0
    %v889 = vadd.s32 %v879, %v883
    %v890 = vadd.s32 %v882, %v888
    %vm891 = vc.u32 %v889, %v885
    %v892 = vsel %vm891, 1, 0
    %v893 = vadd.s32 %v889, %v885
    %v894 = vadd.s32 %v890, %v892
    %v895 = vadd.s32 %v894, %v884
    %v896 = vadd.s32 %v895, %v886
    %v897 = vmul.u32 %v852, %v843
    %v898 = vadd.s32 %v874, %v893
    %vm899 = vc.u32 %v874, %v893
    %v900 = vadd.s32 %v896, 1
    %v901 = vsel %vm899, %v900, %v896
    %v902 = vadd.s32 %v897, %v901
    %v903 = vadd.s32 %v902, 536870912
    %v904 = vshrl.u32 %v903, 30
    %v905 = vshll.u32 %v904, 30
    %v906 = vsub.s32 %v902, %v905
    %vm907 = vcmp.lt.s32.totalorder %v906, 0
    %v908 = vsub.s32 0, %v906
    %v909 = vsel %vm907, %v908, %v906
    %v910 = vclz %v909
    %v911 = vsub.s32 %v910, 2
    %vm912 = vcmp.gt.s32.totalorder 0, %v911
    %v913 = vsel %vm912, 0, %v911
    %v914 = vsub.s32 32, %v913
    %v915 = vshll.u32 %v906, %v913
    %v916 = vshrl.u32 %v898, %v914
    %v917 = vor.u32 %v915, %v916
    %v918 = vsub.s32 4294967266, %v913
    %v919 = vadd.s32 %v918, 127
    %v920 = vshll.u32 %v919, 23
    %v921 = vor.u32 4788187, %v920
    %v922 = vand.u32 2147483647, %v921
    %v924 = vcvt.s32.f32 %v917
    %v925 = vmul.f32 %v924, %v922
    %v926 = vxor.u32 %v925, 2147483648
    %v927 = vsel %vm806, %v926, %v925
    %v928 = vsub.s32 4, %v904
    %v929 = vsel %vm806, %v928, %v904
    %v930 = vsel %vm805, %v122, %v927
    %v931 = vsel %vm805, 0, %v929
    %v932 = vmul.f32 %v930, %v930
    %v933 = vmul.f32 %v932, -0.001358992
    %v934 = vadd.f32 %v933, 0.041655596
    %v935 = vmul.f32 %v932, %v934
    %v936 = vadd.f32 %v935, -0.4999988
    %v937 = vmul.f32 %v932, %v936
    %v938 = vadd.f32 1.0, %v937
    %v939 = vmul.f32 %v930, %v930
    %v940 = vmul.f32 %v939, -0.00019511016
    %v941 = vadd.f32 %v940, 0.008332121
    %v942 = vmul.f32 %v939, %v941
    %v943 = vadd.f32 %v942, -0.16666654
    %v944 = vmul.f32 %v939, %v943
    %v945 = vadd.f32 %v944, 1.0
    %v946 = vmul.f32 %v945, %v930
    %vm947 = vweird.f32 %v122
    %v948 = vadd.s32 %v931, 3
    %v949 = vand.u32 %v948, 3
    %vm950 = vcmp.lt.s32.totalorder %v949, 2
    %vm951 = vcmp.eq.s32.totalorder %v949, 0
    %v952 = vxor.u32 %v946, 2147483648
    %v953 = vsel %vm951, %v938, %v952
    %vm954 = vcmp.eq.s32.totalorder %v949, 2
    %v955 = vxor.u32 %v938, 2147483648
    %v956 = vsel %vm954, %v955, %v946
    %v957 = vsel %vm950, %v953, %v956
    %v958 = vsel %vm947, nan, %v957
    %v959 = vand.u32 2147483647, %v125
    %vm960 = vcmp.le.f32.partialorder %v959, 0.7853982
    %vm961 = vcmp.lt.s32.totalorder %v125, 0
    %v962 = vand.u32 %v125, 2139095040
    %v963 = vshrl.u32 %v962, 23
    %v964 = vsub.s32 %v963, 127
    %v965 = vand.u32 2147483647, %v125
    %v966 = vand.u32 %v965, 8388607
    %v967 = vor.u32 %v966, 8388608
    %v968 = vsub.s32 0, %v967
    %v969 = vadd.s32 %v964, 1
    %vm970 = vcmp.gt.s32.totalorder %v969, 0
    %v971 = vsel %vm970, %v969, 0
    %v972 = vshrl.u32 %v971, 5
    %v973 = vand.u32 %v971, 31
    %v974 = vsub.s32 32, %v973
    %v975 = vshrl.u32 683565275, %v974
    %v976 = vshll.u32 683565275, %v973
    %v977 = vshrl.u32 2475754826, %v974
    %v978 = vor.u32 %v976, %v977
    %v979 = vshll.u32 2475754826, %v973
    %v980 = vshrl.u32 2131351028, %v974
    %v981 = vor.u32 %v979, %v980
    %v982 = vshll.u32 2131351028, %v973
    %v983 = vshrl.u32 2102212464, %v974
    %v984 = vor.u32 %v982, %v983
    %v985 = vshll.u32 2102212464, %v973
    %v986 = vshrl.u32 920167782, %v974
    %v987 = vor.u32 %v985, %v986
    %v988 = vshll.u32 920167782, %v973
    %v989 = vshrl.u32 1326507024, %v974
    %v990 = vor.u32 %v988, %v989
    %vm991 = vcmp.lt.s32.totalorder %v972, 1
    %vm992 = vcmp.lt.s32.totalorder %v972, 2
    %vm993 = vcmp.lt.s32.totalorder %v972, 3
    %vm994 = vcmp.lt.s32.totalorder %v972, 4
    %v995 = vsel %vm991, %v975, %v978
    %v996 = vsel %vm994, %v984, 2102212464
    %v997 = vsel %vm993, %v981, %v996
    %v998 = vsel %vm992, %v995, %v997
    %v999 = vsel %vm991, %v978, %v981
    %v1000 = vsel %vm994, %v987, 920167782
    %v1001 = vsel %vm993, %v984, %v1000
    %v1002 = vsel %vm992, %v999, %v1001
    %v1003 = vsel %vm991, %v981, %v984
    %v1004 = vsel %vm994, %v990, 1326507024
    %v1005 = vsel %vm993, %v987, %v1004
    %v1006 = vsel %vm992, %v1003, %v1005
    %v1007 = vshll.u32 %v967, 8
    %v1008 = vand.u32 %v1007, 65535
    %v1009 = vshrl.u32 %v1007, 16
    %v1010 = vand.u32 %v1006, 65535
    %v1011 = vshrl.u32 %v1006, 16
    %v1012 = vmul.u32 %v1008, %v1010
    %v1013 = vmul.u32 %v1008, %v1011
    %v1014 = vmul.u32 %v1009, %v1010
    %v1015 = vmul.u32 %v1009, %v1011
    %v1016 = vshll.u32 %v1013, 16
    %v1017 = vshrl.u32 %v1013, 16
    %v1018 = vshll.u32 %v1014, 16
    %v1019 = vshrl.u32 %v1014, 16
    %vm1020 = vc.u32 %v1012, %v1016
    %v1021 = vsel %vm1020, 1, 0
    %v1022 = vadd.s32 %v1012, %v1016
    %v1023 = vadd.s32 %v1015, %v1021
    %vm1024 = vc.u32 %v1022, %v1018
    %v1025 = vsel %vm1024, 1, 0
    %v1026 = vadd.s32 %v1022, %v1018
    %v1027 = vadd.s32 %v1023, %v1025
    %v1028 = vadd.s32 %v1027, %v1017
    %v1029 = vadd.s32 %v1028, %v1019
    %v1030 = vand.u32 %v1007, 65535
    %v1031 = vshrl.u32 %v1007, 16
    %v1032 = vand.u32 %v1002, 65535
    %v1033 = vshrl.u32 %v1002, 16
    %v1034 = vmul.u32 %v1030, %v1032
    %v1035 = vmul.u32 %v1030, %v1033
    %v1036 = vmul.u32 %v1031, %v1032
    %v1037 = vmul.u32 %v1031, %v1033
    %v1038 = vshll.u32 %v1035, 16
    %v1039 = vshrl.u32 %v1035, 16
    %v1040 = vshll.u32 %v1036, 16
    %v1041 = vshrl.u32 %v1036, 16
    %vm1042 = vc.u32 %v1034, %v1038
    %v1043 = vsel %vm1042, 1, 0
    %v1044 = vadd.s32 %v1034, %v1038
    %v1045 = vadd.s32 %v1037, %v1043
    %vm1046 = vc.u32 %v1044, %v1040
    %v1047 = vsel %vm1046, 1, 0
    %v1048 = vadd.s32 %v1044, %v1040
    %v1049 = vadd.s32 %v1045, %v1047
    %v1050 = vadd.s32 %v1049, %v1039
    %v1051 = vadd.s32 %v1050, %v1041
    %v1052 = vmul.u32 %v1007, %v998
    %v1053 = vadd.s32 %v1029, %v1048
    %vm1054 = vc.u32 %v1029, %v1048
    %v1055 = vadd.s32 %v1051, 1
    %v1056 = vsel %vm1054, %v1055, %v1051
    %v1057 = vadd.s32 %v1052, %v1056
    %v1058 = vadd.s32 %v1057, 536870912
    %v1059 = vshrl.u32 %v1058, 30
    %v1060 = vshll.u32 %v1059, 30
    %v1061 = vsub.s32 %v1057, %v1060
    %vm1062 = vcmp.lt.s32.totalorder %v1061, 0
    %v1063 = vsub.s32 0, %v1061
    %v1064 = vsel %vm1062, %v1063, %v1061
    %v1065 = vclz %v1064
    %v1066 = vsub.s32 %v1065, 2
    %vm1067 = vcmp.gt.s32.totalorder 0, %v1066
    %v1068 = vsel %vm1067, 0, %v1066
    %v1069 = vsub.s32 32, %v1068
    %v1070 = vshll.u32 %v1061, %v1068
    %v1071 = vshrl.u32 %v1053, %v1069
    %v1072 = vor.u32 %v1070, %v1071
    %v1073 = vsub.s32 4294967266, %v1068
    %v1074 = vadd.s32 %v1073, 127
    %v1075 = vshll.u32 %v1074, 23
    %v1076 = vor.u32 4788187, %v1075
    %v1077 = vand.u32 2147483647, %v1076
    %v1079 = vcvt.s32.f32 %v1072
    %v1080 = vmul.f32 %v1079, %v1077
    %v1081 = vxor.u32 %v1080, 2147483648
    %v1082 = vsel %vm961, %v1081, %v1080
    %v1083 = vsub.s32 4, %v1059
    %v1084 = vsel %vm961, %v1083, %v1059
    %v1085 = vsel %vm960, %v125, %v1082
    %v1086 = vsel %vm960, 0, %v1084
    %v1087 = vmul.f32 %v1085, %v1085
    %v1088 = vmul.f32 %v1087, -0.001358992
    %v1089 = vadd.f32 %v1088, 0.041655596
    %v1090 = vmul.f32 %v1087, %v1089
    %v1091 = vadd.f32 %v1090, -0.4999988
    %v1092 = vmul.f32 %v1087, %v1091
    %v1093 = vadd.f32 1.0, %v1092
    %v1094 = vmul.f32 %v1085, %v1085
    %v1095 = vmul.f32 %v1094, -0.00019511016
    %v1096 = vadd.f32 %v1095, 0.008332121
    %v1097 = vmul.f32 %v1094, %v1096
    %v1098 = vadd.f32 %v1097, -0.16666654
    %v1099 = vmul.f32 %v1094, %v1098
    %v1100 = vadd.f32 %v1099, 1.0
    %v1101 = vmul.f32 %v1100, %v1085
    %vm1102 = vweird.f32 %v125
    %v1103 = vadd.s32 %v1086, 3
    %v1104 = vand.u32 %v1103, 3
    %vm1105 = vcmp.lt.s32.totalorder %v1104, 2
    %vm1106 = vcmp.eq.s32.totalorder %v1104, 0
    %v1107 = vxor.u32 %v1101, 2147483648
    %v1108 = vsel %vm1106, %v1093, %v1107
    %vm1109 = vcmp.eq.s32.totalorder %v1104, 2
    %v1110 = vxor.u32 %v1093, 2147483648
    %v1111 = vsel %vm1109, %v1110, %v1101
    %v1112 = vsel %vm1105, %v1108, %v1111
    %v1113 = vsel %vm1102, nan, %v1112
    %v1114 = vand.u32 2147483647, %v128
    %vm1115 = vcmp.le.f32.partialorder %v1114, 0.7853982
    %vm1116 = vcmp.lt.s32.totalorder %v128, 0
    %v1117 = vand.u32 %v128, 2139095040
    %v1118 = vshrl.u32 %v1117, 23
    %v1119 = vsub.s32 %v1118, 127
    %v1120 = vand.u32 2147483647, %v128
    %v1121 = vand.u32 %v1120, 8388607
    %v1122 = vor.u32 %v1121, 8388608
    %v1123 = vsub.s32 0, %v1122
    %v1124 = vadd.s32 %v1119, 1
    %vm1125 = vcmp.gt.s32.totalorder %v1124, 0
    %v1126 = vsel %vm1125, %v1124, 0
    %v1127 = vshrl.u32 %v1126, 5
    %v1128 = vand.u32 %v1126, 31
    %v1129 = vsub.s32 32, %v1128
    %v1130 = vshrl.u32 683565275, %v1129
    %v1131 = vshll.u32 683565275, %v1128
    %v1132 = vshrl.u32 2475754826, %v1129
    %v1133 = vor.u32 %v1131, %v1132
    %v1134 = vshll.u32 2475754826, %v1128
    %v1135 = vshrl.u32 2131351028, %v1129
    %v1136 = vor.u32 %v1134, %v1135
    %v1137 = vshll.u32 2131351028, %v1128
    %v1138 = vshrl.u32 2102212464, %v1129
    %v1139 = vor.u32 %v1137, %v1138
    %v1140 = vshll.u32 2102212464, %v1128
    %v1141 = vshrl.u32 920167782, %v1129
    %v1142 = vor.u32 %v1140, %v1141
    %v1143 = vshll.u32 920167782, %v1128
    %v1144 = vshrl.u32 1326507024, %v1129
    %v1145 = vor.u32 %v1143, %v1144
    %vm1146 = vcmp.lt.s32.totalorder %v1127, 1
    %vm1147 = vcmp.lt.s32.totalorder %v1127, 2
    %vm1148 = vcmp.lt.s32.totalorder %v1127, 3
    %vm1149 = vcmp.lt.s32.totalorder %v1127, 4
    %v1150 = vsel %vm1146, %v1130, %v1133
    %v1151 = vsel %vm1149, %v1139, 2102212464
    %v1152 = vsel %vm1148, %v1136, %v1151
    %v1153 = vsel %vm1147, %v1150, %v1152
    %v1154 = vsel %vm1146, %v1133, %v1136
    %v1155 = vsel %vm1149, %v1142, 920167782
    %v1156 = vsel %vm1148, %v1139, %v1155
    %v1157 = vsel %vm1147, %v1154, %v1156
    %v1158 = vsel %vm1146, %v1136, %v1139
    %v1159 = vsel %vm1149, %v1145, 1326507024
    %v1160 = vsel %vm1148, %v1142, %v1159
    %v1161 = vsel %vm1147, %v1158, %v1160
    %v1162 = vshll.u32 %v1122, 8
    %v1163 = vand.u32 %v1162, 65535
    %v1164 = vshrl.u32 %v1162, 16
    %v1165 = vand.u32 %v1161, 65535
    %v1166 = vshrl.u32 %v1161, 16
    %v1167 = vmul.u32 %v1163, %v1165
    %v1168 = vmul.u32 %v1163, %v1166
    %v1169 = vmul.u32 %v1164, %v1165
    %v1170 = vmul.u32 %v1164, %v1166
    %v1171 = vshll.u32 %v1168, 16
    %v1172 = vshrl.u32 %v1168, 16
    %v1173 = vshll.u32 %v1169, 16
    %v1174 = vshrl.u32 %v1169, 16
    %vm1175 = vc.u32 %v1167, %v1171
    %v1176 = vsel %vm1175, 1, 0
    %v1177 = vadd.s32 %v1167, %v1171
    %v1178 = vadd.s32 %v1170, %v1176
    %vm1179 = vc.u32 %v1177, %v1173
    %v1180 = vsel %vm1179, 1, 0
    %v1181 = vadd.s32 %v1177, %v1173
    %v1182 = vadd.s32 %v1178, %v1180
    %v1183 = vadd.s32 %v1182, %v1172
    %v1184 = vadd.s32 %v1183, %v1174
    %v1185 = vand.u32 %v1162, 65535
    %v1186 = vshrl.u32 %v1162, 16
    %v1187 = vand.u32 %v1157, 65535
    %v1188 = vshrl.u32 %v1157, 16
    %v1189 = vmul.u32 %v1185, %v1187
    %v1190 = vmul.u32 %v1185, %v1188
    %v1191 = vmul.u32 %v1186, %v1187
    %v1192 = vmul.u32 %v1186, %v1188
    %v1193 = vshll.u32 %v1190, 16
    %v1194 = vshrl.u32 %v1190, 16
    %v1195 = vshll.u32 %v1191, 16
    %v1196 = vshrl.u32 %v1191, 16
    %vm1197 = vc.u32 %v1189, %v1193
    %v1198 = vsel %vm1197, 1, 0
    %v1199 = vadd.s32 %v1189, %v1193
    %v1200 = vadd.s32 %v1192, %v1198
    %vm1201 = vc.u32 %v1199, %v1195
    %v1202 = vsel %vm1201, 1, 0
    %v1203 = vadd.s32 %v1199, %v1195
    %v1204 = vadd.s32 %v1200, %v1202
    %v1205 = vadd.s32 %v1204, %v1194
    %v1206 = vadd.s32 %v1205, %v1196
    %v1207 = vmul.u32 %v1162, %v1153
    %v1208 = vadd.s32 %v1184, %v1203
    %vm1209 = vc.u32 %v1184, %v1203
    %v1210 = vadd.s32 %v1206, 1
    %v1211 = vsel %vm1209, %v1210, %v1206
    %v1212 = vadd.s32 %v1207, %v1211
    %v1213 = vadd.s32 %v1212, 536870912
    %v1214 = vshrl.u32 %v1213, 30
    %v1215 = vshll.u32 %v1214, 30
    %v1216 = vsub.s32 %v1212, %v1215
    %vm1217 = vcmp.lt.s32.totalorder %v1216, 0
    %v1218 = vsub.s32 0, %v1216
    %v1219 = vsel %vm1217, %v1218, %v1216
    %v1220 = vclz %v1219
    %v1221 = vsub.s32 %v1220, 2
    %vm1222 = vcmp.gt.s32.totalorder 0, %v1221
    %v1223 = vsel %vm1222, 0, %v1221
    %v1224 = vsub.s32 32, %v1223
    %v1225 = vshll.u32 %v1216, %v1223
    %v1226 = vshrl.u32 %v1208, %v1224
    %v1227 = vor.u32 %v1225, %v1226
    %v1228 = vsub.s32 4294967266, %v1223
    %v1229 = vadd.s32 %v1228, 127
    %v1230 = vshll.u32 %v1229, 23
    %v1231 = vor.u32 4788187, %v1230
    %v1232 = vand.u32 2147483647, %v1231
    %v1234 = vcvt.s32.f32 %v1227
    %v1235 = vmul.f32 %v1234, %v1232
    %v1236 = vxor.u32 %v1235, 2147483648
    %v1237 = vsel %vm1116, %v1236, %v1235
    %v1238 = vsub.s32 4, %v1214
    %v1239 = vsel %vm1116, %v1238, %v1214
    %v1240 = vsel %vm1115, %v128, %v1237
    %v1241 = vsel %vm1115, 0, %v1239
    %v1242 = vmul.f32 %v1240, %v1240
    %v1243 = vmul.f32 %v1242, -0.001358992
    %v1244 = vadd.f32 %v1243, 0.041655596
    %v1245 = vmul.f32 %v1242, %v1244
    %v1246 = vadd.f32 %v1245, -0.4999988
    %v1247 = vmul.f32 %v1242, %v1246
    %v1248 = vadd.f32 1.0, %v1247
    %v1249 = vmul.f32 %v1240, %v1240
    %v1250 = vmul.f32 %v1249, -0.00019511016
    %v1251 = vadd.f32 %v1250, 0.008332121
    %v1252 = vmul.f32 %v1249, %v1251
    %v1253 = vadd.f32 %v1252, -0.16666654
    %v1254 = vmul.f32 %v1249, %v1253
    %v1255 = vadd.f32 %v1254, 1.0
    %v1256 = vmul.f32 %v1255, %v1240
    %vm1257 = vweird.f32 %v128
    %v1258 = vadd.s32 %v1241, 3
    %v1259 = vand.u32 %v1258, 3
    %vm1260 = vcmp.lt.s32.totalorder %v1259, 2
    %vm1261 = vcmp.eq.s32.totalorder %v1259, 0
    %v1262 = vxor.u32 %v1256, 2147483648
    %v1263 = vsel %vm1261, %v1248, %v1262
    %vm1264 = vcmp.eq.s32.totalorder %v1259, 2
    %v1265 = vxor.u32 %v1248, 2147483648
    %v1266 = vsel %vm1264, %v1265, %v1256
    %v1267 = vsel %vm1260, %v1263, %v1266
    %v1268 = vsel %vm1257, nan, %v1267
    %v1269 = vand.u32 2147483647, %v131
    %vm1270 = vcmp.le.f32.partialorder %v1269, 0.7853982
    %vm1271 = vcmp.lt.s32.totalorder %v131, 0
    %v1272 = vand.u32 %v131, 2139095040
    %v1273 = vshrl.u32 %v1272, 23
    %v1274 = vsub.s32 %v1273, 127
    %v1275 = vand.u32 2147483647, %v131
    %v1276 = vand.u32 %v1275, 8388607
    %v1277 = vor.u32 %v1276, 8388608
    %v1278 = vsub.s32 0, %v1277
    %v1279 = vadd.s32 %v1274, 1
    %vm1280 = vcmp.gt.s32.totalorder %v1279, 0
    %v1281 = vsel %vm1280, %v1279, 0
    %v1282 = vshrl.u32 %v1281, 5
    %v1283 = vand.u32 %v1281, 31
    %v1284 = vsub.s32 32, %v1283
    %v1285 = vshrl.u32 683565275, %v1284
    %v1286 = vshll.u32 683565275, %v1283
    %v1287 = vshrl.u32 2475754826, %v1284
    %v1288 = vor.u32 %v1286, %v1287
    %v1289 = vshll.u32 2475754826, %v1283
    %v1290 = vshrl.u32 2131351028, %v1284
    %v1291 = vor.u32 %v1289, %v1290
    %v1292 = vshll.u32 2131351028, %v1283
    %v1293 = vshrl.u32 2102212464, %v1284
    %v1294 = vor.u32 %v1292, %v1293
    %v1295 = vshll.u32 2102212464, %v1283
    %v1296 = vshrl.u32 920167782, %v1284
    %v1297 = vor.u32 %v1295, %v1296
    %v1298 = vshll.u32 920167782, %v1283
    %v1299 = vshrl.u32 1326507024, %v1284
    %v1300 = vor.u32 %v1298, %v1299
    %vm1301 = vcmp.lt.s32.totalorder %v1282, 1
    %vm1302 = vcmp.lt.s32.totalorder %v1282, 2
    %vm1303 = vcmp.lt.s32.totalorder %v1282, 3
    %vm1304 = vcmp.lt.s32.totalorder %v1282, 4
    %v1305 = vsel %vm1301, %v1285, %v1288
    %v1306 = vsel %vm1304, %v1294, 2102212464
    %v1307 = vsel %vm1303, %v1291, %v1306
    %v1308 = vsel %vm1302, %v1305, %v1307
    %v1309 = vsel %vm1301, %v1288, %v1291
    %v1310 = vsel %vm1304, %v1297, 920167782
    %v1311 = vsel %vm1303, %v1294, %v1310
    %v1312 = vsel %vm1302, %v1309, %v1311
    %v1313 = vsel %vm1301, %v1291, %v1294
    %v1314 = vsel %vm1304, %v1300, 1326507024
    %v1315 = vsel %vm1303, %v1297, %v1314
    %v1316 = vsel %vm1302, %v1313, %v1315
    %v1317 = vshll.u32 %v1277, 8
    %v1318 = vand.u32 %v1317, 65535
    %v1319 = vshrl.u32 %v1317, 16
    %v1320 = vand.u32 %v1316, 65535
    %v1321 = vshrl.u32 %v1316, 16
    %v1322 = vmul.u32 %v1318, %v1320
    %v1323 = vmul.u32 %v1318, %v1321
    %v1324 = vmul.u32 %v1319, %v1320
    %v1325 = vmul.u32 %v1319, %v1321
    %v1326 = vshll.u32 %v1323, 16
    %v1327 = vshrl.u32 %v1323, 16
    %v1328 = vshll.u32 %v1324, 16
    %v1329 = vshrl.u32 %v1324, 16
    %vm1330 = vc.u32 %v1322, %v1326
    %v1331 = vsel %vm1330, 1, 0
    %v1332 = vadd.s32 %v1322, %v1326
    %v1333 = vadd.s32 %v1325, %v1331
    %vm1334 = vc.u32 %v1332, %v1328
    %v1335 = vsel %vm1334, 1, 0
    %v1336 = vadd.s32 %v1332, %v1328
    %v1337 = vadd.s32 %v1333, %v1335
    %v1338 = vadd.s32 %v1337, %v1327
    %v1339 = vadd.s32 %v1338, %v1329
    %v1340 = vand.u32 %v1317, 65535
    %v1341 = vshrl.u32 %v1317, 16
    %v1342 = vand.u32 %v1312, 65535
    %v1343 = vshrl.u32 %v1312, 16
    %v1344 = vmul.u32 %v1340, %v1342
    %v1345 = vmul.u32 %v1340, %v1343
    %v1346 = vmul.u32 %v1341, %v1342
    %v1347 = vmul.u32 %v1341, %v1343
    %v1348 = vshll.u32 %v1345, 16
    %v1349 = vshrl.u32 %v1345, 16
    %v1350 = vshll.u32 %v1346, 16
    %v1351 = vshrl.u32 %v1346, 16
    %vm1352 = vc.u32 %v1344, %v1348
    %v1353 = vsel %vm1352, 1, 0
    %v1354 = vadd.s32 %v1344, %v1348
    %v1355 = vadd.s32 %v1347, %v1353
    %vm1356 = vc.u32 %v1354, %v1350
    %v1357 = vsel %vm1356, 1, 0
    %v1358 = vadd.s32 %v1354, %v1350
    %v1359 = vadd.s32 %v1355, %v1357
    %v1360 = vadd.s32 %v1359, %v1349
    %v1361 = vadd.s32 %v1360, %v1351
    %v1362 = vmul.u32 %v1317, %v1308
    %v1363 = vadd.s32 %v1339, %v1358
    %vm1364 = vc.u32 %v1339, %v1358
    %v1365 = vadd.s32 %v1361, 1
    %v1366 = vsel %vm1364, %v1365, %v1361
    %v1367 = vadd.s32 %v1362, %v1366
    %v1368 = vadd.s32 %v1367, 536870912
    %v1369 = vshrl.u32 %v1368, 30
    %v1370 = vshll.u32 %v1369, 30
    %v1371 = vsub.s32 %v1367, %v1370
    %vm1372 = vcmp.lt.s32.totalorder %v1371, 0
    %v1373 = vsub.s32 0, %v1371
    %v1374 = vsel %vm1372, %v1373, %v1371
    %v1375 = vclz %v1374
    %v1376 = vsub.s32 %v1375, 2
    %vm1377 = vcmp.gt.s32.totalorder 0, %v1376
    %v1378 = vsel %vm1377, 0, %v1376
    %v1379 = vsub.s32 32, %v1378
    %v1380 = vshll.u32 %v1371, %v1378
    %v1381 = vshrl.u32 %v1363, %v1379
    %v1382 = vor.u32 %v1380, %v1381
    %v1383 = vsub.s32 4294967266, %v1378
    %v1384 = vadd.s32 %v1383, 127
    %v1385 = vshll.u32 %v1384, 23
    %v1386 = vor.u32 4788187, %v1385
    %v1387 = vand.u32 2147483647, %v1386
    %v1389 = vcvt.s32.f32 %v1382
    %v1390 = vmul.f32 %v1389, %v1387
    %v1391 = vxor.u32 %v1390, 2147483648
    %v1392 = vsel %vm1271, %v1391, %v1390
    %v1393 = vsub.s32 4, %v1369
    %v1394 = vsel %vm1271, %v1393, %v1369
    %v1395 = vsel %vm1270, %v131, %v1392
    %v1396 = vsel %vm1270, 0, %v1394
    %v1397 = vmul.f32 %v1395, %v1395
    %v1398 = vmul.f32 %v1397, -0.001358992
    %v1399 = vadd.f32 %v1398, 0.041655596
    %v1400 = vmul.f32 %v1397, %v1399
    %v1401 = vadd.f32 %v1400, -0.4999988
    %v1402 = vmul.f32 %v1397, %v1401
    %v1403 = vadd.f32 1.0, %v1402
    %v1404 = vmul.f32 %v1395, %v1395
    %v1405 = vmul.f32 %v1404, -0.00019511016
    %v1406 = vadd.f32 %v1405, 0.008332121
    %v1407 = vmul.f32 %v1404, %v1406
    %v1408 = vadd.f32 %v1407, -0.16666654
    %v1409 = vmul.f32 %v1404, %v1408
    %v1410 = vadd.f32 %v1409, 1.0
    %v1411 = vmul.f32 %v1410, %v1395
    %vm1412 = vweird.f32 %v131
    %v1413 = vadd.s32 %v1396, 3
    %v1414 = vand.u32 %v1413, 3
    %vm1415 = vcmp.lt.s32.totalorder %v1414, 2
    %vm1416 = vcmp.eq.s32.totalorder %v1414, 0
    %v1417 = vxor.u32 %v1411, 2147483648
    %v1418 = vsel %vm1416, %v1403, %v1417
    %vm1419 = vcmp.eq.s32.totalorder %v1414, 2
    %v1420 = vxor.u32 %v1403, 2147483648
    %v1421 = vsel %vm1419, %v1420, %v1411
    %v1422 = vsel %vm1415, %v1418, %v1421
    %v1423 = vsel %vm1412, nan, %v1422
    %v1424 = vand.u32 2147483647, %v134
    %vm1425 = vcmp.le.f32.partialorder %v1424, 0.7853982
    %vm1426 = vcmp.lt.s32.totalorder %v134, 0
    %v1427 = vand.u32 %v134, 2139095040
    %v1428 = vshrl.u32 %v1427, 23
    %v1429 = vsub.s32 %v1428, 127
    %v1430 = vand.u32 2147483647, %v134
    %v1431 = vand.u32 %v1430, 8388607
    %v1432 = vor.u32 %v1431, 8388608
    %v1433 = vsub.s32 0, %v1432
    %v1434 = vadd.s32 %v1429, 1
    %vm1435 = vcmp.gt.s32.totalorder %v1434, 0
    %v1436 = vsel %vm1435, %v1434, 0
    %v1437 = vshrl.u32 %v1436, 5
    %v1438 = vand.u32 %v1436, 31
    %v1439 = vsub.s32 32, %v1438
    %v1440 = vshrl.u32 683565275, %v1439
    %v1441 = vshll.u32 683565275, %v1438
    %v1442 = vshrl.u32 2475754826, %v1439
    %v1443 = vor.u32 %v1441, %v1442
    %v1444 = vshll.u32 2475754826, %v1438
    %v1445 = vshrl.u32 2131351028, %v1439
    %v1446 = vor.u32 %v1444, %v1445
    %v1447 = vshll.u32 2131351028, %v1438
    %v1448 = vshrl.u32 2102212464, %v1439
    %v1449 = vor.u32 %v1447, %v1448
    %v1450 = vshll.u32 2102212464, %v1438
    %v1451 = vshrl.u32 920167782, %v1439
    %v1452 = vor.u32 %v1450, %v1451
    %v1453 = vshll.u32 920167782, %v1438
    %v1454 = vshrl.u32 1326507024, %v1439
    %v1455 = vor.u32 %v1453, %v1454
    %vm1456 = vcmp.lt.s32.totalorder %v1437, 1
    %vm1457 = vcmp.lt.s32.totalorder %v1437, 2
    %vm1458 = vcmp.lt.s32.totalorder %v1437, 3
    %vm1459 = vcmp.lt.s32.totalorder %v1437, 4
    %v1460 = vsel %vm1456, %v1440, %v1443
    %v1461 = vsel %vm1459, %v1449, 2102212464
    %v1462 = vsel %vm1458, %v1446, %v1461
    %v1463 = vsel %vm1457, %v1460, %v1462
    %v1464 = vsel %vm1456, %v1443, %v1446
    %v1465 = vsel %vm1459, %v1452, 920167782
    %v1466 = vsel %vm1458, %v1449, %v1465
    %v1467 = vsel %vm1457, %v1464, %v1466
    %v1468 = vsel %vm1456, %v1446, %v1449
    %v1469 = vsel %vm1459, %v1455, 1326507024
    %v1470 = vsel %vm1458, %v1452, %v1469
    %v1471 = vsel %vm1457, %v1468, %v1470
    %v1472 = vshll.u32 %v1432, 8
    %v1473 = vand.u32 %v1472, 65535
    %v1474 = vshrl.u32 %v1472, 16
    %v1475 = vand.u32 %v1471, 65535
    %v1476 = vshrl.u32 %v1471, 16
    %v1477 = vmul.u32 %v1473, %v1475
    %v1478 = vmul.u32 %v1473, %v1476
    %v1479 = vmul.u32 %v1474, %v1475
    %v1480 = vmul.u32 %v1474, %v1476
    %v1481 = vshll.u32 %v1478, 16
    %v1482 = vshrl.u32 %v1478, 16
    %v1483 = vshll.u32 %v1479, 16
    %v1484 = vshrl.u32 %v1479, 16
    %vm1485 = vc.u32 %v1477, %v1481
    %v1486 = vsel %vm1485, 1, 0
    %v1487 = vadd.s32 %v1477, %v1481
    %v1488 = vadd.s32 %v1480, %v1486
    %vm1489 = vc.u32 %v1487, %v1483
    %v1490 = vsel %vm1489, 1, 0
    %v1491 = vadd.s32 %v1487, %v1483
    %v1492 = vadd.s32 %v1488, %v1490
    %v1493 = vadd.s32 %v1492, %v1482
    %v1494 = vadd.s32 %v1493, %v1484
    %v1495 = vand.u32 %v1472, 65535
    %v1496 = vshrl.u32 %v1472, 16
    %v1497 = vand.u32 %v1467, 65535
    %v1498 = vshrl.u32 %v1467, 16
    %v1499 = vmul.u32 %v1495, %v1497
    %v1500 = vmul.u32 %v1495, %v1498
    %v1501 = vmul.u32 %v1496, %v1497
    %v1502 = vmul.u32 %v1496, %v1498
    %v1503 = vshll.u32 %v1500, 16
    %v1504 = vshrl.u32 %v1500, 16
    %v1505 = vshll.u32 %v1501, 16
    %v1506 = vshrl.u32 %v1501, 16
    %vm1507 = vc.u32 %v1499, %v1503
    %v1508 = vsel %vm1507, 1, 0
    %v1509 = vadd.s32 %v1499, %v1503
    %v1510 = vadd.s32 %v1502, %v1508
    %vm1511 = vc.u32 %v1509, %v1505
    %v1512 = vsel %vm1511, 1, 0
    %v1513 = vadd.s32 %v1509, %v1505
    %v1514 = vadd.s32 %v1510, %v1512
    %v1515 = vadd.s32 %v1514, %v1504
    %v1516 = vadd.s32 %v1515, %v1506
    %v1517 = vmul.u32 %v1472, %v1463
    %v1518 = vadd.s32 %v1494, %v1513
    %vm1519 = vc.u32 %v1494, %v1513
    %v1520 = vadd.s32 %v1516, 1
    %v1521 = vsel %vm1519, %v1520, %v1516
    %v1522 = vadd.s32 %v1517, %v1521
    %v1523 = vadd.s32 %v1522, 536870912
    %v1524 = vshrl.u32 %v1523, 30
    %v1525 = vshll.u32 %v1524, 30
    %v1526 = vsub.s32 %v1522, %v1525
    %vm1527 = vcmp.lt.s32.totalorder %v1526, 0
    %v1528 = vsub.s32 0, %v1526
    %v1529 = vsel %vm1527, %v1528, %v1526
    %v1530 = vclz %v1529
    %v1531 = vsub.s32 %v1530, 2
    %vm1532 = vcmp.gt.s32.totalorder 0, %v1531
    %v1533 = vsel %vm1532, 0, %v1531
    %v1534 = vsub.s32 32, %v1533
    %v1535 = vshll.u32 %v1526, %v1533
    %v1536 = vshrl.u32 %v1518, %v1534
    %v1537 = vor.u32 %v1535, %v1536
    %v1538 = vsub.s32 4294967266, %v1533
    %v1539 = vadd.s32 %v1538, 127
    %v1540 = vshll.u32 %v1539, 23
    %v1541 = vor.u32 4788187, %v1540
    %v1542 = vand.u32 2147483647, %v1541
    %v1544 = vcvt.s32.f32 %v1537
    %v1545 = vmul.f32 %v1544, %v1542
    %v1546 = vxor.u32 %v1545, 2147483648
    %v1547 = vsel %vm1426, %v1546, %v1545
    %v1548 = vsub.s32 4, %v1524
    %v1549 = vsel %vm1426, %v1548, %v1524
    %v1550 = vsel %vm1425, %v134, %v1547
    %v1551 = vsel %vm1425, 0, %v1549
    %v1552 = vmul.f32 %v1550, %v1550
    %v1553 = vmul.f32 %v1552, -0.001358992
    %v1554 = vadd.f32 %v1553, 0.041655596
    %v1555 = vmul.f32 %v1552, %v1554
    %v1556 = vadd.f32 %v1555, -0.4999988
    %v1557 = vmul.f32 %v1552, %v1556
    %v1558 = vadd.f32 1.0, %v1557
    %v1559 = vmul.f32 %v1550, %v1550
    %v1560 = vmul.f32 %v1559, -0.00019511016
    %v1561 = vadd.f32 %v1560, 0.008332121
    %v1562 = vmul.f32 %v1559, %v1561
    %v1563 = vadd.f32 %v1562, -0.16666654
    %v1564 = vmul.f32 %v1559, %v1563
    %v1565 = vadd.f32 %v1564, 1.0
    %v1566 = vmul.f32 %v1565, %v1550
    %vm1567 = vweird.f32 %v134
    %v1568 = vadd.s32 %v1551, 3
    %v1569 = vand.u32 %v1568, 3
    %vm1570 = vcmp.lt.s32.totalorder %v1569, 2
    %vm1571 = vcmp.eq.s32.totalorder %v1569, 0
    %v1572 = vxor.u32 %v1566, 2147483648
    %v1573 = vsel %vm1571, %v1558, %v1572
    %vm1574 = vcmp.eq.s32.totalorder %v1569, 2
    %v1575 = vxor.u32 %v1558, 2147483648
    %v1576 = vsel %vm1574, %v1575, %v1566
    %v1577 = vsel %vm1570, %v1573, %v1576
    %v1578 = vsel %vm1567, nan, %v1577
    %v1579 = vand.u32 2147483647, %v137
    %vm1580 = vcmp.le.f32.partialorder %v1579, 0.7853982
    %vm1581 = vcmp.lt.s32.totalorder %v137, 0
    %v1582 = vand.u32 %v137, 2139095040
    %v1583 = vshrl.u32 %v1582, 23
    %v1584 = vsub.s32 %v1583, 127
    %v1585 = vand.u32 2147483647, %v137
    %v1586 = vand.u32 %v1585, 8388607
    %v1587 = vor.u32 %v1586, 8388608
    %v1588 = vsub.s32 0, %v1587
    %v1589 = vadd.s32 %v1584, 1
    %vm1590 = vcmp.gt.s32.totalorder %v1589, 0
    %v1591 = vsel %vm1590, %v1589, 0
    %v1592 = vshrl.u32 %v1591, 5
    %v1593 = vand.u32 %v1591, 31
    %v1594 = vsub.s32 32, %v1593
    %v1595 = vshrl.u32 683565275, %v1594
    %v1596 = vshll.u32 683565275, %v1593
    %v1597 = vshrl.u32 2475754826, %v1594
    %v1598 = vor.u32 %v1596, %v1597
    %v1599 = vshll.u32 2475754826, %v1593
    %v1600 = vshrl.u32 2131351028, %v1594
    %v1601 = vor.u32 %v1599, %v1600
    %v1602 = vshll.u32 2131351028, %v1593
    %v1603 = vshrl.u32 2102212464, %v1594
    %v1604 = vor.u32 %v1602, %v1603
    %v1605 = vshll.u32 2102212464, %v1593
    %v1606 = vshrl.u32 920167782, %v1594
    %v1607 = vor.u32 %v1605, %v1606
    %v1608 = vshll.u32 920167782, %v1593
    %v1609 = vshrl.u32 1326507024, %v1594
    %v1610 = vor.u32 %v1608, %v1609
    %vm1611 = vcmp.lt.s32.totalorder %v1592, 1
    %vm1612 = vcmp.lt.s32.totalorder %v1592, 2
    %vm1613 = vcmp.lt.s32.totalorder %v1592, 3
    %vm1614 = vcmp.lt.s32.totalorder %v1592, 4
    %v1615 = vsel %vm1611, %v1595, %v1598
    %v1616 = vsel %vm1614, %v1604, 2102212464
    %v1617 = vsel %vm1613, %v1601, %v1616
    %v1618 = vsel %vm1612, %v1615, %v1617
    %v1619 = vsel %vm1611, %v1598, %v1601
    %v1620 = vsel %vm1614, %v1607, 920167782
    %v1621 = vsel %vm1613, %v1604, %v1620
    %v1622 = vsel %vm1612, %v1619, %v1621
    %v1623 = vsel %vm1611, %v1601, %v1604
    %v1624 = vsel %vm1614, %v1610, 1326507024
    %v1625 = vsel %vm1613, %v1607, %v1624
    %v1626 = vsel %vm1612, %v1623, %v1625
    %v1627 = vshll.u32 %v1587, 8
    %v1628 = vand.u32 %v1627, 65535
    %v1629 = vshrl.u32 %v1627, 16
    %v1630 = vand.u32 %v1626, 65535
    %v1631 = vshrl.u32 %v1626, 16
    %v1632 = vmul.u32 %v1628, %v1630
    %v1633 = vmul.u32 %v1628, %v1631
    %v1634 = vmul.u32 %v1629, %v1630
    %v1635 = vmul.u32 %v1629, %v1631
    %v1636 = vshll.u32 %v1633, 16
    %v1637 = vshrl.u32 %v1633, 16
    %v1638 = vshll.u32 %v1634, 16
    %v1639 = vshrl.u32 %v1634, 16
    %vm1640 = vc.u32 %v1632, %v1636
    %v1641 = vsel %vm1640, 1, 0
    %v1642 = vadd.s32 %v1632, %v1636
    %v1643 = vadd.s32 %v1635, %v1641
    %vm1644 = vc.u32 %v1642, %v1638
    %v1645 = vsel %vm1644, 1, 0
    %v1646 = vadd.s32 %v1642, %v1638
    %v1647 = vadd.s32 %v1643, %v1645
    %v1648 = vadd.s32 %v1647, %v1637
    %v1649 = vadd.s32 %v1648, %v1639
    %v1650 = vand.u32 %v1627, 65535
    %v1651 = vshrl.u32 %v1627, 16
    %v1652 = vand.u32 %v1622, 65535
    %v1653 = vshrl.u32 %v1622, 16
    %v1654 = vmul.u32 %v1650, %v1652
    %v1655 = vmul.u32 %v1650, %v1653
    %v1656 = vmul.u32 %v1651, %v1652
    %v1657 = vmul.u32 %v1651, %v1653
    %v1658 = vshll.u32 %v1655, 16
    %v1659 = vshrl.u32 %v1655, 16
    %v1660 = vshll.u32 %v1656, 16
    %v1661 = vshrl.u32 %v1656, 16
    %vm1662 = vc.u32 %v1654, %v1658
    %v1663 = vsel %vm1662, 1, 0
    %v1664 = vadd.s32 %v1654, %v1658
    %v1665 = vadd.s32 %v1657, %v1663
    %vm1666 = vc.u32 %v1664, %v1660
    %v1667 = vsel %vm1666, 1, 0
    %v1668 = vadd.s32 %v1664, %v1660
    %v1669 = vadd.s32 %v1665, %v1667
    %v1670 = vadd.s32 %v1669, %v1659
    %v1671 = vadd.s32 %v1670, %v1661
    %v1672 = vmul.u32 %v1627, %v1618
    %v1673 = vadd.s32 %v1649, %v1668
    %vm1674 = vc.u32 %v1649, %v1668
    %v1675 = vadd.s32 %v1671, 1
    %v1676 = vsel %vm1674, %v1675, %v1671
    %v1677 = vadd.s32 %v1672, %v1676
    %v1678 = vadd.s32 %v1677, 536870912
    %v1679 = vshrl.u32 %v1678, 30
    %v1680 = vshll.u32 %v1679, 30
    %v1681 = vsub.s32 %v1677, %v1680
    %vm1682 = vcmp.lt.s32.totalorder %v1681, 0
    %v1683 = vsub.s32 0, %v1681
    %v1684 = vsel %vm1682, %v1683, %v1681
    %v1685 = vclz %v1684
    %v1686 = vsub.s32 %v1685, 2
    %vm1687 = vcmp.gt.s32.totalorder 0, %v1686
    %v1688 = vsel %vm1687, 0, %v1686
    %v1689 = vsub.s32 32, %v1688
    %v1690 = vshll.u32 %v1681, %v1688
    %v1691 = vshrl.u32 %v1673, %v1689
    %v1692 = vor.u32 %v1690, %v1691
    %v1693 = vsub.s32 4294967266, %v1688
    %v1694 = vadd.s32 %v1693, 127
    %v1695 = vshll.u32 %v1694, 23
    %v1696 = vor.u32 4788187, %v1695
    %v1697 = vand.u32 2147483647, %v1696
    %v1699 = vcvt.s32.f32 %v1692
    %v1700 = vmul.f32 %v1699, %v1697
    %v1701 = vxor.u32 %v1700, 2147483648
    %v1702 = vsel %vm1581, %v1701, %v1700
    %v1703 = vsub.s32 4, %v1679
    %v1704 = vsel %vm1581, %v1703, %v1679
    %v1705 = vsel %vm1580, %v137, %v1702
    %v1706 = vsel %vm1580, 0, %v1704
    %v1707 = vmul.f32 %v1705, %v1705
    %v1708 = vmul.f32 %v1707, -0.001358992
    %v1709 = vadd.f32 %v1708, 0.041655596
    %v1710 = vmul.f32 %v1707, %v1709
    %v1711 = vadd.f32 %v1710, -0.4999988
    %v1712 = vmul.f32 %v1707, %v1711
    %v1713 = vadd.f32 1.0, %v1712
    %v1714 = vmul.f32 %v1705, %v1705
    %v1715 = vmul.f32 %v1714, -0.00019511016
    %v1716 = vadd.f32 %v1715, 0.008332121
    %v1717 = vmul.f32 %v1714, %v1716
    %v1718 = vadd.f32 %v1717, -0.16666654
    %v1719 = vmul.f32 %v1714, %v1718
    %v1720 = vadd.f32 %v1719, 1.0
    %v1721 = vmul.f32 %v1720, %v1705
    %vm1722 = vweird.f32 %v137
    %v1723 = vadd.s32 %v1706, 3
    %v1724 = vand.u32 %v1723, 3
    %vm1725 = vcmp.lt.s32.totalorder %v1724, 2
    %vm1726 = vcmp.eq.s32.totalorder %v1724, 0
    %v1727 = vxor.u32 %v1721, 2147483648
    %v1728 = vsel %vm1726, %v1713, %v1727
    %vm1729 = vcmp.eq.s32.totalorder %v1724, 2
    %v1730 = vxor.u32 %v1713, 2147483648
    %v1731 = vsel %vm1729, %v1730, %v1721
    %v1732 = vsel %vm1725, %v1728, %v1731
    %v1733 = vsel %vm1722, nan, %v1732
    %v1734 = vand.u32 2147483647, %v140
    %vm1735 = vcmp.le.f32.partialorder %v1734, 0.7853982
    %vm1736 = vcmp.lt.s32.totalorder %v140, 0
    %v1737 = vand.u32 %v140, 2139095040
    %v1738 = vshrl.u32 %v1737, 23
    %v1739 = vsub.s32 %v1738, 127
    %v1740 = vand.u32 2147483647, %v140
    %v1741 = vand.u32 %v1740, 8388607
    %v1742 = vor.u32 %v1741, 8388608
    %v1743 = vsub.s32 0, %v1742
    %v1744 = vadd.s32 %v1739, 1
    %vm1745 = vcmp.gt.s32.totalorder %v1744, 0
    %v1746 = vsel %vm1745, %v1744, 0
    %v1747 = vshrl.u32 %v1746, 5
    %v1748 = vand.u32 %v1746, 31
    %v1749 = vsub.s32 32, %v1748
    %v1750 = vshrl.u32 683565275, %v1749
    %v1751 = vshll.u32 683565275, %v1748
    %v1752 = vshrl.u32 2475754826, %v1749
    %v1753 = vor.u32 %v1751, %v1752
    %v1754 = vshll.u32 2475754826, %v1748
    %v1755 = vshrl.u32 2131351028, %v1749
    %v1756 = vor.u32 %v1754, %v1755
    %v1757 = vshll.u32 2131351028, %v1748
    %v1758 = vshrl.u32 2102212464, %v1749
    %v1759 = vor.u32 %v1757, %v1758
    %v1760 = vshll.u32 2102212464, %v1748
    %v1761 = vshrl.u32 920167782, %v1749
    %v1762 = vor.u32 %v1760, %v1761
    %v1763 = vshll.u32 920167782, %v1748
    %v1764 = vshrl.u32 1326507024, %v1749
    %v1765 = vor.u32 %v1763, %v1764
    %vm1766 = vcmp.lt.s32.totalorder %v1747, 1
    %vm1767 = vcmp.lt.s32.totalorder %v1747, 2
    %vm1768 = vcmp.lt.s32.totalorder %v1747, 3
    %vm1769 = vcmp.lt.s32.totalorder %v1747, 4
    %v1770 = vsel %vm1766, %v1750, %v1753
    %v1771 = vsel %vm1769, %v1759, 2102212464
    %v1772 = vsel %vm1768, %v1756, %v1771
    %v1773 = vsel %vm1767, %v1770, %v1772
    %v1774 = vsel %vm1766, %v1753, %v1756
    %v1775 = vsel %vm1769, %v1762, 920167782
    %v1776 = vsel %vm1768, %v1759, %v1775
    %v1777 = vsel %vm1767, %v1774, %v1776
    %v1778 = vsel %vm1766, %v1756, %v1759
    %v1779 = vsel %vm1769, %v1765, 1326507024
    %v1780 = vsel %vm1768, %v1762, %v1779
    %v1781 = vsel %vm1767, %v1778, %v1780
    %v1782 = vshll.u32 %v1742, 8
    %v1783 = vand.u32 %v1782, 65535
    %v1784 = vshrl.u32 %v1782, 16
    %v1785 = vand.u32 %v1781, 65535
    %v1786 = vshrl.u32 %v1781, 16
    %v1787 = vmul.u32 %v1783, %v1785
    %v1788 = vmul.u32 %v1783, %v1786
    %v1789 = vmul.u32 %v1784, %v1785
    %v1790 = vmul.u32 %v1784, %v1786
    %v1791 = vshll.u32 %v1788, 16
    %v1792 = vshrl.u32 %v1788, 16
    %v1793 = vshll.u32 %v1789, 16
    %v1794 = vshrl.u32 %v1789, 16
    %vm1795 = vc.u32 %v1787, %v1791
    %v1796 = vsel %vm1795, 1, 0
    %v1797 = vadd.s32 %v1787, %v1791
    %v1798 = vadd.s32 %v1790, %v1796
    %vm1799 = vc.u32 %v1797, %v1793
    %v1800 = vsel %vm1799, 1, 0
    %v1801 = vadd.s32 %v1797, %v1793
    %v1802 = vadd.s32 %v1798, %v1800
    %v1803 = vadd.s32 %v1802, %v1792
    %v1804 = vadd.s32 %v1803, %v1794
    %v1805 = vand.u32 %v1782, 65535
    %v1806 = vshrl.u32 %v1782, 16
    %v1807 = vand.u32 %v1777, 65535
    %v1808 = vshrl.u32 %v1777, 16
    %v1809 = vmul.u32 %v1805, %v1807
    %v1810 = vmul.u32 %v1805, %v1808
    %v1811 = vmul.u32 %v1806, %v1807
    %v1812 = vmul.u32 %v1806, %v1808
    %v1813 = vshll.u32 %v1810, 16
    %v1814 = vshrl.u32 %v1810, 16
    %v1815 = vshll.u32 %v1811, 16
    %v1816 = vshrl.u32 %v1811, 16
    %vm1817 = vc.u32 %v1809, %v1813
    %v1818 = vsel %vm1817, 1, 0
    %v1819 = vadd.s32 %v1809, %v1813
    %v1820 = vadd.s32 %v1812, %v1818
    %vm1821 = vc.u32 %v1819, %v1815
    %v1822 = vsel %vm1821, 1, 0
    %v1823 = vadd.s32 %v1819, %v1815
    %v1824 = vadd.s32 %v1820, %v1822
    %v1825 = vadd.s32 %v1824, %v1814
    %v1826 = vadd.s32 %v1825, %v1816
    %v1827 = vmul.u32 %v1782, %v1773
    %v1828 = vadd.s32 %v1804, %v1823
    %vm1829 = vc.u32 %v1804, %v1823
    %v1830 = vadd.s32 %v1826, 1
    %v1831 = vsel %vm1829, %v1830, %v1826
    %v1832 = vadd.s32 %v1827, %v1831
    %v1833 = vadd.s32 %v1832, 536870912
    %v1834 = vshrl.u32 %v1833, 30
    %v1835 = vshll.u32 %v1834, 30
    %v1836 = vsub.s32 %v1832, %v1835
    %vm1837 = vcmp.lt.s32.totalorder %v1836, 0
    %v1838 = vsub.s32 0, %v1836
    %v1839 = vsel %vm1837, %v1838, %v1836
    %v1840 = vclz %v1839
    %v1841 = vsub.s32 %v1840, 2
    %vm1842 = vcmp.gt.s32.totalorder 0, %v1841
    %v1843 = vsel %vm1842, 0, %v1841
    %v1844 = vsub.s32 32, %v1843
    %v1845 = vshll.u32 %v1836, %v1843
    %v1846 = vshrl.u32 %v1828, %v1844
    %v1847 = vor.u32 %v1845, %v1846
    %v1848 = vsub.s32 4294967266, %v1843
    %v1849 = vadd.s32 %v1848, 127
    %v1850 = vshll.u32 %v1849, 23
    %v1851 = vor.u32 4788187, %v1850
    %v1852 = vand.u32 2147483647, %v1851
    %v1854 = vcvt.s32.f32 %v1847
    %v1855 = vmul.f32 %v1854, %v1852
    %v1856 = vxor.u32 %v1855, 2147483648
    %v1857 = vsel %vm1736, %v1856, %v1855
    %v1858 = vsub.s32 4, %v1834
    %v1859 = vsel %vm1736, %v1858, %v1834
    %v1860 = vsel %vm1735, %v140, %v1857
    %v1861 = vsel %vm1735, 0, %v1859
    %v1862 = vmul.f32 %v1860, %v1860
    %v1863 = vmul.f32 %v1862, -0.001358992
    %v1864 = vadd.f32 %v1863, 0.041655596
    %v1865 = vmul.f32 %v1862, %v1864
    %v1866 = vadd.f32 %v1865, -0.4999988
    %v1867 = vmul.f32 %v1862, %v1866
    %v1868 = vadd.f32 1.0, %v1867
    %v1869 = vmul.f32 %v1860, %v1860
    %v1870 = vmul.f32 %v1869, -0.00019511016
    %v1871 = vadd.f32 %v1870, 0.008332121
    %v1872 = vmul.f32 %v1869, %v1871
    %v1873 = vadd.f32 %v1872, -0.16666654
    %v1874 = vmul.f32 %v1869, %v1873
    %v1875 = vadd.f32 %v1874, 1.0
    %v1876 = vmul.f32 %v1875, %v1860
    %vm1877 = vweird.f32 %v140
    %v1878 = vadd.s32 %v1861, 3
    %v1879 = vand.u32 %v1878, 3
    %vm1880 = vcmp.lt.s32.totalorder %v1879, 2
    %vm1881 = vcmp.eq.s32.totalorder %v1879, 0
    %v1882 = vxor.u32 %v1876, 2147483648
    %v1883 = vsel %vm1881, %v1868, %v1882
    %vm1884 = vcmp.eq.s32.totalorder %v1879, 2
    %v1885 = vxor.u32 %v1868, 2147483648
    %v1886 = vsel %vm1884, %v1885, %v1876
    %v1887 = vsel %vm1880, %v1883, %v1886
    %v1888 = vsel %vm1877, nan, %v1887
    %v1889 = vand.u32 2147483647, %v143
    %vm1890 = vcmp.le.f32.partialorder %v1889, 0.7853982
    %vm1891 = vcmp.lt.s32.totalorder %v143, 0
    %v1892 = vand.u32 %v143, 2139095040
    %v1893 = vshrl.u32 %v1892, 23
    %v1894 = vsub.s32 %v1893, 127
    %v1895 = vand.u32 2147483647, %v143
    %v1896 = vand.u32 %v1895, 8388607
    %v1897 = vor.u32 %v1896, 8388608
    %v1898 = vsub.s32 0, %v1897
    %v1899 = vadd.s32 %v1894, 1
    %vm1900 = vcmp.gt.s32.totalorder %v1899, 0
    %v1901 = vsel %vm1900, %v1899, 0
    %v1902 = vshrl.u32 %v1901, 5
    %v1903 = vand.u32 %v1901, 31
    %v1904 = vsub.s32 32, %v1903
    %v1905 = vshrl.u32 683565275, %v1904
    %v1906 = vshll.u32 683565275, %v1903
    %v1907 = vshrl.u32 2475754826, %v1904
    %v1908 = vor.u32 %v1906, %v1907
    %v1909 = vshll.u32 2475754826, %v1903
    %v1910 = vshrl.u32 2131351028, %v1904
    %v1911 = vor.u32 %v1909, %v1910
    %v1912 = vshll.u32 2131351028, %v1903
    %v1913 = vshrl.u32 2102212464, %v1904
    %v1914 = vor.u32 %v1912, %v1913
    %v1915 = vshll.u32 2102212464, %v1903
    %v1916 = vshrl.u32 920167782, %v1904
    %v1917 = vor.u32 %v1915, %v1916
    %v1918 = vshll.u32 920167782, %v1903
    %v1919 = vshrl.u32 1326507024, %v1904
    %v1920 = vor.u32 %v1918, %v1919
    %vm1921 = vcmp.lt.s32.totalorder %v1902, 1
    %vm1922 = vcmp.lt.s32.totalorder %v1902, 2
    %vm1923 = vcmp.lt.s32.totalorder %v1902, 3
    %vm1924 = vcmp.lt.s32.totalorder %v1902, 4
    %v1925 = vsel %vm1921, %v1905, %v1908
    %v1926 = vsel %vm1924, %v1914, 2102212464
    %v1927 = vsel %vm1923, %v1911, %v1926
    %v1928 = vsel %vm1922, %v1925, %v1927
    %v1929 = vsel %vm1921, %v1908, %v1911
    %v1930 = vsel %vm1924, %v1917, 920167782
    %v1931 = vsel %vm1923, %v1914, %v1930
    %v1932 = vsel %vm1922, %v1929, %v1931
    %v1933 = vsel %vm1921, %v1911, %v1914
    %v1934 = vsel %vm1924, %v1920, 1326507024
    %v1935 = vsel %vm1923, %v1917, %v1934
    %v1936 = vsel %vm1922, %v1933, %v1935
    %v1937 = vshll.u32 %v1897, 8
    %v1938 = vand.u32 %v1937, 65535
    %v1939 = vshrl.u32 %v1937, 16
    %v1940 = vand.u32 %v1936, 65535
    %v1941 = vshrl.u32 %v1936, 16
    %v1942 = vmul.u32 %v1938, %v1940
    %v1943 = vmul.u32 %v1938, %v1941
    %v1944 = vmul.u32 %v1939, %v1940
    %v1945 = vmul.u32 %v1939, %v1941
    %v1946 = vshll.u32 %v1943, 16
    %v1947 = vshrl.u32 %v1943, 16
    %v1948 = vshll.u32 %v1944, 16
    %v1949 = vshrl.u32 %v1944, 16
    %vm1950 = vc.u32 %v1942, %v1946
    %v1951 = vsel %vm1950, 1, 0
    %v1952 = vadd.s32 %v1942, %v1946
    %v1953 = vadd.s32 %v1945, %v1951
    %vm1954 = vc.u32 %v1952, %v1948
    %v1955 = vsel %vm1954, 1, 0
    %v1956 = vadd.s32 %v1952, %v1948
    %v1957 = vadd.s32 %v1953, %v1955
    %v1958 = vadd.s32 %v1957, %v1947
    %v1959 = vadd.s32 %v1958, %v1949
    %v1960 = vand.u32 %v1937, 65535
    %v1961 = vshrl.u32 %v1937, 16
    %v1962 = vand.u32 %v1932, 65535
    %v1963 = vshrl.u32 %v1932, 16
    %v1964 = vmul.u32 %v1960, %v1962
    %v1965 = vmul.u32 %v1960, %v1963
    %v1966 = vmul.u32 %v1961, %v1962
    %v1967 = vmul.u32 %v1961, %v1963
    %v1968 = vshll.u32 %v1965, 16
    %v1969 = vshrl.u32 %v1965, 16
    %v1970 = vshll.u32 %v1966, 16
    %v1971 = vshrl.u32 %v1966, 16
    %vm1972 = vc.u32 %v1964, %v1968
    %v1973 = vsel %vm1972, 1, 0
    %v1974 = vadd.s32 %v1964, %v1968
    %v1975 = vadd.s32 %v1967, %v1973
    %vm1976 = vc.u32 %v1974, %v1970
    %v1977 = vsel %vm1976, 1, 0
    %v1978 = vadd.s32 %v1974, %v1970
    %v1979 = vadd.s32 %v1975, %v1977
    %v1980 = vadd.s32 %v1979, %v1969
    %v1981 = vadd.s32 %v1980, %v1971
    %v1982 = vmul.u32 %v1937, %v1928
    %v1983 = vadd.s32 %v1959, %v1978
    %vm1984 = vc.u32 %v1959, %v1978
    %v1985 = vadd.s32 %v1981, 1
    %v1986 = vsel %vm1984, %v1985, %v1981
    %v1987 = vadd.s32 %v1982, %v1986
    %v1988 = vadd.s32 %v1987, 536870912
    %v1989 = vshrl.u32 %v1988, 30
    %v1990 = vshll.u32 %v1989, 30
    %v1991 = vsub.s32 %v1987, %v1990
    %vm1992 = vcmp.lt.s32.totalorder %v1991, 0
    %v1993 = vsub.s32 0, %v1991
    %v1994 = vsel %vm1992, %v1993, %v1991
    %v1995 = vclz %v1994
    %v1996 = vsub.s32 %v1995, 2
    %vm1997 = vcmp.gt.s32.totalorder 0, %v1996
    %v1998 = vsel %vm1997, 0, %v1996
    %v1999 = vsub.s32 32, %v1998
    %v2000 = vshll.u32 %v1991, %v1998
    %v2001 = vshrl.u32 %v1983, %v1999
    %v2002 = vor.u32 %v2000, %v2001
    %v2003 = vsub.s32 4294967266, %v1998
    %v2004 = vadd.s32 %v2003, 127
    %v2005 = vshll.u32 %v2004, 23
    %v2006 = vor.u32 4788187, %v2005
    %v2007 = vand.u32 2147483647, %v2006
    %v2009 = vcvt.s32.f32 %v2002
    %v2010 = vmul.f32 %v2009, %v2007
    %v2011 = vxor.u32 %v2010, 2147483648
    %v2012 = vsel %vm1891, %v2011, %v2010
    %v2013 = vsub.s32 4, %v1989
    %v2014 = vsel %vm1891, %v2013, %v1989
    %v2015 = vsel %vm1890, %v143, %v2012
    %v2016 = vsel %vm1890, 0, %v2014
    %v2017 = vmul.f32 %v2015, %v2015
    %v2018 = vmul.f32 %v2017, -0.001358992
    %v2019 = vadd.f32 %v2018, 0.041655596
    %v2020 = vmul.f32 %v2017, %v2019
    %v2021 = vadd.f32 %v2020, -0.4999988
    %v2022 = vmul.f32 %v2017, %v2021
    %v2023 = vadd.f32 1.0, %v2022
    %v2024 = vmul.f32 %v2015, %v2015
    %v2025 = vmul.f32 %v2024, -0.00019511016
    %v2026 = vadd.f32 %v2025, 0.008332121
    %v2027 = vmul.f32 %v2024, %v2026
    %v2028 = vadd.f32 %v2027, -0.16666654
    %v2029 = vmul.f32 %v2024, %v2028
    %v2030 = vadd.f32 %v2029, 1.0
    %v2031 = vmul.f32 %v2030, %v2015
    %vm2032 = vweird.f32 %v143
    %v2033 = vadd.s32 %v2016, 3
    %v2034 = vand.u32 %v2033, 3
    %vm2035 = vcmp.lt.s32.totalorder %v2034, 2
    %vm2036 = vcmp.eq.s32.totalorder %v2034, 0
    %v2037 = vxor.u32 %v2031, 2147483648
    %v2038 = vsel %vm2036, %v2023, %v2037
    %vm2039 = vcmp.eq.s32.totalorder %v2034, 2
    %v2040 = vxor.u32 %v2023, 2147483648
    %v2041 = vsel %vm2039, %v2040, %v2031
    %v2042 = vsel %vm2035, %v2038, %v2041
    %v2043 = vsel %vm2032, nan, %v2042
    %v2044 = vand.u32 2147483647, %v146
    %vm2045 = vcmp.le.f32.partialorder %v2044, 0.7853982
    %vm2046 = vcmp.lt.s32.totalorder %v146, 0
    %v2047 = vand.u32 %v146, 2139095040
    %v2048 = vshrl.u32 %v2047, 23
    %v2049 = vsub.s32 %v2048, 127
    %v2050 = vand.u32 2147483647, %v146
    %v2051 = vand.u32 %v2050, 8388607
    %v2052 = vor.u32 %v2051, 8388608
    %v2053 = vsub.s32 0, %v2052
    %v2054 = vadd.s32 %v2049, 1
    %vm2055 = vcmp.gt.s32.totalorder %v2054, 0
    %v2056 = vsel %vm2055, %v2054, 0
    %v2057 = vshrl.u32 %v2056, 5
    %v2058 = vand.u32 %v2056, 31
    %v2059 = vsub.s32 32, %v2058
    %v2060 = vshrl.u32 683565275, %v2059
    %v2061 = vshll.u32 683565275, %v2058
    %v2062 = vshrl.u32 2475754826, %v2059
    %v2063 = vor.u32 %v2061, %v2062
    %v2064 = vshll.u32 2475754826, %v2058
    %v2065 = vshrl.u32 2131351028, %v2059
    %v2066 = vor.u32 %v2064, %v2065
    %v2067 = vshll.u32 2131351028, %v2058
    %v2068 = vshrl.u32 2102212464, %v2059
    %v2069 = vor.u32 %v2067, %v2068
    %v2070 = vshll.u32 2102212464, %v2058
    %v2071 = vshrl.u32 920167782, %v2059
    %v2072 = vor.u32 %v2070, %v2071
    %v2073 = vshll.u32 920167782, %v2058
    %v2074 = vshrl.u32 1326507024, %v2059
    %v2075 = vor.u32 %v2073, %v2074
    %vm2076 = vcmp.lt.s32.totalorder %v2057, 1
    %vm2077 = vcmp.lt.s32.totalorder %v2057, 2
    %vm2078 = vcmp.lt.s32.totalorder %v2057, 3
    %vm2079 = vcmp.lt.s32.totalorder %v2057, 4
    %v2080 = vsel %vm2076, %v2060, %v2063
    %v2081 = vsel %vm2079, %v2069, 2102212464
    %v2082 = vsel %vm2078, %v2066, %v2081
    %v2083 = vsel %vm2077, %v2080, %v2082
    %v2084 = vsel %vm2076, %v2063, %v2066
    %v2085 = vsel %vm2079, %v2072, 920167782
    %v2086 = vsel %vm2078, %v2069, %v2085
    %v2087 = vsel %vm2077, %v2084, %v2086
    %v2088 = vsel %vm2076, %v2066, %v2069
    %v2089 = vsel %vm2079, %v2075, 1326507024
    %v2090 = vsel %vm2078, %v2072, %v2089
    %v2091 = vsel %vm2077, %v2088, %v2090
    %v2092 = vshll.u32 %v2052, 8
    %v2093 = vand.u32 %v2092, 65535
    %v2094 = vshrl.u32 %v2092, 16
    %v2095 = vand.u32 %v2091, 65535
    %v2096 = vshrl.u32 %v2091, 16
    %v2097 = vmul.u32 %v2093, %v2095
    %v2098 = vmul.u32 %v2093, %v2096
    %v2099 = vmul.u32 %v2094, %v2095
    %v2100 = vmul.u32 %v2094, %v2096
    %v2101 = vshll.u32 %v2098, 16
    %v2102 = vshrl.u32 %v2098, 16
    %v2103 = vshll.u32 %v2099, 16
    %v2104 = vshrl.u32 %v2099, 16
    %vm2105 = vc.u32 %v2097, %v2101
    %v2106 = vsel %vm2105, 1, 0
    %v2107 = vadd.s32 %v2097, %v2101
    %v2108 = vadd.s32 %v2100, %v2106
    %vm2109 = vc.u32 %v2107, %v2103
    %v2110 = vsel %vm2109, 1, 0
    %v2111 = vadd.s32 %v2107, %v2103
    %v2112 = vadd.s32 %v2108, %v2110
    %v2113 = vadd.s32 %v2112, %v2102
    %v2114 = vadd.s32 %v2113, %v2104
    %v2115 = vand.u32 %v2092, 65535
    %v2116 = vshrl.u32 %v2092, 16
    %v2117 = vand.u32 %v2087, 65535
    %v2118 = vshrl.u32 %v2087, 16
    %v2119 = vmul.u32 %v2115, %v2117
    %v2120 = vmul.u32 %v2115, %v2118
    %v2121 = vmul.u32 %v2116, %v2117
    %v2122 = vmul.u32 %v2116, %v2118
    %v2123 = vshll.u32 %v2120, 16
    %v2124 = vshrl.u32 %v2120, 16
    %v2125 = vshll.u32 %v2121, 16
    %v2126 = vshrl.u32 %v2121, 16
    %vm2127 = vc.u32 %v2119, %v2123
    %v2128 = vsel %vm2127, 1, 0
    %v2129 = vadd.s32 %v2119, %v2123
    %v2130 = vadd.s32 %v2122, %v2128
    %vm2131 = vc.u32 %v2129, %v2125
    %v2132 = vsel %vm2131, 1, 0
    %v2133 = vadd.s32 %v2129, %v2125
    %v2134 = vadd.s32 %v2130, %v2132
    %v2135 = vadd.s32 %v2134, %v2124
    %v2136 = vadd.s32 %v2135, %v2126
    %v2137 = vmul.u32 %v2092, %v2083
    %v2138 = vadd.s32 %v2114, %v2133
    %vm2139 = vc.u32 %v2114, %v2133
    %v2140 = vadd.s32 %v2136, 1
    %v2141 = vsel %vm2139, %v2140, %v2136
    %v2142 = vadd.s32 %v2137, %v2141
    %v2143 = vadd.s32 %v2142, 536870912
    %v2144 = vshrl.u32 %v2143, 30
    %v2145 = vshll.u32 %v2144, 30
    %v2146 = vsub.s32 %v2142, %v2145
    %vm2147 = vcmp.lt.s32.totalorder %v2146, 0
    %v2148 = vsub.s32 0, %v2146
    %v2149 = vsel %vm2147, %v2148, %v2146
    %v2150 = vclz %v2149
    %v2151 = vsub.s32 %v2150, 2
    %vm2152 = vcmp.gt.s32.totalorder 0, %v2151
    %v2153 = vsel %vm2152, 0, %v2151
    %v2154 = vsub.s32 32, %v2153
    %v2155 = vshll.u32 %v2146, %v2153
    %v2156 = vshrl.u32 %v2138, %v2154
    %v2157 = vor.u32 %v2155, %v2156
    %v2158 = vsub.s32 4294967266, %v2153
    %v2159 = vadd.s32 %v2158, 127
    %v2160 = vshll.u32 %v2159, 23
    %v2161 = vor.u32 4788187, %v2160
    %v2162 = vand.u32 2147483647, %v2161
    %v2164 = vcvt.s32.f32 %v2157
    %v2165 = vmul.f32 %v2164, %v2162
    %v2166 = vxor.u32 %v2165, 2147483648
    %v2167 = vsel %vm2046, %v2166, %v2165
    %v2168 = vsub.s32 4, %v2144
    %v2169 = vsel %vm2046, %v2168, %v2144
    %v2170 = vsel %vm2045, %v146, %v2167
    %v2171 = vsel %vm2045, 0, %v2169
    %v2172 = vmul.f32 %v2170, %v2170
    %v2173 = vmul.f32 %v2172, -0.001358992
    %v2174 = vadd.f32 %v2173, 0.041655596
    %v2175 = vmul.f32 %v2172, %v2174
    %v2176 = vadd.f32 %v2175, -0.4999988
    %v2177 = vmul.f32 %v2172, %v2176
    %v2178 = vadd.f32 1.0, %v2177
    %v2179 = vmul.f32 %v2170, %v2170
    %v2180 = vmul.f32 %v2179, -0.00019511016
    %v2181 = vadd.f32 %v2180, 0.008332121
    %v2182 = vmul.f32 %v2179, %v2181
    %v2183 = vadd.f32 %v2182, -0.16666654
    %v2184 = vmul.f32 %v2179, %v2183
    %v2185 = vadd.f32 %v2184, 1.0
    %v2186 = vmul.f32 %v2185, %v2170
    %vm2187 = vweird.f32 %v146
    %v2188 = vadd.s32 %v2171, 3
    %v2189 = vand.u32 %v2188, 3
    %vm2190 = vcmp.lt.s32.totalorder %v2189, 2
    %vm2191 = vcmp.eq.s32.totalorder %v2189, 0
    %v2192 = vxor.u32 %v2186, 2147483648
    %v2193 = vsel %vm2191, %v2178, %v2192
    %vm2194 = vcmp.eq.s32.totalorder %v2189, 2
    %v2195 = vxor.u32 %v2178, 2147483648
    %v2196 = vsel %vm2194, %v2195, %v2186
    %v2197 = vsel %vm2190, %v2193, %v2196
    %v2198 = vsel %vm2187, nan, %v2197
    %v2199 = vand.u32 2147483647, %v149
    %vm2200 = vcmp.le.f32.partialorder %v2199, 0.7853982
    %vm2201 = vcmp.lt.s32.totalorder %v149, 0
    %v2202 = vand.u32 %v149, 2139095040
    %v2203 = vshrl.u32 %v2202, 23
    %v2204 = vsub.s32 %v2203, 127
    %v2205 = vand.u32 2147483647, %v149
    %v2206 = vand.u32 %v2205, 8388607
    %v2207 = vor.u32 %v2206, 8388608
    %v2208 = vsub.s32 0, %v2207
    %v2209 = vadd.s32 %v2204, 1
    %vm2210 = vcmp.gt.s32.totalorder %v2209, 0
    %v2211 = vsel %vm2210, %v2209, 0
    %v2212 = vshrl.u32 %v2211, 5
    %v2213 = vand.u32 %v2211, 31
    %v2214 = vsub.s32 32, %v2213
    %v2215 = vshrl.u32 683565275, %v2214
    %v2216 = vshll.u32 683565275, %v2213
    %v2217 = vshrl.u32 2475754826, %v2214
    %v2218 = vor.u32 %v2216, %v2217
    %v2219 = vshll.u32 2475754826, %v2213
    %v2220 = vshrl.u32 2131351028, %v2214
    %v2221 = vor.u32 %v2219, %v2220
    %v2222 = vshll.u32 2131351028, %v2213
    %v2223 = vshrl.u32 2102212464, %v2214
    %v2224 = vor.u32 %v2222, %v2223
    %v2225 = vshll.u32 2102212464, %v2213
    %v2226 = vshrl.u32 920167782, %v2214
    %v2227 = vor.u32 %v2225, %v2226
    %v2228 = vshll.u32 920167782, %v2213
    %v2229 = vshrl.u32 1326507024, %v2214
    %v2230 = vor.u32 %v2228, %v2229
    %vm2231 = vcmp.lt.s32.totalorder %v2212, 1
    %vm2232 = vcmp.lt.s32.totalorder %v2212, 2
    %vm2233 = vcmp.lt.s32.totalorder %v2212, 3
    %vm2234 = vcmp.lt.s32.totalorder %v2212, 4
    %v2235 = vsel %vm2231, %v2215, %v2218
    %v2236 = vsel %vm2234, %v2224, 2102212464
    %v2237 = vsel %vm2233, %v2221, %v2236
    %v2238 = vsel %vm2232, %v2235, %v2237
    %v2239 = vsel %vm2231, %v2218, %v2221
    %v2240 = vsel %vm2234, %v2227, 920167782
    %v2241 = vsel %vm2233, %v2224, %v2240
    %v2242 = vsel %vm2232, %v2239, %v2241
    %v2243 = vsel %vm2231, %v2221, %v2224
    %v2244 = vsel %vm2234, %v2230, 1326507024
    %v2245 = vsel %vm2233, %v2227, %v2244
    %v2246 = vsel %vm2232, %v2243, %v2245
    %v2247 = vshll.u32 %v2207, 8
    %v2248 = vand.u32 %v2247, 65535
    %v2249 = vshrl.u32 %v2247, 16
    %v2250 = vand.u32 %v2246, 65535
    %v2251 = vshrl.u32 %v2246, 16
    %v2252 = vmul.u32 %v2248, %v2250
    %v2253 = vmul.u32 %v2248, %v2251
    %v2254 = vmul.u32 %v2249, %v2250
    %v2255 = vmul.u32 %v2249, %v2251
    %v2256 = vshll.u32 %v2253, 16
    %v2257 = vshrl.u32 %v2253, 16
    %v2258 = vshll.u32 %v2254, 16
    %v2259 = vshrl.u32 %v2254, 16
    %vm2260 = vc.u32 %v2252, %v2256
    %v2261 = vsel %vm2260, 1, 0
    %v2262 = vadd.s32 %v2252, %v2256
    %v2263 = vadd.s32 %v2255, %v2261
    %vm2264 = vc.u32 %v2262, %v2258
    %v2265 = vsel %vm2264, 1, 0
    %v2266 = vadd.s32 %v2262, %v2258
    %v2267 = vadd.s32 %v2263, %v2265
    %v2268 = vadd.s32 %v2267, %v2257
    %v2269 = vadd.s32 %v2268, %v2259
    %v2270 = vand.u32 %v2247, 65535
    %v2271 = vshrl.u32 %v2247, 16
    %v2272 = vand.u32 %v2242, 65535
    %v2273 = vshrl.u32 %v2242, 16
    %v2274 = vmul.u32 %v2270, %v2272
    %v2275 = vmul.u32 %v2270, %v2273
    %v2276 = vmul.u32 %v2271, %v2272
    %v2277 = vmul.u32 %v2271, %v2273
    %v2278 = vshll.u32 %v2275, 16
    %v2279 = vshrl.u32 %v2275, 16
    %v2280 = vshll.u32 %v2276, 16
    %v2281 = vshrl.u32 %v2276, 16
    %vm2282 = vc.u32 %v2274, %v2278
    %v2283 = vsel %vm2282, 1, 0
    %v2284 = vadd.s32 %v2274, %v2278
    %v2285 = vadd.s32 %v2277, %v2283
    %vm2286 = vc.u32 %v2284, %v2280
    %v2287 = vsel %vm2286, 1, 0
    %v2288 = vadd.s32 %v2284, %v2280
    %v2289 = vadd.s32 %v2285, %v2287
    %v2290 = vadd.s32 %v2289, %v2279
    %v2291 = vadd.s32 %v2290, %v2281
    %v2292 = vmul.u32 %v2247, %v2238
    %v2293 = vadd.s32 %v2269, %v2288
    %vm2294 = vc.u32 %v2269, %v2288
    %v2295 = vadd.s32 %v2291, 1
    %v2296 = vsel %vm2294, %v2295, %v2291
    %v2297 = vadd.s32 %v2292, %v2296
    %v2298 = vadd.s32 %v2297, 536870912
    %v2299 = vshrl.u32 %v2298, 30
    %v2300 = vshll.u32 %v2299, 30
    %v2301 = vsub.s32 %v2297, %v2300
    %vm2302 = vcmp.lt.s32.totalorder %v2301, 0
    %v2303 = vsub.s32 0, %v2301
    %v2304 = vsel %vm2302, %v2303, %v2301
    %v2305 = vclz %v2304
    %v2306 = vsub.s32 %v2305, 2
    %vm2307 = vcmp.gt.s32.totalorder 0, %v2306
    %v2308 = vsel %vm2307, 0, %v2306
    %v2309 = vsub.s32 32, %v2308
    %v2310 = vshll.u32 %v2301, %v2308
    %v2311 = vshrl.u32 %v2293, %v2309
    %v2312 = vor.u32 %v2310, %v2311
    %v2313 = vsub.s32 4294967266, %v2308
    %v2314 = vadd.s32 %v2313, 127
    %v2315 = vshll.u32 %v2314, 23
    %v2316 = vor.u32 4788187, %v2315
    %v2317 = vand.u32 2147483647, %v2316
    %v2319 = vcvt.s32.f32 %v2312
    %v2320 = vmul.f32 %v2319, %v2317
    %v2321 = vxor.u32 %v2320, 2147483648
    %v2322 = vsel %vm2201, %v2321, %v2320
    %v2323 = vsub.s32 4, %v2299
    %v2324 = vsel %vm2201, %v2323, %v2299
    %v2325 = vsel %vm2200, %v149, %v2322
    %v2326 = vsel %vm2200, 0, %v2324
    %v2327 = vmul.f32 %v2325, %v2325
    %v2328 = vmul.f32 %v2327, -0.001358992
    %v2329 = vadd.f32 %v2328, 0.041655596
    %v2330 = vmul.f32 %v2327, %v2329
    %v2331 = vadd.f32 %v2330, -0.4999988
    %v2332 = vmul.f32 %v2327, %v2331
    %v2333 = vadd.f32 1.0, %v2332
    %v2334 = vmul.f32 %v2325, %v2325
    %v2335 = vmul.f32 %v2334, -0.00019511016
    %v2336 = vadd.f32 %v2335, 0.008332121
    %v2337 = vmul.f32 %v2334, %v2336
    %v2338 = vadd.f32 %v2337, -0.16666654
    %v2339 = vmul.f32 %v2334, %v2338
    %v2340 = vadd.f32 %v2339, 1.0
    %v2341 = vmul.f32 %v2340, %v2325
    %vm2342 = vweird.f32 %v149
    %v2343 = vadd.s32 %v2326, 3
    %v2344 = vand.u32 %v2343, 3
    %vm2345 = vcmp.lt.s32.totalorder %v2344, 2
    %vm2346 = vcmp.eq.s32.totalorder %v2344, 0
    %v2347 = vxor.u32 %v2341, 2147483648
    %v2348 = vsel %vm2346, %v2333, %v2347
    %vm2349 = vcmp.eq.s32.totalorder %v2344, 2
    %v2350 = vxor.u32 %v2333, 2147483648
    %v2351 = vsel %vm2349, %v2350, %v2341
    %v2352 = vsel %vm2345, %v2348, %v2351
    %v2353 = vsel %vm2342, nan, %v2352
    %v2354 = vand.u32 2147483647, %v152
    %vm2355 = vcmp.le.f32.partialorder %v2354, 0.7853982
    %vm2356 = vcmp.lt.s32.totalorder %v152, 0
    %v2357 = vand.u32 %v152, 2139095040
    %v2358 = vshrl.u32 %v2357, 23
    %v2359 = vsub.s32 %v2358, 127
    %v2360 = vand.u32 2147483647, %v152
    %v2361 = vand.u32 %v2360, 8388607
    %v2362 = vor.u32 %v2361, 8388608
    %v2363 = vsub.s32 0, %v2362
    %v2364 = vadd.s32 %v2359, 1
    %vm2365 = vcmp.gt.s32.totalorder %v2364, 0
    %v2366 = vsel %vm2365, %v2364, 0
    %v2367 = vshrl.u32 %v2366, 5
    %v2368 = vand.u32 %v2366, 31
    %v2369 = vsub.s32 32, %v2368
    %v2370 = vshrl.u32 683565275, %v2369
    %v2371 = vshll.u32 683565275, %v2368
    %v2372 = vshrl.u32 2475754826, %v2369
    %v2373 = vor.u32 %v2371, %v2372
    %v2374 = vshll.u32 2475754826, %v2368
    %v2375 = vshrl.u32 2131351028, %v2369
    %v2376 = vor.u32 %v2374, %v2375
    %v2377 = vshll.u32 2131351028, %v2368
    %v2378 = vshrl.u32 2102212464, %v2369
    %v2379 = vor.u32 %v2377, %v2378
    %v2380 = vshll.u32 2102212464, %v2368
    %v2381 = vshrl.u32 920167782, %v2369
    %v2382 = vor.u32 %v2380, %v2381
    %v2383 = vshll.u32 920167782, %v2368
    %v2384 = vshrl.u32 1326507024, %v2369
    %v2385 = vor.u32 %v2383, %v2384
    %vm2386 = vcmp.lt.s32.totalorder %v2367, 1
    %vm2387 = vcmp.lt.s32.totalorder %v2367, 2
    %vm2388 = vcmp.lt.s32.totalorder %v2367, 3
    %vm2389 = vcmp.lt.s32.totalorder %v2367, 4
    %v2390 = vsel %vm2386, %v2370, %v2373
    %v2391 = vsel %vm2389, %v2379, 2102212464
    %v2392 = vsel %vm2388, %v2376, %v2391
    %v2393 = vsel %vm2387, %v2390, %v2392
    %v2394 = vsel %vm2386, %v2373, %v2376
    %v2395 = vsel %vm2389, %v2382, 920167782
    %v2396 = vsel %vm2388, %v2379, %v2395
    %v2397 = vsel %vm2387, %v2394, %v2396
    %v2398 = vsel %vm2386, %v2376, %v2379
    %v2399 = vsel %vm2389, %v2385, 1326507024
    %v2400 = vsel %vm2388, %v2382, %v2399
    %v2401 = vsel %vm2387, %v2398, %v2400
    %v2402 = vshll.u32 %v2362, 8
    %v2403 = vand.u32 %v2402, 65535
    %v2404 = vshrl.u32 %v2402, 16
    %v2405 = vand.u32 %v2401, 65535
    %v2406 = vshrl.u32 %v2401, 16
    %v2407 = vmul.u32 %v2403, %v2405
    %v2408 = vmul.u32 %v2403, %v2406
    %v2409 = vmul.u32 %v2404, %v2405
    %v2410 = vmul.u32 %v2404, %v2406
    %v2411 = vshll.u32 %v2408, 16
    %v2412 = vshrl.u32 %v2408, 16
    %v2413 = vshll.u32 %v2409, 16
    %v2414 = vshrl.u32 %v2409, 16
    %vm2415 = vc.u32 %v2407, %v2411
    %v2416 = vsel %vm2415, 1, 0
    %v2417 = vadd.s32 %v2407, %v2411
    %v2418 = vadd.s32 %v2410, %v2416
    %vm2419 = vc.u32 %v2417, %v2413
    %v2420 = vsel %vm2419, 1, 0
    %v2421 = vadd.s32 %v2417, %v2413
    %v2422 = vadd.s32 %v2418, %v2420
    %v2423 = vadd.s32 %v2422, %v2412
    %v2424 = vadd.s32 %v2423, %v2414
    %v2425 = vand.u32 %v2402, 65535
    %v2426 = vshrl.u32 %v2402, 16
    %v2427 = vand.u32 %v2397, 65535
    %v2428 = vshrl.u32 %v2397, 16
    %v2429 = vmul.u32 %v2425, %v2427
    %v2430 = vmul.u32 %v2425, %v2428
    %v2431 = vmul.u32 %v2426, %v2427
    %v2432 = vmul.u32 %v2426, %v2428
    %v2433 = vshll.u32 %v2430, 16
    %v2434 = vshrl.u32 %v2430, 16
    %v2435 = vshll.u32 %v2431, 16
    %v2436 = vshrl.u32 %v2431, 16
    %vm2437 = vc.u32 %v2429, %v2433
    %v2438 = vsel %vm2437, 1, 0
    %v2439 = vadd.s32 %v2429, %v2433
    %v2440 = vadd.s32 %v2432, %v2438
    %vm2441 = vc.u32 %v2439, %v2435
    %v2442 = vsel %vm2441, 1, 0
    %v2443 = vadd.s32 %v2439, %v2435
    %v2444 = vadd.s32 %v2440, %v2442
    %v2445 = vadd.s32 %v2444, %v2434
    %v2446 = vadd.s32 %v2445, %v2436
    %v2447 = vmul.u32 %v2402, %v2393
    %v2448 = vadd.s32 %v2424, %v2443
    %vm2449 = vc.u32 %v2424, %v2443
    %v2450 = vadd.s32 %v2446, 1
    %v2451 = vsel %vm2449, %v2450, %v2446
    %v2452 = vadd.s32 %v2447, %v2451
    %v2453 = vadd.s32 %v2452, 536870912
    %v2454 = vshrl.u32 %v2453, 30
    %v2455 = vshll.u32 %v2454, 30
    %v2456 = vsub.s32 %v2452, %v2455
    %vm2457 = vcmp.lt.s32.totalorder %v2456, 0
    %v2458 = vsub.s32 0, %v2456
    %v2459 = vsel %vm2457, %v2458, %v2456
    %v2460 = vclz %v2459
    %v2461 = vsub.s32 %v2460, 2
    %vm2462 = vcmp.gt.s32.totalorder 0, %v2461
    %v2463 = vsel %vm2462, 0, %v2461
    %v2464 = vsub.s32 32, %v2463
    %v2465 = vshll.u32 %v2456, %v2463
    %v2466 = vshrl.u32 %v2448, %v2464
    %v2467 = vor.u32 %v2465, %v2466
    %v2468 = vsub.s32 4294967266, %v2463
    %v2469 = vadd.s32 %v2468, 127
    %v2470 = vshll.u32 %v2469, 23
    %v2471 = vor.u32 4788187, %v2470
    %v2472 = vand.u32 2147483647, %v2471
    %v2474 = vcvt.s32.f32 %v2467
    %v2475 = vmul.f32 %v2474, %v2472
    %v2476 = vxor.u32 %v2475, 2147483648
    %v2477 = vsel %vm2356, %v2476, %v2475
    %v2478 = vsub.s32 4, %v2454
    %v2479 = vsel %vm2356, %v2478, %v2454
    %v2480 = vsel %vm2355, %v152, %v2477
    %v2481 = vsel %vm2355, 0, %v2479
    %v2482 = vmul.f32 %v2480, %v2480
    %v2483 = vmul.f32 %v2482, -0.001358992
    %v2484 = vadd.f32 %v2483, 0.041655596
    %v2485 = vmul.f32 %v2482, %v2484
    %v2486 = vadd.f32 %v2485, -0.4999988
    %v2487 = vmul.f32 %v2482, %v2486
    %v2488 = vadd.f32 1.0, %v2487
    %v2489 = vmul.f32 %v2480, %v2480
    %v2490 = vmul.f32 %v2489, -0.00019511016
    %v2491 = vadd.f32 %v2490, 0.008332121
    %v2492 = vmul.f32 %v2489, %v2491
    %v2493 = vadd.f32 %v2492, -0.16666654
    %v2494 = vmul.f32 %v2489, %v2493
    %v2495 = vadd.f32 %v2494, 1.0
    %v2496 = vmul.f32 %v2495, %v2480
    %vm2497 = vweird.f32 %v152
    %v2498 = vadd.s32 %v2481, 3
    %v2499 = vand.u32 %v2498, 3
    %vm2500 = vcmp.lt.s32.totalorder %v2499, 2
    %vm2501 = vcmp.eq.s32.totalorder %v2499, 0
    %v2502 = vxor.u32 %v2496, 2147483648
    %v2503 = vsel %vm2501, %v2488, %v2502
    %vm2504 = vcmp.eq.s32.totalorder %v2499, 2
    %v2505 = vxor.u32 %v2488, 2147483648
    %v2506 = vsel %vm2504, %v2505, %v2496
    %v2507 = vsel %vm2500, %v2503, %v2506
    %v2508 = vsel %vm2497, nan, %v2507
    %v2509 = vand.u32 2147483647, %v155
    %vm2510 = vcmp.le.f32.partialorder %v2509, 0.7853982
    %vm2511 = vcmp.lt.s32.totalorder %v155, 0
    %v2512 = vand.u32 %v155, 2139095040
    %v2513 = vshrl.u32 %v2512, 23
    %v2514 = vsub.s32 %v2513, 127
    %v2515 = vand.u32 2147483647, %v155
    %v2516 = vand.u32 %v2515, 8388607
    %v2517 = vor.u32 %v2516, 8388608
    %v2518 = vsub.s32 0, %v2517
    %v2519 = vadd.s32 %v2514, 1
    %vm2520 = vcmp.gt.s32.totalorder %v2519, 0
    %v2521 = vsel %vm2520, %v2519, 0
    %v2522 = vshrl.u32 %v2521, 5
    %v2523 = vand.u32 %v2521, 31
    %v2524 = vsub.s32 32, %v2523
    %v2525 = vshrl.u32 683565275, %v2524
    %v2526 = vshll.u32 683565275, %v2523
    %v2527 = vshrl.u32 2475754826, %v2524
    %v2528 = vor.u32 %v2526, %v2527
    %v2529 = vshll.u32 2475754826, %v2523
    %v2530 = vshrl.u32 2131351028, %v2524
    %v2531 = vor.u32 %v2529, %v2530
    %v2532 = vshll.u32 2131351028, %v2523
    %v2533 = vshrl.u32 2102212464, %v2524
    %v2534 = vor.u32 %v2532, %v2533
    %v2535 = vshll.u32 2102212464, %v2523
    %v2536 = vshrl.u32 920167782, %v2524
    %v2537 = vor.u32 %v2535, %v2536
    %v2538 = vshll.u32 920167782, %v2523
    %v2539 = vshrl.u32 1326507024, %v2524
    %v2540 = vor.u32 %v2538, %v2539
    %vm2541 = vcmp.lt.s32.totalorder %v2522, 1
    %vm2542 = vcmp.lt.s32.totalorder %v2522, 2
    %vm2543 = vcmp.lt.s32.totalorder %v2522, 3
    %vm2544 = vcmp.lt.s32.totalorder %v2522, 4
    %v2545 = vsel %vm2541, %v2525, %v2528
    %v2546 = vsel %vm2544, %v2534, 2102212464
    %v2547 = vsel %vm2543, %v2531, %v2546
    %v2548 = vsel %vm2542, %v2545, %v2547
    %v2549 = vsel %vm2541, %v2528, %v2531
    %v2550 = vsel %vm2544, %v2537, 920167782
    %v2551 = vsel %vm2543, %v2534, %v2550
    %v2552 = vsel %vm2542, %v2549, %v2551
    %v2553 = vsel %vm2541, %v2531, %v2534
    %v2554 = vsel %vm2544, %v2540, 1326507024
    %v2555 = vsel %vm2543, %v2537, %v2554
    %v2556 = vsel %vm2542, %v2553, %v2555
    %v2557 = vshll.u32 %v2517, 8
    %v2558 = vand.u32 %v2557, 65535
    %v2559 = vshrl.u32 %v2557, 16
    %v2560 = vand.u32 %v2556, 65535
    %v2561 = vshrl.u32 %v2556, 16
    %v2562 = vmul.u32 %v2558, %v2560
    %v2563 = vmul.u32 %v2558, %v2561
    %v2564 = vmul.u32 %v2559, %v2560
    %v2565 = vmul.u32 %v2559, %v2561
    %v2566 = vshll.u32 %v2563, 16
    %v2567 = vshrl.u32 %v2563, 16
    %v2568 = vshll.u32 %v2564, 16
    %v2569 = vshrl.u32 %v2564, 16
    %vm2570 = vc.u32 %v2562, %v2566
    %v2571 = vsel %vm2570, 1, 0
    %v2572 = vadd.s32 %v2562, %v2566
    %v2573 = vadd.s32 %v2565, %v2571
    %vm2574 = vc.u32 %v2572, %v2568
    %v2575 = vsel %vm2574, 1, 0
    %v2576 = vadd.s32 %v2572, %v2568
    %v2577 = vadd.s32 %v2573, %v2575
    %v2578 = vadd.s32 %v2577, %v2567
    %v2579 = vadd.s32 %v2578, %v2569
    %v2580 = vand.u32 %v2557, 65535
    %v2581 = vshrl.u32 %v2557, 16
    %v2582 = vand.u32 %v2552, 65535
    %v2583 = vshrl.u32 %v2552, 16
    %v2584 = vmul.u32 %v2580, %v2582
    %v2585 = vmul.u32 %v2580, %v2583
    %v2586 = vmul.u32 %v2581, %v2582
    %v2587 = vmul.u32 %v2581, %v2583
    %v2588 = vshll.u32 %v2585, 16
    %v2589 = vshrl.u32 %v2585, 16
    %v2590 = vshll.u32 %v2586, 16
    %v2591 = vshrl.u32 %v2586, 16
    %vm2592 = vc.u32 %v2584, %v2588
    %v2593 = vsel %vm2592, 1, 0
    %v2594 = vadd.s32 %v2584, %v2588
    %v2595 = vadd.s32 %v2587, %v2593
    %vm2596 = vc.u32 %v2594, %v2590
    %v2597 = vsel %vm2596, 1, 0
    %v2598 = vadd.s32 %v2594, %v2590
    %v2599 = vadd.s32 %v2595, %v2597
    %v2600 = vadd.s32 %v2599, %v2589
    %v2601 = vadd.s32 %v2600, %v2591
    %v2602 = vmul.u32 %v2557, %v2548
    %v2603 = vadd.s32 %v2579, %v2598
    %vm2604 = vc.u32 %v2579, %v2598
    %v2605 = vadd.s32 %v2601, 1
    %v2606 = vsel %vm2604, %v2605, %v2601
    %v2607 = vadd.s32 %v2602, %v2606
    %v2608 = vadd.s32 %v2607, 536870912
    %v2609 = vshrl.u32 %v2608, 30
    %v2610 = vshll.u32 %v2609, 30
    %v2611 = vsub.s32 %v2607, %v2610
    %vm2612 = vcmp.lt.s32.totalorder %v2611, 0
    %v2613 = vsub.s32 0, %v2611
    %v2614 = vsel %vm2612, %v2613, %v2611
    %v2615 = vclz %v2614
    %v2616 = vsub.s32 %v2615, 2
    %vm2617 = vcmp.gt.s32.totalorder 0, %v2616
    %v2618 = vsel %vm2617, 0, %v2616
    %v2619 = vsub.s32 32, %v2618
    %v2620 = vshll.u32 %v2611, %v2618
    %v2621 = vshrl.u32 %v2603, %v2619
    %v2622 = vor.u32 %v2620, %v2621
    %v2623 = vsub.s32 4294967266, %v2618
    %v2624 = vadd.s32 %v2623, 127
    %v2625 = vshll.u32 %v2624, 23
    %v2626 = vor.u32 4788187, %v2625
    %v2627 = vand.u32 2147483647, %v2626
    %v2629 = vcvt.s32.f32 %v2622
    %v2630 = vmul.f32 %v2629, %v2627
    %v2631 = vxor.u32 %v2630, 2147483648
    %v2632 = vsel %vm2511, %v2631, %v2630
    %v2633 = vsub.s32 4, %v2609
    %v2634 = vsel %vm2511, %v2633, %v2609
    %v2635 = vsel %vm2510, %v155, %v2632
    %v2636 = vsel %vm2510, 0, %v2634
    %v2637 = vmul.f32 %v2635, %v2635
    %v2638 = vmul.f32 %v2637, -0.001358992
    %v2639 = vadd.f32 %v2638, 0.041655596
    %v2640 = vmul.f32 %v2637, %v2639
    %v2641 = vadd.f32 %v2640, -0.4999988
    %v2642 = vmul.f32 %v2637, %v2641
    %v2643 = vadd.f32 1.0, %v2642
    %v2644 = vmul.f32 %v2635, %v2635
    %v2645 = vmul.f32 %v2644, -0.00019511016
    %v2646 = vadd.f32 %v2645, 0.008332121
    %v2647 = vmul.f32 %v2644, %v2646
    %v2648 = vadd.f32 %v2647, -0.16666654
    %v2649 = vmul.f32 %v2644, %v2648
    %v2650 = vadd.f32 %v2649, 1.0
    %v2651 = vmul.f32 %v2650, %v2635
    %vm2652 = vweird.f32 %v155
    %v2653 = vadd.s32 %v2636, 3
    %v2654 = vand.u32 %v2653, 3
    %vm2655 = vcmp.lt.s32.totalorder %v2654, 2
    %vm2656 = vcmp.eq.s32.totalorder %v2654, 0
    %v2657 = vxor.u32 %v2651, 2147483648
    %v2658 = vsel %vm2656, %v2643, %v2657
    %vm2659 = vcmp.eq.s32.totalorder %v2654, 2
    %v2660 = vxor.u32 %v2643, 2147483648
    %v2661 = vsel %vm2659, %v2660, %v2651
    %v2662 = vsel %vm2655, %v2658, %v2661
    %v2663 = vsel %vm2652, nan, %v2662
    %v2664 = vand.u32 2147483647, %v158
    %vm2665 = vcmp.le.f32.partialorder %v2664, 0.7853982
    %vm2666 = vcmp.lt.s32.totalorder %v158, 0
    %v2667 = vand.u32 %v158, 2139095040
    %v2668 = vshrl.u32 %v2667, 23
    %v2669 = vsub.s32 %v2668, 127
    %v2670 = vand.u32 2147483647, %v158
    %v2671 = vand.u32 %v2670, 8388607
    %v2672 = vor.u32 %v2671, 8388608
    %v2673 = vsub.s32 0, %v2672
    %v2674 = vadd.s32 %v2669, 1
    %vm2675 = vcmp.gt.s32.totalorder %v2674, 0
    %v2676 = vsel %vm2675, %v2674, 0
    %v2677 = vshrl.u32 %v2676, 5
    %v2678 = vand.u32 %v2676, 31
    %v2679 = vsub.s32 32, %v2678
    %v2680 = vshrl.u32 683565275, %v2679
    %v2681 = vshll.u32 683565275, %v2678
    %v2682 = vshrl.u32 2475754826, %v2679
    %v2683 = vor.u32 %v2681, %v2682
    %v2684 = vshll.u32 2475754826, %v2678
    %v2685 = vshrl.u32 2131351028, %v2679
    %v2686 = vor.u32 %v2684, %v2685
    %v2687 = vshll.u32 2131351028, %v2678
    %v2688 = vshrl.u32 2102212464, %v2679
    %v2689 = vor.u32 %v2687, %v2688
    %v2690 = vshll.u32 2102212464, %v2678
    %v2691 = vshrl.u32 920167782, %v2679
    %v2692 = vor.u32 %v2690, %v2691
    %v2693 = vshll.u32 920167782, %v2678
    %v2694 = vshrl.u32 1326507024, %v2679
    %v2695 = vor.u32 %v2693, %v2694
    %vm2696 = vcmp.lt.s32.totalorder %v2677, 1
    %vm2697 = vcmp.lt.s32.totalorder %v2677, 2
    %vm2698 = vcmp.lt.s32.totalorder %v2677, 3
    %vm2699 = vcmp.lt.s32.totalorder %v2677, 4
    %v2700 = vsel %vm2696, %v2680, %v2683
    %v2701 = vsel %vm2699, %v2689, 2102212464
    %v2702 = vsel %vm2698, %v2686, %v2701
    %v2703 = vsel %vm2697, %v2700, %v2702
    %v2704 = vsel %vm2696, %v2683, %v2686
    %v2705 = vsel %vm2699, %v2692, 920167782
    %v2706 = vsel %vm2698, %v2689, %v2705
    %v2707 = vsel %vm2697, %v2704, %v2706
    %v2708 = vsel %vm2696, %v2686, %v2689
    %v2709 = vsel %vm2699, %v2695, 1326507024
    %v2710 = vsel %vm2698, %v2692, %v2709
    %v2711 = vsel %vm2697, %v2708, %v2710
    %v2712 = vshll.u32 %v2672, 8
    %v2713 = vand.u32 %v2712, 65535
    %v2714 = vshrl.u32 %v2712, 16
    %v2715 = vand.u32 %v2711, 65535
    %v2716 = vshrl.u32 %v2711, 16
    %v2717 = vmul.u32 %v2713, %v2715
    %v2718 = vmul.u32 %v2713, %v2716
    %v2719 = vmul.u32 %v2714, %v2715
    %v2720 = vmul.u32 %v2714, %v2716
    %v2721 = vshll.u32 %v2718, 16
    %v2722 = vshrl.u32 %v2718, 16
    %v2723 = vshll.u32 %v2719, 16
    %v2724 = vshrl.u32 %v2719, 16
    %vm2725 = vc.u32 %v2717, %v2721
    %v2726 = vsel %vm2725, 1, 0
    %v2727 = vadd.s32 %v2717, %v2721
    %v2728 = vadd.s32 %v2720, %v2726
    %vm2729 = vc.u32 %v2727, %v2723
    %v2730 = vsel %vm2729, 1, 0
    %v2731 = vadd.s32 %v2727, %v2723
    %v2732 = vadd.s32 %v2728, %v2730
    %v2733 = vadd.s32 %v2732, %v2722
    %v2734 = vadd.s32 %v2733, %v2724
    %v2735 = vand.u32 %v2712, 65535
    %v2736 = vshrl.u32 %v2712, 16
    %v2737 = vand.u32 %v2707, 65535
    %v2738 = vshrl.u32 %v2707, 16
    %v2739 = vmul.u32 %v2735, %v2737
    %v2740 = vmul.u32 %v2735, %v2738
    %v2741 = vmul.u32 %v2736, %v2737
    %v2742 = vmul.u32 %v2736, %v2738
    %v2743 = vshll.u32 %v2740, 16
    %v2744 = vshrl.u32 %v2740, 16
    %v2745 = vshll.u32 %v2741, 16
    %v2746 = vshrl.u32 %v2741, 16
    %vm2747 = vc.u32 %v2739, %v2743
    %v2748 = vsel %vm2747, 1, 0
    %v2749 = vadd.s32 %v2739, %v2743
    %v2750 = vadd.s32 %v2742, %v2748
    %vm2751 = vc.u32 %v2749, %v2745
    %v2752 = vsel %vm2751, 1, 0
    %v2753 = vadd.s32 %v2749, %v2745
    %v2754 = vadd.s32 %v2750, %v2752
    %v2755 = vadd.s32 %v2754, %v2744
    %v2756 = vadd.s32 %v2755, %v2746
    %v2757 = vmul.u32 %v2712, %v2703
    %v2758 = vadd.s32 %v2734, %v2753
    %vm2759 = vc.u32 %v2734, %v2753
    %v2760 = vadd.s32 %v2756, 1
    %v2761 = vsel %vm2759, %v2760, %v2756
    %v2762 = vadd.s32 %v2757, %v2761
    %v2763 = vadd.s32 %v2762, 536870912
    %v2764 = vshrl.u32 %v2763, 30
    %v2765 = vshll.u32 %v2764, 30
    %v2766 = vsub.s32 %v2762, %v2765
    %vm2767 = vcmp.lt.s32.totalorder %v2766, 0
    %v2768 = vsub.s32 0, %v2766
    %v2769 = vsel %vm2767, %v2768, %v2766
    %v2770 = vclz %v2769
    %v2771 = vsub.s32 %v2770, 2
    %vm2772 = vcmp.gt.s32.totalorder 0, %v2771
    %v2773 = vsel %vm2772, 0, %v2771
    %v2774 = vsub.s32 32, %v2773
    %v2775 = vshll.u32 %v2766, %v2773
    %v2776 = vshrl.u32 %v2758, %v2774
    %v2777 = vor.u32 %v2775, %v2776
    %v2778 = vsub.s32 4294967266, %v2773
    %v2779 = vadd.s32 %v2778, 127
    %v2780 = vshll.u32 %v2779, 23
    %v2781 = vor.u32 4788187, %v2780
    %v2782 = vand.u32 2147483647, %v2781
    %v2784 = vcvt.s32.f32 %v2777
    %v2785 = vmul.f32 %v2784, %v2782
    %v2786 = vxor.u32 %v2785, 2147483648
    %v2787 = vsel %vm2666, %v2786, %v2785
    %v2788 = vsub.s32 4, %v2764
    %v2789 = vsel %vm2666, %v2788, %v2764
    %v2790 = vsel %vm2665, %v158, %v2787
    %v2791 = vsel %vm2665, 0, %v2789
    %v2792 = vmul.f32 %v2790, %v2790
    %v2793 = vmul.f32 %v2792, -0.001358992
    %v2794 = vadd.f32 %v2793, 0.041655596
    %v2795 = vmul.f32 %v2792, %v2794
    %v2796 = vadd.f32 %v2795, -0.4999988
    %v2797 = vmul.f32 %v2792, %v2796
    %v2798 = vadd.f32 1.0, %v2797
    %v2799 = vmul.f32 %v2790, %v2790
    %v2800 = vmul.f32 %v2799, -0.00019511016
    %v2801 = vadd.f32 %v2800, 0.008332121
    %v2802 = vmul.f32 %v2799, %v2801
    %v2803 = vadd.f32 %v2802, -0.16666654
    %v2804 = vmul.f32 %v2799, %v2803
    %v2805 = vadd.f32 %v2804, 1.0
    %v2806 = vmul.f32 %v2805, %v2790
    %vm2807 = vweird.f32 %v158
    %v2808 = vadd.s32 %v2791, 3
    %v2809 = vand.u32 %v2808, 3
    %vm2810 = vcmp.lt.s32.totalorder %v2809, 2
    %vm2811 = vcmp.eq.s32.totalorder %v2809, 0
    %v2812 = vxor.u32 %v2806, 2147483648
    %v2813 = vsel %vm2811, %v2798, %v2812
    %vm2814 = vcmp.eq.s32.totalorder %v2809, 2
    %v2815 = vxor.u32 %v2798, 2147483648
    %v2816 = vsel %vm2814, %v2815, %v2806
    %v2817 = vsel %vm2810, %v2813, %v2816
    %v2818 = vsel %vm2807, nan, %v2817
    %v2819 = vand.u32 2147483647, %v161
    %vm2820 = vcmp.le.f32.partialorder %v2819, 0.7853982
    %vm2821 = vcmp.lt.s32.totalorder %v161, 0
    %v2822 = vand.u32 %v161, 2139095040
    %v2823 = vshrl.u32 %v2822, 23
    %v2824 = vsub.s32 %v2823, 127
    %v2825 = vand.u32 2147483647, %v161
    %v2826 = vand.u32 %v2825, 8388607
    %v2827 = vor.u32 %v2826, 8388608
    %v2828 = vsub.s32 0, %v2827
    %v2829 = vadd.s32 %v2824, 1
    %vm2830 = vcmp.gt.s32.totalorder %v2829, 0
    %v2831 = vsel %vm2830, %v2829, 0
    %v2832 = vshrl.u32 %v2831, 5
    %v2833 = vand.u32 %v2831, 31
    %v2834 = vsub.s32 32, %v2833
    %v2835 = vshrl.u32 683565275, %v2834
    %v2836 = vshll.u32 683565275, %v2833
    %v2837 = vshrl.u32 2475754826, %v2834
    %v2838 = vor.u32 %v2836, %v2837
    %v2839 = vshll.u32 2475754826, %v2833
    %v2840 = vshrl.u32 2131351028, %v2834
    %v2841 = vor.u32 %v2839, %v2840
    %v2842 = vshll.u32 2131351028, %v2833
    %v2843 = vshrl.u32 2102212464, %v2834
    %v2844 = vor.u32 %v2842, %v2843
    %v2845 = vshll.u32 2102212464, %v2833
    %v2846 = vshrl.u32 920167782, %v2834
    %v2847 = vor.u32 %v2845, %v2846
    %v2848 = vshll.u32 920167782, %v2833
    %v2849 = vshrl.u32 1326507024, %v2834
    %v2850 = vor.u32 %v2848, %v2849
    %vm2851 = vcmp.lt.s32.totalorder %v2832, 1
    %vm2852 = vcmp.lt.s32.totalorder %v2832, 2
    %vm2853 = vcmp.lt.s32.totalorder %v2832, 3
    %vm2854 = vcmp.lt.s32.totalorder %v2832, 4
    %v2855 = vsel %vm2851, %v2835, %v2838
    %v2856 = vsel %vm2854, %v2844, 2102212464
    %v2857 = vsel %vm2853, %v2841, %v2856
    %v2858 = vsel %vm2852, %v2855, %v2857
    %v2859 = vsel %vm2851, %v2838, %v2841
    %v2860 = vsel %vm2854, %v2847, 920167782
    %v2861 = vsel %vm2853, %v2844, %v2860
    %v2862 = vsel %vm2852, %v2859, %v2861
    %v2863 = vsel %vm2851, %v2841, %v2844
    %v2864 = vsel %vm2854, %v2850, 1326507024
    %v2865 = vsel %vm2853, %v2847, %v2864
    %v2866 = vsel %vm2852, %v2863, %v2865
    %v2867 = vshll.u32 %v2827, 8
    %v2868 = vand.u32 %v2867, 65535
    %v2869 = vshrl.u32 %v2867, 16
    %v2870 = vand.u32 %v2866, 65535
    %v2871 = vshrl.u32 %v2866, 16
    %v2872 = vmul.u32 %v2868, %v2870
    %v2873 = vmul.u32 %v2868, %v2871
    %v2874 = vmul.u32 %v2869, %v2870
    %v2875 = vmul.u32 %v2869, %v2871
    %v2876 = vshll.u32 %v2873, 16
    %v2877 = vshrl.u32 %v2873, 16
    %v2878 = vshll.u32 %v2874, 16
    %v2879 = vshrl.u32 %v2874, 16
    %vm2880 = vc.u32 %v2872, %v2876
    %v2881 = vsel %vm2880, 1, 0
    %v2882 = vadd.s32 %v2872, %v2876
    %v2883 = vadd.s32 %v2875, %v2881
    %vm2884 = vc.u32 %v2882, %v2878
    %v2885 = vsel %vm2884, 1, 0
    %v2886 = vadd.s32 %v2882, %v2878
    %v2887 = vadd.s32 %v2883, %v2885
    %v2888 = vadd.s32 %v2887, %v2877
    %v2889 = vadd.s32 %v2888, %v2879
    %v2890 = vand.u32 %v2867, 65535
    %v2891 = vshrl.u32 %v2867, 16
    %v2892 = vand.u32 %v2862, 65535
    %v2893 = vshrl.u32 %v2862, 16
    %v2894 = vmul.u32 %v2890, %v2892
    %v2895 = vmul.u32 %v2890, %v2893
    %v2896 = vmul.u32 %v2891, %v2892
    %v2897 = vmul.u32 %v2891, %v2893
    %v2898 = vshll.u32 %v2895, 16
    %v2899 = vshrl.u32 %v2895, 16
    %v2900 = vshll.u32 %v2896, 16
    %v2901 = vshrl.u32 %v2896, 16
    %vm2902 = vc.u32 %v2894, %v2898
    %v2903 = vsel %vm2902, 1, 0
    %v2904 = vadd.s32 %v2894, %v2898
    %v2905 = vadd.s32 %v2897, %v2903
    %vm2906 = vc.u32 %v2904, %v2900
    %v2907 = vsel %vm2906, 1, 0
    %v2908 = vadd.s32 %v2904, %v2900
    %v2909 = vadd.s32 %v2905, %v2907
    %v2910 = vadd.s32 %v2909, %v2899
    %v2911 = vadd.s32 %v2910, %v2901
    %v2912 = vmul.u32 %v2867, %v2858
    %v2913 = vadd.s32 %v2889, %v2908
    %vm2914 = vc.u32 %v2889, %v2908
    %v2915 = vadd.s32 %v2911, 1
    %v2916 = vsel %vm2914, %v2915, %v2911
    %v2917 = vadd.s32 %v2912, %v2916
    %v2918 = vadd.s32 %v2917, 536870912
    %v2919 = vshrl.u32 %v2918, 30
    %v2920 = vshll.u32 %v2919, 30
    %v2921 = vsub.s32 %v2917, %v2920
    %vm2922 = vcmp.lt.s32.totalorder %v2921, 0
    %v2923 = vsub.s32 0, %v2921
    %v2924 = vsel %vm2922, %v2923, %v2921
    %v2925 = vclz %v2924
    %v2926 = vsub.s32 %v2925, 2
    %vm2927 = vcmp.gt.s32.totalorder 0, %v2926
    %v2928 = vsel %vm2927, 0, %v2926
    %v2929 = vsub.s32 32, %v2928
    %v2930 = vshll.u32 %v2921, %v2928
    %v2931 = vshrl.u32 %v2913, %v2929
    %v2932 = vor.u32 %v2930, %v2931
    %v2933 = vsub.s32 4294967266, %v2928
    %v2934 = vadd.s32 %v2933, 127
    %v2935 = vshll.u32 %v2934, 23
    %v2936 = vor.u32 4788187, %v2935
    %v2937 = vand.u32 2147483647, %v2936
    %v2939 = vcvt.s32.f32 %v2932
    %v2940 = vmul.f32 %v2939, %v2937
    %v2941 = vxor.u32 %v2940, 2147483648
    %v2942 = vsel %vm2821, %v2941, %v2940
    %v2943 = vsub.s32 4, %v2919
    %v2944 = vsel %vm2821, %v2943, %v2919
    %v2945 = vsel %vm2820, %v161, %v2942
    %v2946 = vsel %vm2820, 0, %v2944
    %v2947 = vmul.f32 %v2945, %v2945
    %v2948 = vmul.f32 %v2947, -0.001358992
    %v2949 = vadd.f32 %v2948, 0.041655596
    %v2950 = vmul.f32 %v2947, %v2949
    %v2951 = vadd.f32 %v2950, -0.4999988
    %v2952 = vmul.f32 %v2947, %v2951
    %v2953 = vadd.f32 1.0, %v2952
    %v2954 = vmul.f32 %v2945, %v2945
    %v2955 = vmul.f32 %v2954, -0.00019511016
    %v2956 = vadd.f32 %v2955, 0.008332121
    %v2957 = vmul.f32 %v2954, %v2956
    %v2958 = vadd.f32 %v2957, -0.16666654
    %v2959 = vmul.f32 %v2954, %v2958
    %v2960 = vadd.f32 %v2959, 1.0
    %v2961 = vmul.f32 %v2960, %v2945
    %vm2962 = vweird.f32 %v161
    %v2963 = vadd.s32 %v2946, 3
    %v2964 = vand.u32 %v2963, 3
    %vm2965 = vcmp.lt.s32.totalorder %v2964, 2
    %vm2966 = vcmp.eq.s32.totalorder %v2964, 0
    %v2967 = vxor.u32 %v2961, 2147483648
    %v2968 = vsel %vm2966, %v2953, %v2967
    %vm2969 = vcmp.eq.s32.totalorder %v2964, 2
    %v2970 = vxor.u32 %v2953, 2147483648
    %v2971 = vsel %vm2969, %v2970, %v2961
    %v2972 = vsel %vm2965, %v2968, %v2971
    %v2973 = vsel %vm2962, nan, %v2972
    %v2974 = vand.u32 2147483647, %v164
    %vm2975 = vcmp.le.f32.partialorder %v2974, 0.7853982
    %vm2976 = vcmp.lt.s32.totalorder %v164, 0
    %v2977 = vand.u32 %v164, 2139095040
    %v2978 = vshrl.u32 %v2977, 23
    %v2979 = vsub.s32 %v2978, 127
    %v2980 = vand.u32 2147483647, %v164
    %v2981 = vand.u32 %v2980, 8388607
    %v2982 = vor.u32 %v2981, 8388608
    %v2983 = vsub.s32 0, %v2982
    %v2984 = vadd.s32 %v2979, 1
    %vm2985 = vcmp.gt.s32.totalorder %v2984, 0
    %v2986 = vsel %vm2985, %v2984, 0
    %v2987 = vshrl.u32 %v2986, 5
    %v2988 = vand.u32 %v2986, 31
    %v2989 = vsub.s32 32, %v2988
    %v2990 = vshrl.u32 683565275, %v2989
    %v2991 = vshll.u32 683565275, %v2988
    %v2992 = vshrl.u32 2475754826, %v2989
    %v2993 = vor.u32 %v2991, %v2992
    %v2994 = vshll.u32 2475754826, %v2988
    %v2995 = vshrl.u32 2131351028, %v2989
    %v2996 = vor.u32 %v2994, %v2995
    %v2997 = vshll.u32 2131351028, %v2988
    %v2998 = vshrl.u32 2102212464, %v2989
    %v2999 = vor.u32 %v2997, %v2998
    %v3000 = vshll.u32 2102212464, %v2988
    %v3001 = vshrl.u32 920167782, %v2989
    %v3002 = vor.u32 %v3000, %v3001
    %v3003 = vshll.u32 920167782, %v2988
    %v3004 = vshrl.u32 1326507024, %v2989
    %v3005 = vor.u32 %v3003, %v3004
    %vm3006 = vcmp.lt.s32.totalorder %v2987, 1
    %vm3007 = vcmp.lt.s32.totalorder %v2987, 2
    %vm3008 = vcmp.lt.s32.totalorder %v2987, 3
    %vm3009 = vcmp.lt.s32.totalorder %v2987, 4
    %v3010 = vsel %vm3006, %v2990, %v2993
    %v3011 = vsel %vm3009, %v2999, 2102212464
    %v3012 = vsel %vm3008, %v2996, %v3011
    %v3013 = vsel %vm3007, %v3010, %v3012
    %v3014 = vsel %vm3006, %v2993, %v2996
    %v3015 = vsel %vm3009, %v3002, 920167782
    %v3016 = vsel %vm3008, %v2999, %v3015
    %v3017 = vsel %vm3007, %v3014, %v3016
    %v3018 = vsel %vm3006, %v2996, %v2999
    %v3019 = vsel %vm3009, %v3005, 1326507024
    %v3020 = vsel %vm3008, %v3002, %v3019
    %v3021 = vsel %vm3007, %v3018, %v3020
    %v3022 = vshll.u32 %v2982, 8
    %v3023 = vand.u32 %v3022, 65535
    %v3024 = vshrl.u32 %v3022, 16
    %v3025 = vand.u32 %v3021, 65535
    %v3026 = vshrl.u32 %v3021, 16
    %v3027 = vmul.u32 %v3023, %v3025
    %v3028 = vmul.u32 %v3023, %v3026
    %v3029 = vmul.u32 %v3024, %v3025
    %v3030 = vmul.u32 %v3024, %v3026
    %v3031 = vshll.u32 %v3028, 16
    %v3032 = vshrl.u32 %v3028, 16
    %v3033 = vshll.u32 %v3029, 16
    %v3034 = vshrl.u32 %v3029, 16
    %vm3035 = vc.u32 %v3027, %v3031
    %v3036 = vsel %vm3035, 1, 0
    %v3037 = vadd.s32 %v3027, %v3031
    %v3038 = vadd.s32 %v3030, %v3036
    %vm3039 = vc.u32 %v3037, %v3033
    %v3040 = vsel %vm3039, 1, 0
    %v3041 = vadd.s32 %v3037, %v3033
    %v3042 = vadd.s32 %v3038, %v3040
    %v3043 = vadd.s32 %v3042, %v3032
    %v3044 = vadd.s32 %v3043, %v3034
    %v3045 = vand.u32 %v3022, 65535
    %v3046 = vshrl.u32 %v3022, 16
    %v3047 = vand.u32 %v3017, 65535
    %v3048 = vshrl.u32 %v3017, 16
    %v3049 = vmul.u32 %v3045, %v3047
    %v3050 = vmul.u32 %v3045, %v3048
    %v3051 = vmul.u32 %v3046, %v3047
    %v3052 = vmul.u32 %v3046, %v3048
    %v3053 = vshll.u32 %v3050, 16
    %v3054 = vshrl.u32 %v3050, 16
    %v3055 = vshll.u32 %v3051, 16
    %v3056 = vshrl.u32 %v3051, 16
    %vm3057 = vc.u32 %v3049, %v3053
    %v3058 = vsel %vm3057, 1, 0
    %v3059 = vadd.s32 %v3049, %v3053
    %v3060 = vadd.s32 %v3052, %v3058
    %vm3061 = vc.u32 %v3059, %v3055
    %v3062 = vsel %vm3061, 1, 0
    %v3063 = vadd.s32 %v3059, %v3055
    %v3064 = vadd.s32 %v3060, %v3062
    %v3065 = vadd.s32 %v3064, %v3054
    %v3066 = vadd.s32 %v3065, %v3056
    %v3067 = vmul.u32 %v3022, %v3013
    %v3068 = vadd.s32 %v3044, %v3063
    %vm3069 = vc.u32 %v3044, %v3063
    %v3070 = vadd.s32 %v3066, 1
    %v3071 = vsel %vm3069, %v3070, %v3066
    %v3072 = vadd.s32 %v3067, %v3071
    %v3073 = vadd.s32 %v3072, 536870912
    %v3074 = vshrl.u32 %v3073, 30
    %v3075 = vshll.u32 %v3074, 30
    %v3076 = vsub.s32 %v3072, %v3075
    %vm3077 = vcmp.lt.s32.totalorder %v3076, 0
    %v3078 = vsub.s32 0, %v3076
    %v3079 = vsel %vm3077, %v3078, %v3076
    %v3080 = vclz %v3079
    %v3081 = vsub.s32 %v3080, 2
    %vm3082 = vcmp.gt.s32.totalorder 0, %v3081
    %v3083 = vsel %vm3082, 0, %v3081
    %v3084 = vsub.s32 32, %v3083
    %v3085 = vshll.u32 %v3076, %v3083
    %v3086 = vshrl.u32 %v3068, %v3084
    %v3087 = vor.u32 %v3085, %v3086
    %v3088 = vsub.s32 4294967266, %v3083
    %v3089 = vadd.s32 %v3088, 127
    %v3090 = vshll.u32 %v3089, 23
    %v3091 = vor.u32 4788187, %v3090
    %v3092 = vand.u32 2147483647, %v3091
    %v3094 = vcvt.s32.f32 %v3087
    %v3095 = vmul.f32 %v3094, %v3092
    %v3096 = vxor.u32 %v3095, 2147483648
    %v3097 = vsel %vm2976, %v3096, %v3095
    %v3098 = vsub.s32 4, %v3074
    %v3099 = vsel %vm2976, %v3098, %v3074
    %v3100 = vsel %vm2975, %v164, %v3097
    %v3101 = vsel %vm2975, 0, %v3099
    %v3102 = vmul.f32 %v3100, %v3100
    %v3103 = vmul.f32 %v3102, -0.001358992
    %v3104 = vadd.f32 %v3103, 0.041655596
    %v3105 = vmul.f32 %v3102, %v3104
    %v3106 = vadd.f32 %v3105, -0.4999988
    %v3107 = vmul.f32 %v3102, %v3106
    %v3108 = vadd.f32 1.0, %v3107
    %v3109 = vmul.f32 %v3100, %v3100
    %v3110 = vmul.f32 %v3109, -0.00019511016
    %v3111 = vadd.f32 %v3110, 0.008332121
    %v3112 = vmul.f32 %v3109, %v3111
    %v3113 = vadd.f32 %v3112, -0.16666654
    %v3114 = vmul.f32 %v3109, %v3113
    %v3115 = vadd.f32 %v3114, 1.0
    %v3116 = vmul.f32 %v3115, %v3100
    %vm3117 = vweird.f32 %v164
    %v3118 = vadd.s32 %v3101, 3
    %v3119 = vand.u32 %v3118, 3
    %vm3120 = vcmp.lt.s32.totalorder %v3119, 2
    %vm3121 = vcmp.eq.s32.totalorder %v3119, 0
    %v3122 = vxor.u32 %v3116, 2147483648
    %v3123 = vsel %vm3121, %v3108, %v3122
    %vm3124 = vcmp.eq.s32.totalorder %v3119, 2
    %v3125 = vxor.u32 %v3108, 2147483648
    %v3126 = vsel %vm3124, %v3125, %v3116
    %v3127 = vsel %vm3120, %v3123, %v3126
    %v3128 = vsel %vm3117, nan, %v3127
    %v3129 = vand.u32 2147483647, %v167
    %vm3130 = vcmp.le.f32.partialorder %v3129, 0.7853982
    %vm3131 = vcmp.lt.s32.totalorder %v167, 0
    %v3132 = vand.u32 %v167, 2139095040
    %v3133 = vshrl.u32 %v3132, 23
    %v3134 = vsub.s32 %v3133, 127
    %v3135 = vand.u32 2147483647, %v167
    %v3136 = vand.u32 %v3135, 8388607
    %v3137 = vor.u32 %v3136, 8388608
    %v3138 = vsub.s32 0, %v3137
    %v3139 = vadd.s32 %v3134, 1
    %vm3140 = vcmp.gt.s32.totalorder %v3139, 0
    %v3141 = vsel %vm3140, %v3139, 0
    %v3142 = vshrl.u32 %v3141, 5
    %v3143 = vand.u32 %v3141, 31
    %v3144 = vsub.s32 32, %v3143
    %v3145 = vshrl.u32 683565275, %v3144
    %v3146 = vshll.u32 683565275, %v3143
    %v3147 = vshrl.u32 2475754826, %v3144
    %v3148 = vor.u32 %v3146, %v3147
    %v3149 = vshll.u32 2475754826, %v3143
    %v3150 = vshrl.u32 2131351028, %v3144
    %v3151 = vor.u32 %v3149, %v3150
    %v3152 = vshll.u32 2131351028, %v3143
    %v3153 = vshrl.u32 2102212464, %v3144
    %v3154 = vor.u32 %v3152, %v3153
    %v3155 = vshll.u32 2102212464, %v3143
    %v3156 = vshrl.u32 920167782, %v3144
    %v3157 = vor.u32 %v3155, %v3156
    %v3158 = vshll.u32 920167782, %v3143
    %v3159 = vshrl.u32 1326507024, %v3144
    %v3160 = vor.u32 %v3158, %v3159
    %vm3161 = vcmp.lt.s32.totalorder %v3142, 1
    %vm3162 = vcmp.lt.s32.totalorder %v3142, 2
    %vm3163 = vcmp.lt.s32.totalorder %v3142, 3
    %vm3164 = vcmp.lt.s32.totalorder %v3142, 4
    %v3165 = vsel %vm3161, %v3145, %v3148
    %v3166 = vsel %vm3164, %v3154, 2102212464
    %v3167 = vsel %vm3163, %v3151, %v3166
    %v3168 = vsel %vm3162, %v3165, %v3167
    %v3169 = vsel %vm3161, %v3148, %v3151
    %v3170 = vsel %vm3164, %v3157, 920167782
    %v3171 = vsel %vm3163, %v3154, %v3170
    %v3172 = vsel %vm3162, %v3169, %v3171
    %v3173 = vsel %vm3161, %v3151, %v3154
    %v3174 = vsel %vm3164, %v3160, 1326507024
    %v3175 = vsel %vm3163, %v3157, %v3174
    %v3176 = vsel %vm3162, %v3173, %v3175
    %v3177 = vshll.u32 %v3137, 8
    %v3178 = vand.u32 %v3177, 65535
    %v3179 = vshrl.u32 %v3177, 16
    %v3180 = vand.u32 %v3176, 65535
    %v3181 = vshrl.u32 %v3176, 16
    %v3182 = vmul.u32 %v3178, %v3180
    %v3183 = vmul.u32 %v3178, %v3181
    %v3184 = vmul.u32 %v3179, %v3180
    %v3185 = vmul.u32 %v3179, %v3181
    %v3186 = vshll.u32 %v3183, 16
    %v3187 = vshrl.u32 %v3183, 16
    %v3188 = vshll.u32 %v3184, 16
    %v3189 = vshrl.u32 %v3184, 16
    %vm3190 = vc.u32 %v3182, %v3186
    %v3191 = vsel %vm3190, 1, 0
    %v3192 = vadd.s32 %v3182, %v3186
    %v3193 = vadd.s32 %v3185, %v3191
    %vm3194 = vc.u32 %v3192, %v3188
    %v3195 = vsel %vm3194, 1, 0
    %v3196 = vadd.s32 %v3192, %v3188
    %v3197 = vadd.s32 %v3193, %v3195
    %v3198 = vadd.s32 %v3197, %v3187
    %v3199 = vadd.s32 %v3198, %v3189
    %v3200 = vand.u32 %v3177, 65535
    %v3201 = vshrl.u32 %v3177, 16
    %v3202 = vand.u32 %v3172, 65535
    %v3203 = vshrl.u32 %v3172, 16
    %v3204 = vmul.u32 %v3200, %v3202
    %v3205 = vmul.u32 %v3200, %v3203
    %v3206 = vmul.u32 %v3201, %v3202
    %v3207 = vmul.u32 %v3201, %v3203
    %v3208 = vshll.u32 %v3205, 16
    %v3209 = vshrl.u32 %v3205, 16
    %v3210 = vshll.u32 %v3206, 16
    %v3211 = vshrl.u32 %v3206, 16
    %vm3212 = vc.u32 %v3204, %v3208
    %v3213 = vsel %vm3212, 1, 0
    %v3214 = vadd.s32 %v3204, %v3208
    %v3215 = vadd.s32 %v3207, %v3213
    %vm3216 = vc.u32 %v3214, %v3210
    %v3217 = vsel %vm3216, 1, 0
    %v3218 = vadd.s32 %v3214, %v3210
    %v3219 = vadd.s32 %v3215, %v3217
    %v3220 = vadd.s32 %v3219, %v3209
    %v3221 = vadd.s32 %v3220, %v3211
    %v3222 = vmul.u32 %v3177, %v3168
    %v3223 = vadd.s32 %v3199, %v3218
    %vm3224 = vc.u32 %v3199, %v3218
    %v3225 = vadd.s32 %v3221, 1
    %v3226 = vsel %vm3224, %v3225, %v3221
    %v3227 = vadd.s32 %v3222, %v3226
    %v3228 = vadd.s32 %v3227, 536870912
    %v3229 = vshrl.u32 %v3228, 30
    %v3230 = vshll.u32 %v3229, 30
    %v3231 = vsub.s32 %v3227, %v3230
    %vm3232 = vcmp.lt.s32.totalorder %v3231, 0
    %v3233 = vsub.s32 0, %v3231
    %v3234 = vsel %vm3232, %v3233, %v3231
    %v3235 = vclz %v3234
    %v3236 = vsub.s32 %v3235, 2
    %vm3237 = vcmp.gt.s32.totalorder 0, %v3236
    %v3238 = vsel %vm3237, 0, %v3236
    %v3239 = vsub.s32 32, %v3238
    %v3240 = vshll.u32 %v3231, %v3238
    %v3241 = vshrl.u32 %v3223, %v3239
    %v3242 = vor.u32 %v3240, %v3241
    %v3243 = vsub.s32 4294967266, %v3238
    %v3244 = vadd.s32 %v3243, 127
    %v3245 = vshll.u32 %v3244, 23
    %v3246 = vor.u32 4788187, %v3245
    %v3247 = vand.u32 2147483647, %v3246
    %v3249 = vcvt.s32.f32 %v3242
    %v3250 = vmul.f32 %v3249, %v3247
    %v3251 = vxor.u32 %v3250, 2147483648
    %v3252 = vsel %vm3131, %v3251, %v3250
    %v3253 = vsub.s32 4, %v3229
    %v3254 = vsel %vm3131, %v3253, %v3229
    %v3255 = vsel %vm3130, %v167, %v3252
    %v3256 = vsel %vm3130, 0, %v3254
    %v3257 = vmul.f32 %v3255, %v3255
    %v3258 = vmul.f32 %v3257, -0.001358992
    %v3259 = vadd.f32 %v3258, 0.041655596
    %v3260 = vmul.f32 %v3257, %v3259
    %v3261 = vadd.f32 %v3260, -0.4999988
    %v3262 = vmul.f32 %v3257, %v3261
    %v3263 = vadd.f32 1.0, %v3262
    %v3264 = vmul.f32 %v3255, %v3255
    %v3265 = vmul.f32 %v3264, -0.00019511016
    %v3266 = vadd.f32 %v3265, 0.008332121
    %v3267 = vmul.f32 %v3264, %v3266
    %v3268 = vadd.f32 %v3267, -0.16666654
    %v3269 = vmul.f32 %v3264, %v3268
    %v3270 = vadd.f32 %v3269, 1.0
    %v3271 = vmul.f32 %v3270, %v3255
    %vm3272 = vweird.f32 %v167
    %v3273 = vadd.s32 %v3256, 3
    %v3274 = vand.u32 %v3273, 3
    %vm3275 = vcmp.lt.s32.totalorder %v3274, 2
    %vm3276 = vcmp.eq.s32.totalorder %v3274, 0
    %v3277 = vxor.u32 %v3271, 2147483648
    %v3278 = vsel %vm3276, %v3263, %v3277
    %vm3279 = vcmp.eq.s32.totalorder %v3274, 2
    %v3280 = vxor.u32 %v3263, 2147483648
    %v3281 = vsel %vm3279, %v3280, %v3271
    %v3282 = vsel %vm3275, %v3278, %v3281
    %v3283 = vsel %vm3272, nan, %v3282
    %v3284 = vand.u32 2147483647, %v170
    %vm3285 = vcmp.le.f32.partialorder %v3284, 0.7853982
    %vm3286 = vcmp.lt.s32.totalorder %v170, 0
    %v3287 = vand.u32 %v170, 2139095040
    %v3288 = vshrl.u32 %v3287, 23
    %v3289 = vsub.s32 %v3288, 127
    %v3290 = vand.u32 2147483647, %v170
    %v3291 = vand.u32 %v3290, 8388607
    %v3292 = vor.u32 %v3291, 8388608
    %v3293 = vsub.s32 0, %v3292
    %v3294 = vadd.s32 %v3289, 1
    %vm3295 = vcmp.gt.s32.totalorder %v3294, 0
    %v3296 = vsel %vm3295, %v3294, 0
    %v3297 = vshrl.u32 %v3296, 5
    %v3298 = vand.u32 %v3296, 31
    %v3299 = vsub.s32 32, %v3298
    %v3300 = vshrl.u32 683565275, %v3299
    %v3301 = vshll.u32 683565275, %v3298
    %v3302 = vshrl.u32 2475754826, %v3299
    %v3303 = vor.u32 %v3301, %v3302
    %v3304 = vshll.u32 2475754826, %v3298
    %v3305 = vshrl.u32 2131351028, %v3299
    %v3306 = vor.u32 %v3304, %v3305
    %v3307 = vshll.u32 2131351028, %v3298
    %v3308 = vshrl.u32 2102212464, %v3299
    %v3309 = vor.u32 %v3307, %v3308
    %v3310 = vshll.u32 2102212464, %v3298
    %v3311 = vshrl.u32 920167782, %v3299
    %v3312 = vor.u32 %v3310, %v3311
    %v3313 = vshll.u32 920167782, %v3298
    %v3314 = vshrl.u32 1326507024, %v3299
    %v3315 = vor.u32 %v3313, %v3314
    %vm3316 = vcmp.lt.s32.totalorder %v3297, 1
    %vm3317 = vcmp.lt.s32.totalorder %v3297, 2
    %vm3318 = vcmp.lt.s32.totalorder %v3297, 3
    %vm3319 = vcmp.lt.s32.totalorder %v3297, 4
    %v3320 = vsel %vm3316, %v3300, %v3303
    %v3321 = vsel %vm3319, %v3309, 2102212464
    %v3322 = vsel %vm3318, %v3306, %v3321
    %v3323 = vsel %vm3317, %v3320, %v3322
    %v3324 = vsel %vm3316, %v3303, %v3306
    %v3325 = vsel %vm3319, %v3312, 920167782
    %v3326 = vsel %vm3318, %v3309, %v3325
    %v3327 = vsel %vm3317, %v3324, %v3326
    %v3328 = vsel %vm3316, %v3306, %v3309
    %v3329 = vsel %vm3319, %v3315, 1326507024
    %v3330 = vsel %vm3318, %v3312, %v3329
    %v3331 = vsel %vm3317, %v3328, %v3330
    %v3332 = vshll.u32 %v3292, 8
    %v3333 = vand.u32 %v3332, 65535
    %v3334 = vshrl.u32 %v3332, 16
    %v3335 = vand.u32 %v3331, 65535
    %v3336 = vshrl.u32 %v3331, 16
    %v3337 = vmul.u32 %v3333, %v3335
    %v3338 = vmul.u32 %v3333, %v3336
    %v3339 = vmul.u32 %v3334, %v3335
    %v3340 = vmul.u32 %v3334, %v3336
    %v3341 = vshll.u32 %v3338, 16
    %v3342 = vshrl.u32 %v3338, 16
    %v3343 = vshll.u32 %v3339, 16
    %v3344 = vshrl.u32 %v3339, 16
    %vm3345 = vc.u32 %v3337, %v3341
    %v3346 = vsel %vm3345, 1, 0
    %v3347 = vadd.s32 %v3337, %v3341
    %v3348 = vadd.s32 %v3340, %v3346
    %vm3349 = vc.u32 %v3347, %v3343
    %v3350 = vsel %vm3349, 1, 0
    %v3351 = vadd.s32 %v3347, %v3343
    %v3352 = vadd.s32 %v3348, %v3350
    %v3353 = vadd.s32 %v3352, %v3342
    %v3354 = vadd.s32 %v3353, %v3344
    %v3355 = vand.u32 %v3332, 65535
    %v3356 = vshrl.u32 %v3332, 16
    %v3357 = vand.u32 %v3327, 65535
    %v3358 = vshrl.u32 %v3327, 16
    %v3359 = vmul.u32 %v3355, %v3357
    %v3360 = vmul.u32 %v3355, %v3358
    %v3361 = vmul.u32 %v3356, %v3357
    %v3362 = vmul.u32 %v3356, %v3358
    %v3363 = vshll.u32 %v3360, 16
    %v3364 = vshrl.u32 %v3360, 16
    %v3365 = vshll.u32 %v3361, 16
    %v3366 = vshrl.u32 %v3361, 16
    %vm3367 = vc.u32 %v3359, %v3363
    %v3368 = vsel %vm3367, 1, 0
    %v3369 = vadd.s32 %v3359, %v3363
    %v3370 = vadd.s32 %v3362, %v3368
    %vm3371 = vc.u32 %v3369, %v3365
    %v3372 = vsel %vm3371, 1, 0
    %v3373 = vadd.s32 %v3369, %v3365
    %v3374 = vadd.s32 %v3370, %v3372
    %v3375 = vadd.s32 %v3374, %v3364
    %v3376 = vadd.s32 %v3375, %v3366
    %v3377 = vmul.u32 %v3332, %v3323
    %v3378 = vadd.s32 %v3354, %v3373
    %vm3379 = vc.u32 %v3354, %v3373
    %v3380 = vadd.s32 %v3376, 1
    %v3381 = vsel %vm3379, %v3380, %v3376
    %v3382 = vadd.s32 %v3377, %v3381
    %v3383 = vadd.s32 %v3382, 536870912
    %v3384 = vshrl.u32 %v3383, 30
    %v3385 = vshll.u32 %v3384, 30
    %v3386 = vsub.s32 %v3382, %v3385
    %vm3387 = vcmp.lt.s32.totalorder %v3386, 0
    %v3388 = vsub.s32 0, %v3386
    %v3389 = vsel %vm3387, %v3388, %v3386
    %v3390 = vclz %v3389
    %v3391 = vsub.s32 %v3390, 2
    %vm3392 = vcmp.gt.s32.totalorder 0, %v3391
    %v3393 = vsel %vm3392, 0, %v3391
    %v3394 = vsub.s32 32, %v3393
    %v3395 = vshll.u32 %v3386, %v3393
    %v3396 = vshrl.u32 %v3378, %v3394
    %v3397 = vor.u32 %v3395, %v3396
    %v3398 = vsub.s32 4294967266, %v3393
    %v3399 = vadd.s32 %v3398, 127
    %v3400 = vshll.u32 %v3399, 23
    %v3401 = vor.u32 4788187, %v3400
    %v3402 = vand.u32 2147483647, %v3401
    %v3404 = vcvt.s32.f32 %v3397
    %v3405 = vmul.f32 %v3404, %v3402
    %v3406 = vxor.u32 %v3405, 2147483648
    %v3407 = vsel %vm3286, %v3406, %v3405
    %v3408 = vsub.s32 4, %v3384
    %v3409 = vsel %vm3286, %v3408, %v3384
    %v3410 = vsel %vm3285, %v170, %v3407
    %v3411 = vsel %vm3285, 0, %v3409
    %v3412 = vmul.f32 %v3410, %v3410
    %v3413 = vmul.f32 %v3412, -0.001358992
    %v3414 = vadd.f32 %v3413, 0.041655596
    %v3415 = vmul.f32 %v3412, %v3414
    %v3416 = vadd.f32 %v3415, -0.4999988
    %v3417 = vmul.f32 %v3412, %v3416
    %v3418 = vadd.f32 1.0, %v3417
    %v3419 = vmul.f32 %v3410, %v3410
    %v3420 = vmul.f32 %v3419, -0.00019511016
    %v3421 = vadd.f32 %v3420, 0.008332121
    %v3422 = vmul.f32 %v3419, %v3421
    %v3423 = vadd.f32 %v3422, -0.16666654
    %v3424 = vmul.f32 %v3419, %v3423
    %v3425 = vadd.f32 %v3424, 1.0
    %v3426 = vmul.f32 %v3425, %v3410
    %vm3427 = vweird.f32 %v170
    %v3428 = vadd.s32 %v3411, 3
    %v3429 = vand.u32 %v3428, 3
    %vm3430 = vcmp.lt.s32.totalorder %v3429, 2
    %vm3431 = vcmp.eq.s32.totalorder %v3429, 0
    %v3432 = vxor.u32 %v3426, 2147483648
    %v3433 = vsel %vm3431, %v3418, %v3432
    %vm3434 = vcmp.eq.s32.totalorder %v3429, 2
    %v3435 = vxor.u32 %v3418, 2147483648
    %v3436 = vsel %vm3434, %v3435, %v3426
    %v3437 = vsel %vm3430, %v3433, %v3436
    %v3438 = vsel %vm3427, nan, %v3437
    %v3439 = vand.u32 2147483647, %v173
    %vm3440 = vcmp.le.f32.partialorder %v3439, 0.7853982
    %vm3441 = vcmp.lt.s32.totalorder %v173, 0
    %v3442 = vand.u32 %v173, 2139095040
    %v3443 = vshrl.u32 %v3442, 23
    %v3444 = vsub.s32 %v3443, 127
    %v3445 = vand.u32 2147483647, %v173
    %v3446 = vand.u32 %v3445, 8388607
    %v3447 = vor.u32 %v3446, 8388608
    %v3448 = vsub.s32 0, %v3447
    %v3449 = vadd.s32 %v3444, 1
    %vm3450 = vcmp.gt.s32.totalorder %v3449, 0
    %v3451 = vsel %vm3450, %v3449, 0
    %v3452 = vshrl.u32 %v3451, 5
    %v3453 = vand.u32 %v3451, 31
    %v3454 = vsub.s32 32, %v3453
    %v3455 = vshrl.u32 683565275, %v3454
    %v3456 = vshll.u32 683565275, %v3453
    %v3457 = vshrl.u32 2475754826, %v3454
    %v3458 = vor.u32 %v3456, %v3457
    %v3459 = vshll.u32 2475754826, %v3453
    %v3460 = vshrl.u32 2131351028, %v3454
    %v3461 = vor.u32 %v3459, %v3460
    %v3462 = vshll.u32 2131351028, %v3453
    %v3463 = vshrl.u32 2102212464, %v3454
    %v3464 = vor.u32 %v3462, %v3463
    %v3465 = vshll.u32 2102212464, %v3453
    %v3466 = vshrl.u32 920167782, %v3454
    %v3467 = vor.u32 %v3465, %v3466
    %v3468 = vshll.u32 920167782, %v3453
    %v3469 = vshrl.u32 1326507024, %v3454
    %v3470 = vor.u32 %v3468, %v3469
    %vm3471 = vcmp.lt.s32.totalorder %v3452, 1
    %vm3472 = vcmp.lt.s32.totalorder %v3452, 2
    %vm3473 = vcmp.lt.s32.totalorder %v3452, 3
    %vm3474 = vcmp.lt.s32.totalorder %v3452, 4
    %v3475 = vsel %vm3471, %v3455, %v3458
    %v3476 = vsel %vm3474, %v3464, 2102212464
    %v3477 = vsel %vm3473, %v3461, %v3476
    %v3478 = vsel %vm3472, %v3475, %v3477
    %v3479 = vsel %vm3471, %v3458, %v3461
    %v3480 = vsel %vm3474, %v3467, 920167782
    %v3481 = vsel %vm3473, %v3464, %v3480
    %v3482 = vsel %vm3472, %v3479, %v3481
    %v3483 = vsel %vm3471, %v3461, %v3464
    %v3484 = vsel %vm3474, %v3470, 1326507024
    %v3485 = vsel %vm3473, %v3467, %v3484
    %v3486 = vsel %vm3472, %v3483, %v3485
    %v3487 = vshll.u32 %v3447, 8
    %v3488 = vand.u32 %v3487, 65535
    %v3489 = vshrl.u32 %v3487, 16
    %v3490 = vand.u32 %v3486, 65535
    %v3491 = vshrl.u32 %v3486, 16
    %v3492 = vmul.u32 %v3488, %v3490
    %v3493 = vmul.u32 %v3488, %v3491
    %v3494 = vmul.u32 %v3489, %v3490
    %v3495 = vmul.u32 %v3489, %v3491
    %v3496 = vshll.u32 %v3493, 16
    %v3497 = vshrl.u32 %v3493, 16
    %v3498 = vshll.u32 %v3494, 16
    %v3499 = vshrl.u32 %v3494, 16
    %vm3500 = vc.u32 %v3492, %v3496
    %v3501 = vsel %vm3500, 1, 0
    %v3502 = vadd.s32 %v3492, %v3496
    %v3503 = vadd.s32 %v3495, %v3501
    %vm3504 = vc.u32 %v3502, %v3498
    %v3505 = vsel %vm3504, 1, 0
    %v3506 = vadd.s32 %v3502, %v3498
    %v3507 = vadd.s32 %v3503, %v3505
    %v3508 = vadd.s32 %v3507, %v3497
    %v3509 = vadd.s32 %v3508, %v3499
    %v3510 = vand.u32 %v3487, 65535
    %v3511 = vshrl.u32 %v3487, 16
    %v3512 = vand.u32 %v3482, 65535
    %v3513 = vshrl.u32 %v3482, 16
    %v3514 = vmul.u32 %v3510, %v3512
    %v3515 = vmul.u32 %v3510, %v3513
    %v3516 = vmul.u32 %v3511, %v3512
    %v3517 = vmul.u32 %v3511, %v3513
    %v3518 = vshll.u32 %v3515, 16
    %v3519 = vshrl.u32 %v3515, 16
    %v3520 = vshll.u32 %v3516, 16
    %v3521 = vshrl.u32 %v3516, 16
    %vm3522 = vc.u32 %v3514, %v3518
    %v3523 = vsel %vm3522, 1, 0
    %v3524 = vadd.s32 %v3514, %v3518
    %v3525 = vadd.s32 %v3517, %v3523
    %vm3526 = vc.u32 %v3524, %v3520
    %v3527 = vsel %vm3526, 1, 0
    %v3528 = vadd.s32 %v3524, %v3520
    %v3529 = vadd.s32 %v3525, %v3527
    %v3530 = vadd.s32 %v3529, %v3519
    %v3531 = vadd.s32 %v3530, %v3521
    %v3532 = vmul.u32 %v3487, %v3478
    %v3533 = vadd.s32 %v3509, %v3528
    %vm3534 = vc.u32 %v3509, %v3528
    %v3535 = vadd.s32 %v3531, 1
    %v3536 = vsel %vm3534, %v3535, %v3531
    %v3537 = vadd.s32 %v3532, %v3536
    %v3538 = vadd.s32 %v3537, 536870912
    %v3539 = vshrl.u32 %v3538, 30
    %v3540 = vshll.u32 %v3539, 30
    %v3541 = vsub.s32 %v3537, %v3540
    %vm3542 = vcmp.lt.s32.totalorder %v3541, 0
    %v3543 = vsub.s32 0, %v3541
    %v3544 = vsel %vm3542, %v3543, %v3541
    %v3545 = vclz %v3544
    %v3546 = vsub.s32 %v3545, 2
    %vm3547 = vcmp.gt.s32.totalorder 0, %v3546
    %v3548 = vsel %vm3547, 0, %v3546
    %v3549 = vsub.s32 32, %v3548
    %v3550 = vshll.u32 %v3541, %v3548
    %v3551 = vshrl.u32 %v3533, %v3549
    %v3552 = vor.u32 %v3550, %v3551
    %v3553 = vsub.s32 4294967266, %v3548
    %v3554 = vadd.s32 %v3553, 127
    %v3555 = vshll.u32 %v3554, 23
    %v3556 = vor.u32 4788187, %v3555
    %v3557 = vand.u32 2147483647, %v3556
    %v3559 = vcvt.s32.f32 %v3552
    %v3560 = vmul.f32 %v3559, %v3557
    %v3561 = vxor.u32 %v3560, 2147483648
    %v3562 = vsel %vm3441, %v3561, %v3560
    %v3563 = vsub.s32 4, %v3539
    %v3564 = vsel %vm3441, %v3563, %v3539
    %v3565 = vsel %vm3440, %v173, %v3562
    %v3566 = vsel %vm3440, 0, %v3564
    %v3567 = vmul.f32 %v3565, %v3565
    %v3568 = vmul.f32 %v3567, -0.001358992
    %v3569 = vadd.f32 %v3568, 0.041655596
    %v3570 = vmul.f32 %v3567, %v3569
    %v3571 = vadd.f32 %v3570, -0.4999988
    %v3572 = vmul.f32 %v3567, %v3571
    %v3573 = vadd.f32 1.0, %v3572
    %v3574 = vmul.f32 %v3565, %v3565
    %v3575 = vmul.f32 %v3574, -0.00019511016
    %v3576 = vadd.f32 %v3575, 0.008332121
    %v3577 = vmul.f32 %v3574, %v3576
    %v3578 = vadd.f32 %v3577, -0.16666654
    %v3579 = vmul.f32 %v3574, %v3578
    %v3580 = vadd.f32 %v3579, 1.0
    %v3581 = vmul.f32 %v3580, %v3565
    %vm3582 = vweird.f32 %v173
    %v3583 = vadd.s32 %v3566, 3
    %v3584 = vand.u32 %v3583, 3
    %vm3585 = vcmp.lt.s32.totalorder %v3584, 2
    %vm3586 = vcmp.eq.s32.totalorder %v3584, 0
    %v3587 = vxor.u32 %v3581, 2147483648
    %v3588 = vsel %vm3586, %v3573, %v3587
    %vm3589 = vcmp.eq.s32.totalorder %v3584, 2
    %v3590 = vxor.u32 %v3573, 2147483648
    %v3591 = vsel %vm3589, %v3590, %v3581
    %v3592 = vsel %vm3585, %v3588, %v3591
    %v3593 = vsel %vm3582, nan, %v3592
    %v3594 = vand.u32 2147483647, %v176
    %vm3595 = vcmp.le.f32.partialorder %v3594, 0.7853982
    %vm3596 = vcmp.lt.s32.totalorder %v176, 0
    %v3597 = vand.u32 %v176, 2139095040
    %v3598 = vshrl.u32 %v3597, 23
    %v3599 = vsub.s32 %v3598, 127
    %v3600 = vand.u32 2147483647, %v176
    %v3601 = vand.u32 %v3600, 8388607
    %v3602 = vor.u32 %v3601, 8388608
    %v3603 = vsub.s32 0, %v3602
    %v3604 = vadd.s32 %v3599, 1
    %vm3605 = vcmp.gt.s32.totalorder %v3604, 0
    %v3606 = vsel %vm3605, %v3604, 0
    %v3607 = vshrl.u32 %v3606, 5
    %v3608 = vand.u32 %v3606, 31
    %v3609 = vsub.s32 32, %v3608
    %v3610 = vshrl.u32 683565275, %v3609
    %v3611 = vshll.u32 683565275, %v3608
    %v3612 = vshrl.u32 2475754826, %v3609
    %v3613 = vor.u32 %v3611, %v3612
    %v3614 = vshll.u32 2475754826, %v3608
    %v3615 = vshrl.u32 2131351028, %v3609
    %v3616 = vor.u32 %v3614, %v3615
    %v3617 = vshll.u32 2131351028, %v3608
    %v3618 = vshrl.u32 2102212464, %v3609
    %v3619 = vor.u32 %v3617, %v3618
    %v3620 = vshll.u32 2102212464, %v3608
    %v3621 = vshrl.u32 920167782, %v3609
    %v3622 = vor.u32 %v3620, %v3621
    %v3623 = vshll.u32 920167782, %v3608
    %v3624 = vshrl.u32 1326507024, %v3609
    %v3625 = vor.u32 %v3623, %v3624
    %vm3626 = vcmp.lt.s32.totalorder %v3607, 1
    %vm3627 = vcmp.lt.s32.totalorder %v3607, 2
    %vm3628 = vcmp.lt.s32.totalorder %v3607, 3
    %vm3629 = vcmp.lt.s32.totalorder %v3607, 4
    %v3630 = vsel %vm3626, %v3610, %v3613
    %v3631 = vsel %vm3629, %v3619, 2102212464
    %v3632 = vsel %vm3628, %v3616, %v3631
    %v3633 = vsel %vm3627, %v3630, %v3632
    %v3634 = vsel %vm3626, %v3613, %v3616
    %v3635 = vsel %vm3629, %v3622, 920167782
    %v3636 = vsel %vm3628, %v3619, %v3635
    %v3637 = vsel %vm3627, %v3634, %v3636
    %v3638 = vsel %vm3626, %v3616, %v3619
    %v3639 = vsel %vm3629, %v3625, 1326507024
    %v3640 = vsel %vm3628, %v3622, %v3639
    %v3641 = vsel %vm3627, %v3638, %v3640
    %v3642 = vshll.u32 %v3602, 8
    %v3643 = vand.u32 %v3642, 65535
    %v3644 = vshrl.u32 %v3642, 16
    %v3645 = vand.u32 %v3641, 65535
    %v3646 = vshrl.u32 %v3641, 16
    %v3647 = vmul.u32 %v3643, %v3645
    %v3648 = vmul.u32 %v3643, %v3646
    %v3649 = vmul.u32 %v3644, %v3645
    %v3650 = vmul.u32 %v3644, %v3646
    %v3651 = vshll.u32 %v3648, 16
    %v3652 = vshrl.u32 %v3648, 16
    %v3653 = vshll.u32 %v3649, 16
    %v3654 = vshrl.u32 %v3649, 16
    %vm3655 = vc.u32 %v3647, %v3651
    %v3656 = vsel %vm3655, 1, 0
    %v3657 = vadd.s32 %v3647, %v3651
    %v3658 = vadd.s32 %v3650, %v3656
    %vm3659 = vc.u32 %v3657, %v3653
    %v3660 = vsel %vm3659, 1, 0
    %v3661 = vadd.s32 %v3657, %v3653
    %v3662 = vadd.s32 %v3658, %v3660
    %v3663 = vadd.s32 %v3662, %v3652
    %v3664 = vadd.s32 %v3663, %v3654
    %v3665 = vand.u32 %v3642, 65535
    %v3666 = vshrl.u32 %v3642, 16
    %v3667 = vand.u32 %v3637, 65535
    %v3668 = vshrl.u32 %v3637, 16
    %v3669 = vmul.u32 %v3665, %v3667
    %v3670 = vmul.u32 %v3665, %v3668
    %v3671 = vmul.u32 %v3666, %v3667
    %v3672 = vmul.u32 %v3666, %v3668
    %v3673 = vshll.u32 %v3670, 16
    %v3674 = vshrl.u32 %v3670, 16
    %v3675 = vshll.u32 %v3671, 16
    %v3676 = vshrl.u32 %v3671, 16
    %vm3677 = vc.u32 %v3669, %v3673
    %v3678 = vsel %vm3677, 1, 0
    %v3679 = vadd.s32 %v3669, %v3673
    %v3680 = vadd.s32 %v3672, %v3678
    %vm3681 = vc.u32 %v3679, %v3675
    %v3682 = vsel %vm3681, 1, 0
    %v3683 = vadd.s32 %v3679, %v3675
    %v3684 = vadd.s32 %v3680, %v3682
    %v3685 = vadd.s32 %v3684, %v3674
    %v3686 = vadd.s32 %v3685, %v3676
    %v3687 = vmul.u32 %v3642, %v3633
    %v3688 = vadd.s32 %v3664, %v3683
    %vm3689 = vc.u32 %v3664, %v3683
    %v3690 = vadd.s32 %v3686, 1
    %v3691 = vsel %vm3689, %v3690, %v3686
    %v3692 = vadd.s32 %v3687, %v3691
    %v3693 = vadd.s32 %v3692, 536870912
    %v3694 = vshrl.u32 %v3693, 30
    %v3695 = vshll.u32 %v3694, 30
    %v3696 = vsub.s32 %v3692, %v3695
    %vm3697 = vcmp.lt.s32.totalorder %v3696, 0
    %v3698 = vsub.s32 0, %v3696
    %v3699 = vsel %vm3697, %v3698, %v3696
    %v3700 = vclz %v3699
    %v3701 = vsub.s32 %v3700, 2
    %vm3702 = vcmp.gt.s32.totalorder 0, %v3701
    %v3703 = vsel %vm3702, 0, %v3701
    %v3704 = vsub.s32 32, %v3703
    %v3705 = vshll.u32 %v3696, %v3703
    %v3706 = vshrl.u32 %v3688, %v3704
    %v3707 = vor.u32 %v3705, %v3706
    %v3708 = vsub.s32 4294967266, %v3703
    %v3709 = vadd.s32 %v3708, 127
    %v3710 = vshll.u32 %v3709, 23
    %v3711 = vor.u32 4788187, %v3710
    %v3712 = vand.u32 2147483647, %v3711
    %v3714 = vcvt.s32.f32 %v3707
    %v3715 = vmul.f32 %v3714, %v3712
    %v3716 = vxor.u32 %v3715, 2147483648
    %v3717 = vsel %vm3596, %v3716, %v3715
    %v3718 = vsub.s32 4, %v3694
    %v3719 = vsel %vm3596, %v3718, %v3694
    %v3720 = vsel %vm3595, %v176, %v3717
    %v3721 = vsel %vm3595, 0, %v3719
    %v3722 = vmul.f32 %v3720, %v3720
    %v3723 = vmul.f32 %v3722, -0.001358992
    %v3724 = vadd.f32 %v3723, 0.041655596
    %v3725 = vmul.f32 %v3722, %v3724
    %v3726 = vadd.f32 %v3725, -0.4999988
    %v3727 = vmul.f32 %v3722, %v3726
    %v3728 = vadd.f32 1.0, %v3727
    %v3729 = vmul.f32 %v3720, %v3720
    %v3730 = vmul.f32 %v3729, -0.00019511016
    %v3731 = vadd.f32 %v3730, 0.008332121
    %v3732 = vmul.f32 %v3729, %v3731
    %v3733 = vadd.f32 %v3732, -0.16666654
    %v3734 = vmul.f32 %v3729, %v3733
    %v3735 = vadd.f32 %v3734, 1.0
    %v3736 = vmul.f32 %v3735, %v3720
    %vm3737 = vweird.f32 %v176
    %v3738 = vadd.s32 %v3721, 3
    %v3739 = vand.u32 %v3738, 3
    %vm3740 = vcmp.lt.s32.totalorder %v3739, 2
    %vm3741 = vcmp.eq.s32.totalorder %v3739, 0
    %v3742 = vxor.u32 %v3736, 2147483648
    %v3743 = vsel %vm3741, %v3728, %v3742
    %vm3744 = vcmp.eq.s32.totalorder %v3739, 2
    %v3745 = vxor.u32 %v3728, 2147483648
    %v3746 = vsel %vm3744, %v3745, %v3736
    %v3747 = vsel %vm3740, %v3743, %v3746
    %v3748 = vsel %vm3737, nan, %v3747
    %v3749 = vand.u32 2147483647, %v179
    %vm3750 = vcmp.le.f32.partialorder %v3749, 0.7853982
    %vm3751 = vcmp.lt.s32.totalorder %v179, 0
    %v3752 = vand.u32 %v179, 2139095040
    %v3753 = vshrl.u32 %v3752, 23
    %v3754 = vsub.s32 %v3753, 127
    %v3755 = vand.u32 2147483647, %v179
    %v3756 = vand.u32 %v3755, 8388607
    %v3757 = vor.u32 %v3756, 8388608
    %v3758 = vsub.s32 0, %v3757
    %v3759 = vadd.s32 %v3754, 1
    %vm3760 = vcmp.gt.s32.totalorder %v3759, 0
    %v3761 = vsel %vm3760, %v3759, 0
    %v3762 = vshrl.u32 %v3761, 5
    %v3763 = vand.u32 %v3761, 31
    %v3764 = vsub.s32 32, %v3763
    %v3765 = vshrl.u32 683565275, %v3764
    %v3766 = vshll.u32 683565275, %v3763
    %v3767 = vshrl.u32 2475754826, %v3764
    %v3768 = vor.u32 %v3766, %v3767
    %v3769 = vshll.u32 2475754826, %v3763
    %v3770 = vshrl.u32 2131351028, %v3764
    %v3771 = vor.u32 %v3769, %v3770
    %v3772 = vshll.u32 2131351028, %v3763
    %v3773 = vshrl.u32 2102212464, %v3764
    %v3774 = vor.u32 %v3772, %v3773
    %v3775 = vshll.u32 2102212464, %v3763
    %v3776 = vshrl.u32 920167782, %v3764
    %v3777 = vor.u32 %v3775, %v3776
    %v3778 = vshll.u32 920167782, %v3763
    %v3779 = vshrl.u32 1326507024, %v3764
    %v3780 = vor.u32 %v3778, %v3779
    %vm3781 = vcmp.lt.s32.totalorder %v3762, 1
    %vm3782 = vcmp.lt.s32.totalorder %v3762, 2
    %vm3783 = vcmp.lt.s32.totalorder %v3762, 3
    %vm3784 = vcmp.lt.s32.totalorder %v3762, 4
    %v3785 = vsel %vm3781, %v3765, %v3768
    %v3786 = vsel %vm3784, %v3774, 2102212464
    %v3787 = vsel %vm3783, %v3771, %v3786
    %v3788 = vsel %vm3782, %v3785, %v3787
    %v3789 = vsel %vm3781, %v3768, %v3771
    %v3790 = vsel %vm3784, %v3777, 920167782
    %v3791 = vsel %vm3783, %v3774, %v3790
    %v3792 = vsel %vm3782, %v3789, %v3791
    %v3793 = vsel %vm3781, %v3771, %v3774
    %v3794 = vsel %vm3784, %v3780, 1326507024
    %v3795 = vsel %vm3783, %v3777, %v3794
    %v3796 = vsel %vm3782, %v3793, %v3795
    %v3797 = vshll.u32 %v3757, 8
    %v3798 = vand.u32 %v3797, 65535
    %v3799 = vshrl.u32 %v3797, 16
    %v3800 = vand.u32 %v3796, 65535
    %v3801 = vshrl.u32 %v3796, 16
    %v3802 = vmul.u32 %v3798, %v3800
    %v3803 = vmul.u32 %v3798, %v3801
    %v3804 = vmul.u32 %v3799, %v3800
    %v3805 = vmul.u32 %v3799, %v3801
    %v3806 = vshll.u32 %v3803, 16
    %v3807 = vshrl.u32 %v3803, 16
    %v3808 = vshll.u32 %v3804, 16
    %v3809 = vshrl.u32 %v3804, 16
    %vm3810 = vc.u32 %v3802, %v3806
    %v3811 = vsel %vm3810, 1, 0
    %v3812 = vadd.s32 %v3802, %v3806
    %v3813 = vadd.s32 %v3805, %v3811
    %vm3814 = vc.u32 %v3812, %v3808
    %v3815 = vsel %vm3814, 1, 0
    %v3816 = vadd.s32 %v3812, %v3808
    %v3817 = vadd.s32 %v3813, %v3815
    %v3818 = vadd.s32 %v3817, %v3807
    %v3819 = vadd.s32 %v3818, %v3809
    %v3820 = vand.u32 %v3797, 65535
    %v3821 = vshrl.u32 %v3797, 16
    %v3822 = vand.u32 %v3792, 65535
    %v3823 = vshrl.u32 %v3792, 16
    %v3824 = vmul.u32 %v3820, %v3822
    %v3825 = vmul.u32 %v3820, %v3823
    %v3826 = vmul.u32 %v3821, %v3822
    %v3827 = vmul.u32 %v3821, %v3823
    %v3828 = vshll.u32 %v3825, 16
    %v3829 = vshrl.u32 %v3825, 16
    %v3830 = vshll.u32 %v3826, 16
    %v3831 = vshrl.u32 %v3826, 16
    %vm3832 = vc.u32 %v3824, %v3828
    %v3833 = vsel %vm3832, 1, 0
    %v3834 = vadd.s32 %v3824, %v3828
    %v3835 = vadd.s32 %v3827, %v3833
    %vm3836 = vc.u32 %v3834, %v3830
    %v3837 = vsel %vm3836, 1, 0
    %v3838 = vadd.s32 %v3834, %v3830
    %v3839 = vadd.s32 %v3835, %v3837
    %v3840 = vadd.s32 %v3839, %v3829
    %v3841 = vadd.s32 %v3840, %v3831
    %v3842 = vmul.u32 %v3797, %v3788
    %v3843 = vadd.s32 %v3819, %v3838
    %vm3844 = vc.u32 %v3819, %v3838
    %v3845 = vadd.s32 %v3841, 1
    %v3846 = vsel %vm3844, %v3845, %v3841
    %v3847 = vadd.s32 %v3842, %v3846
    %v3848 = vadd.s32 %v3847, 536870912
    %v3849 = vshrl.u32 %v3848, 30
    %v3850 = vshll.u32 %v3849, 30
    %v3851 = vsub.s32 %v3847, %v3850
    %vm3852 = vcmp.lt.s32.totalorder %v3851, 0
    %v3853 = vsub.s32 0, %v3851
    %v3854 = vsel %vm3852, %v3853, %v3851
    %v3855 = vclz %v3854
    %v3856 = vsub.s32 %v3855, 2
    %vm3857 = vcmp.gt.s32.totalorder 0, %v3856
    %v3858 = vsel %vm3857, 0, %v3856
    %v3859 = vsub.s32 32, %v3858
    %v3860 = vshll.u32 %v3851, %v3858
    %v3861 = vshrl.u32 %v3843, %v3859
    %v3862 = vor.u32 %v3860, %v3861
    %v3863 = vsub.s32 4294967266, %v3858
    %v3864 = vadd.s32 %v3863, 127
    %v3865 = vshll.u32 %v3864, 23
    %v3866 = vor.u32 4788187, %v3865
    %v3867 = vand.u32 2147483647, %v3866
    %v3869 = vcvt.s32.f32 %v3862
    %v3870 = vmul.f32 %v3869, %v3867
    %v3871 = vxor.u32 %v3870, 2147483648
    %v3872 = vsel %vm3751, %v3871, %v3870
    %v3873 = vsub.s32 4, %v3849
    %v3874 = vsel %vm3751, %v3873, %v3849
    %v3875 = vsel %vm3750, %v179, %v3872
    %v3876 = vsel %vm3750, 0, %v3874
    %v3877 = vmul.f32 %v3875, %v3875
    %v3878 = vmul.f32 %v3877, -0.001358992
    %v3879 = vadd.f32 %v3878, 0.041655596
    %v3880 = vmul.f32 %v3877, %v3879
    %v3881 = vadd.f32 %v3880, -0.4999988
    %v3882 = vmul.f32 %v3877, %v3881
    %v3883 = vadd.f32 1.0, %v3882
    %v3884 = vmul.f32 %v3875, %v3875
    %v3885 = vmul.f32 %v3884, -0.00019511016
    %v3886 = vadd.f32 %v3885, 0.008332121
    %v3887 = vmul.f32 %v3884, %v3886
    %v3888 = vadd.f32 %v3887, -0.16666654
    %v3889 = vmul.f32 %v3884, %v3888
    %v3890 = vadd.f32 %v3889, 1.0
    %v3891 = vmul.f32 %v3890, %v3875
    %vm3892 = vweird.f32 %v179
    %v3893 = vadd.s32 %v3876, 3
    %v3894 = vand.u32 %v3893, 3
    %vm3895 = vcmp.lt.s32.totalorder %v3894, 2
    %vm3896 = vcmp.eq.s32.totalorder %v3894, 0
    %v3897 = vxor.u32 %v3891, 2147483648
    %v3898 = vsel %vm3896, %v3883, %v3897
    %vm3899 = vcmp.eq.s32.totalorder %v3894, 2
    %v3900 = vxor.u32 %v3883, 2147483648
    %v3901 = vsel %vm3899, %v3900, %v3891
    %v3902 = vsel %vm3895, %v3898, %v3901
    %v3903 = vsel %vm3892, nan, %v3902
    %v3904 = vand.u32 2147483647, %v182
    %vm3905 = vcmp.le.f32.partialorder %v3904, 0.7853982
    %vm3906 = vcmp.lt.s32.totalorder %v182, 0
    %v3907 = vand.u32 %v182, 2139095040
    %v3908 = vshrl.u32 %v3907, 23
    %v3909 = vsub.s32 %v3908, 127
    %v3910 = vand.u32 2147483647, %v182
    %v3911 = vand.u32 %v3910, 8388607
    %v3912 = vor.u32 %v3911, 8388608
    %v3913 = vsub.s32 0, %v3912
    %v3914 = vadd.s32 %v3909, 1
    %vm3915 = vcmp.gt.s32.totalorder %v3914, 0
    %v3916 = vsel %vm3915, %v3914, 0
    %v3917 = vshrl.u32 %v3916, 5
    %v3918 = vand.u32 %v3916, 31
    %v3919 = vsub.s32 32, %v3918
    %v3920 = vshrl.u32 683565275, %v3919
    %v3921 = vshll.u32 683565275, %v3918
    %v3922 = vshrl.u32 2475754826, %v3919
    %v3923 = vor.u32 %v3921, %v3922
    %v3924 = vshll.u32 2475754826, %v3918
    %v3925 = vshrl.u32 2131351028, %v3919
    %v3926 = vor.u32 %v3924, %v3925
    %v3927 = vshll.u32 2131351028, %v3918
    %v3928 = vshrl.u32 2102212464, %v3919
    %v3929 = vor.u32 %v3927, %v3928
    %v3930 = vshll.u32 2102212464, %v3918
    %v3931 = vshrl.u32 920167782, %v3919
    %v3932 = vor.u32 %v3930, %v3931
    %v3933 = vshll.u32 920167782, %v3918
    %v3934 = vshrl.u32 1326507024, %v3919
    %v3935 = vor.u32 %v3933, %v3934
    %vm3936 = vcmp.lt.s32.totalorder %v3917, 1
    %vm3937 = vcmp.lt.s32.totalorder %v3917, 2
    %vm3938 = vcmp.lt.s32.totalorder %v3917, 3
    %vm3939 = vcmp.lt.s32.totalorder %v3917, 4
    %v3940 = vsel %vm3936, %v3920, %v3923
    %v3941 = vsel %vm3939, %v3929, 2102212464
    %v3942 = vsel %vm3938, %v3926, %v3941
    %v3943 = vsel %vm3937, %v3940, %v3942
    %v3944 = vsel %vm3936, %v3923, %v3926
    %v3945 = vsel %vm3939, %v3932, 920167782
    %v3946 = vsel %vm3938, %v3929, %v3945
    %v3947 = vsel %vm3937, %v3944, %v3946
    %v3948 = vsel %vm3936, %v3926, %v3929
    %v3949 = vsel %vm3939, %v3935, 1326507024
    %v3950 = vsel %vm3938, %v3932, %v3949
    %v3951 = vsel %vm3937, %v3948, %v3950
    %v3952 = vshll.u32 %v3912, 8
    %v3953 = vand.u32 %v3952, 65535
    %v3954 = vshrl.u32 %v3952, 16
    %v3955 = vand.u32 %v3951, 65535
    %v3956 = vshrl.u32 %v3951, 16
    %v3957 = vmul.u32 %v3953, %v3955
    %v3958 = vmul.u32 %v3953, %v3956
    %v3959 = vmul.u32 %v3954, %v3955
    %v3960 = vmul.u32 %v3954, %v3956
    %v3961 = vshll.u32 %v3958, 16
    %v3962 = vshrl.u32 %v3958, 16
    %v3963 = vshll.u32 %v3959, 16
    %v3964 = vshrl.u32 %v3959, 16
    %vm3965 = vc.u32 %v3957, %v3961
    %v3966 = vsel %vm3965, 1, 0
    %v3967 = vadd.s32 %v3957, %v3961
    %v3968 = vadd.s32 %v3960, %v3966
    %vm3969 = vc.u32 %v3967, %v3963
    %v3970 = vsel %vm3969, 1, 0
    %v3971 = vadd.s32 %v3967, %v3963
    %v3972 = vadd.s32 %v3968, %v3970
    %v3973 = vadd.s32 %v3972, %v3962
    %v3974 = vadd.s32 %v3973, %v3964
    %v3975 = vand.u32 %v3952, 65535
    %v3976 = vshrl.u32 %v3952, 16
    %v3977 = vand.u32 %v3947, 65535
    %v3978 = vshrl.u32 %v3947, 16
    %v3979 = vmul.u32 %v3975, %v3977
    %v3980 = vmul.u32 %v3975, %v3978
    %v3981 = vmul.u32 %v3976, %v3977
    %v3982 = vmul.u32 %v3976, %v3978
    %v3983 = vshll.u32 %v3980, 16
    %v3984 = vshrl.u32 %v3980, 16
    %v3985 = vshll.u32 %v3981, 16
    %v3986 = vshrl.u32 %v3981, 16
    %vm3987 = vc.u32 %v3979, %v3983
    %v3988 = vsel %vm3987, 1, 0
    %v3989 = vadd.s32 %v3979, %v3983
    %v3990 = vadd.s32 %v3982, %v3988
    %vm3991 = vc.u32 %v3989, %v3985
    %v3992 = vsel %vm3991, 1, 0
    %v3993 = vadd.s32 %v3989, %v3985
    %v3994 = vadd.s32 %v3990, %v3992
    %v3995 = vadd.s32 %v3994, %v3984
    %v3996 = vadd.s32 %v3995, %v3986
    %v3997 = vmul.u32 %v3952, %v3943
    %v3998 = vadd.s32 %v3974, %v3993
    %vm3999 = vc.u32 %v3974, %v3993
    %v4000 = vadd.s32 %v3996, 1
    %v4001 = vsel %vm3999, %v4000, %v3996
    %v4002 = vadd.s32 %v3997, %v4001
    %v4003 = vadd.s32 %v4002, 536870912
    %v4004 = vshrl.u32 %v4003, 30
    %v4005 = vshll.u32 %v4004, 30
    %v4006 = vsub.s32 %v4002, %v4005
    %vm4007 = vcmp.lt.s32.totalorder %v4006, 0
    %v4008 = vsub.s32 0, %v4006
    %v4009 = vsel %vm4007, %v4008, %v4006
    %v4010 = vclz %v4009
    %v4011 = vsub.s32 %v4010, 2
    %vm4012 = vcmp.gt.s32.totalorder 0, %v4011
    %v4013 = vsel %vm4012, 0, %v4011
    %v4014 = vsub.s32 32, %v4013
    %v4015 = vshll.u32 %v4006, %v4013
    %v4016 = vshrl.u32 %v3998, %v4014
    %v4017 = vor.u32 %v4015, %v4016
    %v4018 = vsub.s32 4294967266, %v4013
    %v4019 = vadd.s32 %v4018, 127
    %v4020 = vshll.u32 %v4019, 23
    %v4021 = vor.u32 4788187, %v4020
    %v4022 = vand.u32 2147483647, %v4021
    %v4024 = vcvt.s32.f32 %v4017
    %v4025 = vmul.f32 %v4024, %v4022
    %v4026 = vxor.u32 %v4025, 2147483648
    %v4027 = vsel %vm3906, %v4026, %v4025
    %v4028 = vsub.s32 4, %v4004
    %v4029 = vsel %vm3906, %v4028, %v4004
    %v4030 = vsel %vm3905, %v182, %v4027
    %v4031 = vsel %vm3905, 0, %v4029
    %v4032 = vmul.f32 %v4030, %v4030
    %v4033 = vmul.f32 %v4032, -0.001358992
    %v4034 = vadd.f32 %v4033, 0.041655596
    %v4035 = vmul.f32 %v4032, %v4034
    %v4036 = vadd.f32 %v4035, -0.4999988
    %v4037 = vmul.f32 %v4032, %v4036
    %v4038 = vadd.f32 1.0, %v4037
    %v4039 = vmul.f32 %v4030, %v4030
    %v4040 = vmul.f32 %v4039, -0.00019511016
    %v4041 = vadd.f32 %v4040, 0.008332121
    %v4042 = vmul.f32 %v4039, %v4041
    %v4043 = vadd.f32 %v4042, -0.16666654
    %v4044 = vmul.f32 %v4039, %v4043
    %v4045 = vadd.f32 %v4044, 1.0
    %v4046 = vmul.f32 %v4045, %v4030
    %vm4047 = vweird.f32 %v182
    %v4048 = vadd.s32 %v4031, 3
    %v4049 = vand.u32 %v4048, 3
    %vm4050 = vcmp.lt.s32.totalorder %v4049, 2
    %vm4051 = vcmp.eq.s32.totalorder %v4049, 0
    %v4052 = vxor.u32 %v4046, 2147483648
    %v4053 = vsel %vm4051, %v4038, %v4052
    %vm4054 = vcmp.eq.s32.totalorder %v4049, 2
    %v4055 = vxor.u32 %v4038, 2147483648
    %v4056 = vsel %vm4054, %v4055, %v4046
    %v4057 = vsel %vm4050, %v4053, %v4056
    %v4058 = vsel %vm4047, nan, %v4057
    %4059 = vst [vmem:[#allocation7] sm:$0xff] %v338
    %4060 = vst [vmem:[#allocation7 + $0x8] sm:$0xff] %v493
    %4061 = vst [vmem:[#allocation7 + $0x10] sm:$0xff] %v648
    %4062 = vst [vmem:[#allocation7 + $0x18] sm:$0xff] %v803
    %4063 = vst [vmem:[#allocation7 + $0x20] sm:$0xff] %v958
    %4064 = vst [vmem:[#allocation7 + $0x28] sm:$0xff] %v1113
    %4065 = vst [vmem:[#allocation7 + $0x30] sm:$0xff] %v1268
    %4066 = vst [vmem:[#allocation7 + $0x38] sm:$0xff] %v1423
    %4067 = vst [vmem:[#allocation7 + $0x40] sm:$0xff] %v1578
    %4068 = vst [vmem:[#allocation7 + $0x48] sm:$0xff] %v1733
    %4069 = vst [vmem:[#allocation7 + $0x50] sm:$0xff] %v1888
    %4070 = vst [vmem:[#allocation7 + $0x58] sm:$0xff] %v2043
    %4071 = vst [vmem:[#allocation7 + $0x60] sm:$0xff] %v2198
    %4072 = vst [vmem:[#allocation7 + $0x68] sm:$0xff] %v2353
    %4073 = vst [vmem:[#allocation7 + $0x70] sm:$0xff] %v2508
    %4074 = vst [vmem:[#allocation7 + $0x78] sm:$0xff] %v2663
    %4075 = vst [vmem:[#allocation7 + $0x80] sm:$0xff] %v2818
    %4076 = vst [vmem:[#allocation7 + $0x88] sm:$0xff] %v2973
    %4077 = vst [vmem:[#allocation7 + $0x90] sm:$0xff] %v3128
    %4078 = vst [vmem:[#allocation7 + $0x98] sm:$0xff] %v3283
    %4079 = vst [vmem:[#allocation7 + $0xa0] sm:$0xff] %v3438
    %4080 = vst [vmem:[#allocation7 + $0xa8] sm:$0xff] %v3593
    %4081 = vst [vmem:[#allocation7 + $0xb0] sm:$0xff] %v3748
    %4082 = vst [vmem:[#allocation7 + $0xb8] sm:$0xff] %v3903
    %4083 = vst [vmem:[#allocation7 + $0xc0] sm:$0xff] %v4058
    // Predicated region
    $region22: #{tpu_custom_call.1} parent=1 // pred_check
      _
    $region23: #{tpu_custom_call.1} parent=1 // pred_check_branch
      %4085 = sbr.rel (0) target = $region25
    $region24: #{tpu_custom_call.1} parent=1 // pred_region
      %4087 = vsyncadd [#allocation4], 0
      %s4088 = sshll.u32 [#allocation7], 4
      %s4089 = int_to_ptr.vmem [resolvable:$true] %s4088
      %s4090 = sshll.u32 %s3, 4
      %s4091 = int_to_ptr.hbm [resolvable:$true] %s4090
      %4096 = dma.vmem_to_hbm [thread:$0]  %s4089, 3200, %s4091, [#allocation4], 128, 128, 8
    $region25: #{tpu_custom_call.1} parent=1 // pred_fallthru
      _
    // Predicated region
    $region26: #{tpu_custom_call.1} parent=1 // pred_check
      _
    $region27: #{tpu_custom_call.1} parent=1 // pred_check_branch
      %4098 = sbr.rel (0) target = $region29
    $region28: #{tpu_custom_call.1} parent=1 // pred_region
      %4100 = dma.done [#allocation4], 3200
    $region29: #{tpu_custom_call.1} parent=1 // pred_fallthru
      _
    %4101 = vsyncpa [#allocation3], 1
    %4102 = vsyncpa [#allocation6], 1
    %4103 = vsyncpa [#allocation4], 1

</llo_original>
